<compile_context>
chip_gen: v5e
topology: v5e:2x2
jax: 0.10.0
libtpu: 0.0.40
codegen_flags: <defaults>
</compile_context>

<pallas_src>
import functools

import jax
import jax.numpy as jnp
import numpy as np
from jax.experimental import pallas as pl
from jax.experimental.pallas import tpu as pltpu


def _round_up(x, m):
    return ((x + m - 1) // m) * m


def _vmem_limit_bytes():
    """Per-generation scoped-VMEM limit: ~85% of physical, capped at 110 MiB."""
    try:
        cap = int(pltpu.get_tpu_info().vmem_capacity_bytes)
    except Exception:  # pragma: no cover - info query unavailable
        cap = 128 * 1024 * 1024
    return max(32 * 1024 * 1024, min(int(cap * 0.85), 110 * 1024 * 1024))


def _pick_batch_block(n, h, w, cpi, cpm, cpo, in_itemsize):
    """Largest divisor of N whose per-step working set fits a VMEM budget,
    stopping once the matmul M dim (NB*H2*W2) is comfortably large."""
    h2, w2 = h // 2, w // 2
    budget = 20 * 1024 * 1024
    per_item = (2 * h * w * cpi * in_itemsize                 # input block (x2 buf)
                + (h2 + 2) * (w2 + 2) * (cpi + cpm) * 2       # bf16 halo scratches
                + h2 * w2 * (cpm + cpo) * 4 * 2               # f32 accumulators
                + 2 * h2 * w2 * cpo * 2)                      # bf16 output (x2 buf)
    nb = 1
    for cand in range(1, n + 1):
        if n % cand:
            continue
        if cand * per_item > budget:
            break
        nb = cand
        if cand * h2 * w2 >= 2048:
            break
    return nb


def _down_kernel(x_ref, w1_ref, t1_ref, w2_ref, t2_ref, o_ref,
                 pad1_ref, pad2_ref, *, NB, H2, W2, Cpi, Cpm, Cpo):
    M = NB * H2 * W2

    # ---- MaxPool2d(2), in the input's native dtype.
    # x_ref is a free channel-pair view: (NB, 2*H2, W2, 2*Cpi) whose last dim
    # is [even-column channels | odd-column channels].
    x = x_ref[...]
    cols = jnp.maximum(x[..., :Cpi], x[..., Cpi:])            # (NB, 2*H2, W2, Cpi)
    rows = cols.reshape(NB * H2, 2, W2, Cpi)                  # leading-dim split
    pooled = jnp.maximum(rows[:, 0], rows[:, 1]).reshape(NB, H2, W2, Cpi)

    # ---- SAME-padding halo scratch: zero only the 1-pixel border every step
    # (perimeter work, order/core independent); the interior is overwritten.
    def _zero_border(pad_ref, c):
        zr = jnp.zeros((NB, 1, W2 + 2, c), pad_ref.dtype)
        zc = jnp.zeros((NB, H2 + 2, 1, c), pad_ref.dtype)
        pad_ref[:, 0:1, :, :] = zr
        pad_ref[:, H2 + 1:H2 + 2, :, :] = zr
        pad_ref[:, :, 0:1, :] = zc
        pad_ref[:, :, W2 + 1:W2 + 2, :] = zc

    def _conv3x3(pad_ref, w_ref, c_in):
        # 9 accumulated per-tap MXU matmuls (K = c_in) reading the halo
        # scratch slices directly -- no materialized im2col patch matrix.
        # (W2 % 8 == 0 keeps the (NB,H2,W2,C)->(M,C) reshape copy-free.)
        acc = None
        for t in range(9):
            dy, dx = divmod(t, 3)
            tap = pad_ref[:, dy:dy + H2, dx:dx + W2, :].reshape(M, c_in)
            d = jnp.dot(tap, w_ref[t], preferred_element_type=jnp.float32)
            acc = d if acc is None else acc + d
        return acc                                             # (M, c_out) f32

    _zero_border(pad1_ref, Cpi)
    pad1_ref[:, 1:H2 + 1, 1:W2 + 1, :] = pooled.astype(pad1_ref.dtype)

    # ---- conv1 + folded-BN shift + ReLU  (scale already folded into w1).
    h1 = jnp.maximum(_conv3x3(pad1_ref, w1_ref, Cpi) + t1_ref[...], 0.0)

    _zero_border(pad2_ref, Cpm)
    pad2_ref[:, 1:H2 + 1, 1:W2 + 1, :] = (
        h1.reshape(NB, H2, W2, Cpm).astype(pad2_ref.dtype))

    # ---- conv2 + folded-BN shift + ReLU.
    out = jnp.maximum(_conv3x3(pad2_ref, w2_ref, Cpm) + t2_ref[...], 0.0)
    o_ref[...] = out.reshape(NB, H2, W2, Cpo).astype(o_ref.dtype)


def down_pallas_nhwc(x_nhwc, w1, scale1, shift1, w2, scale2, shift2,
                     *, out_dtype=jnp.bfloat16):
    """NHWC-native Down block.  w1: (3,3,Cin,Cmid) HWIO, w2: (3,3,Cmid,Cout);
    scale/shift are the folded eval-mode BatchNorm parameters."""
    N, H, W, Cin = x_nhwc.shape
    if H % 2 or W % 2:
        raise ValueError("H and W must be even for MaxPool2d(2).")
    H2, W2 = H // 2, W // 2
    Cmid, Cout = w1.shape[-1], w2.shape[-1]
    # Align channels to the sublane quantum only (8), not 128 lanes.
    Cpi, Cpm, Cpo = (_round_up(c, 8) for c in (Cin, Cmid, Cout))

    if Cpi != Cin:
        x_nhwc = jnp.pad(x_nhwc, ((0, 0), (0, 0), (0, 0), (0, Cpi - Cin)))
    # Free view: pair the two columns of each 2x2 pool window along channels.
    x_view = x_nhwc.reshape(N, H, W2, 2 * Cpi)

    # Fold the BN scale into the conv weights; bf16 for the MXU.
    w1f = jnp.pad(w1 * scale1, ((0, 0), (0, 0), (0, Cpi - Cin), (0, Cpm - Cmid)))
    w1f = w1f.reshape(9, Cpi, Cpm).astype(jnp.bfloat16)
    w2f = jnp.pad(w2 * scale2, ((0, 0), (0, 0), (0, Cpm - Cmid), (0, Cpo - Cout)))
    w2f = w2f.reshape(9, Cpm, Cpo).astype(jnp.bfloat16)
    t1 = jnp.pad(shift1, (0, Cpm - Cmid)).reshape(1, Cpm).astype(jnp.float32)
    t2 = jnp.pad(shift2, (0, Cpo - Cout)).reshape(1, Cpo).astype(jnp.float32)

    NB = _pick_batch_block(N, H, W, Cpi, Cpm, Cpo, x_view.dtype.itemsize)
    kernel = functools.partial(_down_kernel, NB=NB, H2=H2, W2=W2,
                               Cpi=Cpi, Cpm=Cpm, Cpo=Cpo)

    flops = 2 * N * H2 * W2 * 9 * (Cpi * Cpm + Cpm * Cpo)
    bytes_accessed = int(N * H * W * Cpi * x_view.dtype.itemsize
                         + w1f.size * 2 + w2f.size * 2
                         + (t1.size + t2.size) * 4
                         + N * H2 * W2 * Cpo * jnp.dtype(out_dtype).itemsize)

    out = pl.pallas_call(
        kernel,
        out_shape=jax.ShapeDtypeStruct((N, H2, W2, Cpo), out_dtype),
        grid_spec=pltpu.PrefetchScalarGridSpec(
            num_scalar_prefetch=0,
            grid=(N // NB,),
            in_specs=[
                pl.BlockSpec((NB, H, W2, 2 * Cpi), lambda b: (b, 0, 0, 0)),
                pl.BlockSpec((9, Cpi, Cpm), lambda b: (0, 0, 0)),
                pl.BlockSpec((1, Cpm), lambda b: (0, 0)),
                pl.BlockSpec((9, Cpm, Cpo), lambda b: (0, 0, 0)),
                pl.BlockSpec((1, Cpo), lambda b: (0, 0)),
            ],
            out_specs=pl.BlockSpec((NB, H2, W2, Cpo), lambda b: (b, 0, 0, 0)),
            scratch_shapes=[
                pltpu.VMEM((NB, H2 + 2, W2 + 2, Cpi), jnp.bfloat16),
                pltpu.VMEM((NB, H2 + 2, W2 + 2, Cpm), jnp.bfloat16),
            ],
        ),
        compiler_params=pltpu.CompilerParams(
            dimension_semantics=("parallel",),
            vmem_limit_bytes=_vmem_limit_bytes(),
        ),
        cost_estimate=pl.CostEstimate(flops=flops, transcendentals=0,
                                      bytes_accessed=bytes_accessed),
    )(x_view, w1f, t1, w2f, t2)

    if Cpo != Cout:
        out = out[..., :Cout]
    return out


def down_pallas(x_nchw, w1, scale1, shift1, w2, scale2, shift2,
                *, out_dtype=jnp.bfloat16):
    """NCHW compatibility shim (matches the PyTorch module's layout).  Prefer
    down_pallas_nhwc in an NHWC-resident network to avoid the transposes."""
    x_nhwc = jnp.transpose(x_nchw, (0, 2, 3, 1))
    y = down_pallas_nhwc(x_nhwc, w1, scale1, shift1, w2, scale2, shift2,
                         out_dtype=out_dtype)
    return jnp.transpose(y, (0, 3, 1, 2))


def down_reference(x_nchw, w1, scale1, shift1, w2, scale2, shift2):
    """Pure-JAX f32 reference with identical semantics."""
    N, Cin, H, W = x_nchw.shape
    x = jnp.transpose(x_nchw, (0, 2, 3, 1))
    x = x.reshape(N, H // 2, 2, W // 2, 2, Cin).max(axis=(2, 4))
    dn = ('NHWC', 'HWIO', 'NHWC')
    y = jax.lax.conv_general_dilated(x, w1, (1, 1), 'SAME', dimension_numbers=dn,
                                     precision=jax.lax.Precision.HIGHEST)
    y = jnp.maximum(y * scale1 + shift1, 0.0)
    y = jax.lax.conv_general_dilated(y, w2, (1, 1), 'SAME', dimension_numbers=dn,
                                     precision=jax.lax.Precision.HIGHEST)
    y = jnp.maximum(y * scale2 + shift2, 0.0)
    return jnp.transpose(y, (0, 3, 1, 2))


def _make_params(key, cin, cout):
    """Deterministic Conv2d + BatchNorm2d(eval) parameters, folded."""
    ks = jax.random.split(key, 6)
    eps = 1e-5
    w_oihw = jax.random.normal(ks[0], (cout, cin, 3, 3), jnp.float32) * 0.1
    b_conv = jax.random.normal(ks[1], (cout,), jnp.float32) * 0.1
    gamma = 1.0 + 0.1 * jax.random.normal(ks[2], (cout,), jnp.float32)
    beta = 0.1 * jax.random.normal(ks[3], (cout,), jnp.float32)
    r_mean = 0.1 * jax.random.normal(ks[4], (cout,), jnp.float32)
    r_var = jax.random.uniform(ks[5], (cout,), jnp.float32, 0.5, 1.5)
    scale = gamma / jnp.sqrt(r_var + eps)
    shift = beta + (b_conv - r_mean) * scale
    w_hwio = jnp.transpose(w_oihw, (2, 3, 1, 0))   # PyTorch OIHW -> HWIO
    return w_hwio, scale, shift


if __name__ == "__main__":
    N, Cin, Cout, H, W = 2, 4, 8, 16, 16
    Cmid = Cout

    root = jax.random.PRNGKey(0)
    kx, k1, k2 = jax.random.split(root, 3)
    x = jax.random.normal(kx, (N, Cin, H, W), jnp.float32)
    w1, s1, t1 = _make_params(k1, Cin, Cmid)
    w2, s2, t2 = _make_params(k2, Cmid, Cout)

    out = down_pallas(x, w1, s1, t1, w2, s2, t2)
    out = jax.block_until_ready(out)

    ref = down_reference(x, w1, s1, t1, w2, s2, t2)
    np.testing.assert_allclose(np.asarray(out.astype(jnp.float32)),
                               np.asarray(ref), rtol=2e-2, atol=2e-2)
    assert out.shape == (N, Cout, H // 2, W // 2)

    print("KERNEL_OK")
</pallas_src>

<mosaic_0001>
module attributes {stable_mosaic.version = 11 : i64} {
  func.func @_down_kernel(%arg0: i32, %arg1: memref<2x16x8x16xf32, #tpu.memory_space<vmem>>, %arg2: memref<9x8x8xbf16, #tpu.memory_space<vmem>>, %arg3: memref<1x8xf32, #tpu.memory_space<vmem>>, %arg4: memref<9x8x8xbf16, #tpu.memory_space<vmem>>, %arg5: memref<1x8xf32, #tpu.memory_space<vmem>>, %arg6: memref<2x8x8x8xbf16, #tpu.memory_space<vmem>>, %arg7: memref<2x10x10x8xbf16, #tpu.memory_space<vmem>>, %arg8: memref<2x10x10x8xbf16, #tpu.memory_space<vmem>>) attributes {dimension_semantics = [#tpu.dimension_semantics<parallel>], iteration_bounds = array<i64: 1>, scalar_prefetch = 0 : i64, scratch_operands = 2 : i64, tpu.core_type = #tpu.core_type<tc>, window_params = [{transform_indices = @transform_0, window_bounds = array<i64: 2, 16, 8, 16>}, {pipeline_mode = #tpu.pipeline_mode<synchronous>, transform_indices = @transform_1, window_bounds = array<i64: 9, 8, 8>}, {pipeline_mode = #tpu.pipeline_mode<synchronous>, transform_indices = @transform_2, window_bounds = array<i64: 1, 8>}, {pipeline_mode = #tpu.pipeline_mode<synchronous>, transform_indices = @transform_3, window_bounds = array<i64: 9, 8, 8>}, {pipeline_mode = #tpu.pipeline_mode<synchronous>, transform_indices = @transform_4, window_bounds = array<i64: 1, 8>}, {transform_indices = @transform_5, window_bounds = array<i64: 2, 8, 8, 8>}]} {
    %c0 = arith.constant 0 : index
    %c0_0 = arith.constant 0 : index
    %c0_1 = arith.constant 0 : index
    %c0_2 = arith.constant 0 : index
    %0 = vector.load %arg1[%c0, %c0_0, %c0_1, %c0_2] : memref<2x16x8x16xf32, #tpu.memory_space<vmem>>, vector<2x16x8x16xf32>
    %1 = vector.extract_strided_slice %0 {offsets = [0, 0, 0, 0], sizes = [2, 16, 8, 8], strides = [1, 1, 1, 1]} : vector<2x16x8x16xf32> to vector<2x16x8x8xf32>
    %2 = vector.extract_strided_slice %0 {offsets = [0, 0, 0, 8], sizes = [2, 16, 8, 8], strides = [1, 1, 1, 1]} : vector<2x16x8x16xf32> to vector<2x16x8x8xf32>
    %3 = arith.maximumf %1, %2 : vector<2x16x8x8xf32>
    %4 = vector.shape_cast %3 : vector<2x16x8x8xf32> to vector<16x2x8x8xf32>
    %5 = vector.extract_strided_slice %4 {offsets = [0, 0, 0, 0], sizes = [16, 1, 8, 8], strides = [1, 1, 1, 1]} : vector<16x2x8x8xf32> to vector<16x1x8x8xf32>
    %6 = vector.shape_cast %5 : vector<16x1x8x8xf32> to vector<16x8x8xf32>
    %7 = vector.extract_strided_slice %4 {offsets = [0, 1, 0, 0], sizes = [16, 1, 8, 8], strides = [1, 1, 1, 1]} : vector<16x2x8x8xf32> to vector<16x1x8x8xf32>
    %8 = vector.shape_cast %7 : vector<16x1x8x8xf32> to vector<16x8x8xf32>
    %9 = arith.maximumf %6, %8 : vector<16x8x8xf32>
    %10 = vector.shape_cast %9 : vector<16x8x8xf32> to vector<2x8x8x8xf32>
    %cst = arith.constant 0.000000e+00 : bf16
    %11 = vector.broadcast %cst : bf16 to vector<2x1x10x8xbf16>
    %cst_3 = arith.constant 0.000000e+00 : bf16
    %12 = vector.broadcast %cst_3 : bf16 to vector<2x10x1x8xbf16>
    %c0_4 = arith.constant 0 : index
    %c0_5 = arith.constant 0 : index
    %c0_6 = arith.constant 0 : index
    %c0_7 = arith.constant 0 : index
    %13 = vector.load %arg7[%c0_4, %c0_5, %c0_6, %c0_7] : memref<2x10x10x8xbf16, #tpu.memory_space<vmem>>, vector<2x1x10x8xbf16>
    tpu.vector_store %arg7[%c0_4, %c0_5, %c0_6, %c0_7], %11 {strides = array<i32>} : memref<2x10x10x8xbf16, #tpu.memory_space<vmem>>, vector<2x1x10x8xbf16>,
    %c0_8 = arith.constant 0 : index
    %c9 = arith.constant 9 : index
    %c0_9 = arith.constant 0 : index
    %c0_10 = arith.constant 0 : index
    %14 = vector.load %arg7[%c0_8, %c9, %c0_9, %c0_10] : memref<2x10x10x8xbf16, #tpu.memory_space<vmem>>, vector<2x1x10x8xbf16>
    tpu.vector_store %arg7[%c0_8, %c9, %c0_9, %c0_10], %11 {strides = array<i32>} : memref<2x10x10x8xbf16, #tpu.memory_space<vmem>>, vector<2x1x10x8xbf16>,
    %c0_11 = arith.constant 0 : index
    %c0_12 = arith.constant 0 : index
    %c0_13 = arith.constant 0 : index
    %c0_14 = arith.constant 0 : index
    %15 = vector.load %arg7[%c0_11, %c0_12, %c0_13, %c0_14] : memref<2x10x10x8xbf16, #tpu.memory_space<vmem>>, vector<2x10x1x8xbf16>
    tpu.vector_store %arg7[%c0_11, %c0_12, %c0_13, %c0_14], %12 {strides = array<i32>} : memref<2x10x10x8xbf16, #tpu.memory_space<vmem>>, vector<2x10x1x8xbf16>,
    %c0_15 = arith.constant 0 : index
    %c0_16 = arith.constant 0 : index
    %c9_17 = arith.constant 9 : index
    %c0_18 = arith.constant 0 : index
    %16 = vector.load %arg7[%c0_15, %c0_16, %c9_17, %c0_18] : memref<2x10x10x8xbf16, #tpu.memory_space<vmem>>, vector<2x10x1x8xbf16>
    tpu.vector_store %arg7[%c0_15, %c0_16, %c9_17, %c0_18], %12 {strides = array<i32>} : memref<2x10x10x8xbf16, #tpu.memory_space<vmem>>, vector<2x10x1x8xbf16>,
    %17 = arith.truncf %10 : vector<2x8x8x8xf32> to vector<2x8x8x8xbf16>
    %c0_19 = arith.constant 0 : index
    %c1 = arith.constant 1 : index
    %c1_20 = arith.constant 1 : index
    %c0_21 = arith.constant 0 : index
    %18 = vector.load %arg7[%c0_19, %c1, %c1_20, %c0_21] : memref<2x10x10x8xbf16, #tpu.memory_space<vmem>>, vector<2x8x8x8xbf16>
    tpu.vector_store %arg7[%c0_19, %c1, %c1_20, %c0_21], %17 {strides = array<i32>} : memref<2x10x10x8xbf16, #tpu.memory_space<vmem>>, vector<2x8x8x8xbf16>,
    %c0_22 = arith.constant 0 : index
    %c0_23 = arith.constant 0 : index
    %c0_24 = arith.constant 0 : index
    %c0_25 = arith.constant 0 : index
    %19 = vector.load %arg7[%c0_22, %c0_23, %c0_24, %c0_25] : memref<2x10x10x8xbf16, #tpu.memory_space<vmem>>, vector<2x8x8x8xbf16>
    %20 = vector.shape_cast %19 : vector<2x8x8x8xbf16> to vector<128x8xbf16>
    %c0_26 = arith.constant 0 : index
    %c0_27 = arith.constant 0 : index
    %c0_28 = arith.constant 0 : index
    %21 = vector.load %arg2[%c0_26, %c0_27, %c0_28] : memref<9x8x8xbf16, #tpu.memory_space<vmem>>, vector<1x8x8xbf16>
    %22 = vector.shape_cast %21 : vector<1x8x8xbf16> to vector<8x8xbf16>
    %cst_29 = arith.constant dense<0.000000e+00> : vector<128x8xf32>
    %23 = tpu.matmul %20, %22, %cst_29 {dimension_numbers = #tpu.dot_dimension_numbers<[1], [0], [0], [1], [0, 0, 1, 1], [], []>} : vector<128x8xbf16>, vector<8x8xbf16>, vector<128x8xf32> -> vector<128x8xf32>
    %c0_30 = arith.constant 0 : index
    %c0_31 = arith.constant 0 : index
    %c1_32 = arith.constant 1 : index
    %c0_33 = arith.constant 0 : index
    %24 = vector.load %arg7[%c0_30, %c0_31, %c1_32, %c0_33] : memref<2x10x10x8xbf16, #tpu.memory_space<vmem>>, vector<2x8x8x8xbf16>
    %25 = vector.shape_cast %24 : vector<2x8x8x8xbf16> to vector<128x8xbf16>
    %c1_34 = arith.constant 1 : index
    %c0_35 = arith.constant 0 : index
    %c0_36 = arith.constant 0 : index
    %26 = vector.load %arg2[%c1_34, %c0_35, %c0_36] : memref<9x8x8xbf16, #tpu.memory_space<vmem>>, vector<1x8x8xbf16>
    %27 = vector.shape_cast %26 : vector<1x8x8xbf16> to vector<8x8xbf16>
    %cst_37 = arith.constant dense<0.000000e+00> : vector<128x8xf32>
    %28 = tpu.matmul %25, %27, %cst_37 {dimension_numbers = #tpu.dot_dimension_numbers<[1], [0], [0], [1], [0, 0, 1, 1], [], []>} : vector<128x8xbf16>, vector<8x8xbf16>, vector<128x8xf32> -> vector<128x8xf32>
    %29 = arith.addf %23, %28 : vector<128x8xf32>
    %c0_38 = arith.constant 0 : index
    %c0_39 = arith.constant 0 : index
    %c2 = arith.constant 2 : index
    %c0_40 = arith.constant 0 : index
    %30 = vector.load %arg7[%c0_38, %c0_39, %c2, %c0_40] : memref<2x10x10x8xbf16, #tpu.memory_space<vmem>>, vector<2x8x8x8xbf16>
    %31 = vector.shape_cast %30 : vector<2x8x8x8xbf16> to vector<128x8xbf16>
    %c2_41 = arith.constant 2 : index
    %c0_42 = arith.constant 0 : index
    %c0_43 = arith.constant 0 : index
    %32 = vector.load %arg2[%c2_41, %c0_42, %c0_43] : memref<9x8x8xbf16, #tpu.memory_space<vmem>>, vector<1x8x8xbf16>
    %33 = vector.shape_cast %32 : vector<1x8x8xbf16> to vector<8x8xbf16>
    %cst_44 = arith.constant dense<0.000000e+00> : vector<128x8xf32>
    %34 = tpu.matmul %31, %33, %cst_44 {dimension_numbers = #tpu.dot_dimension_numbers<[1], [0], [0], [1], [0, 0, 1, 1], [], []>} : vector<128x8xbf16>, vector<8x8xbf16>, vector<128x8xf32> -> vector<128x8xf32>
    %35 = arith.addf %29, %34 : vector<128x8xf32>
    %c0_45 = arith.constant 0 : index
    %c1_46 = arith.constant 1 : index
    %c0_47 = arith.constant 0 : index
    %c0_48 = arith.constant 0 : index
    %36 = vector.load %arg7[%c0_45, %c1_46, %c0_47, %c0_48] : memref<2x10x10x8xbf16, #tpu.memory_space<vmem>>, vector<2x8x8x8xbf16>
    %37 = vector.shape_cast %36 : vector<2x8x8x8xbf16> to vector<128x8xbf16>
    %c3 = arith.constant 3 : index
    %c0_49 = arith.constant 0 : index
    %c0_50 = arith.constant 0 : index
    %38 = vector.load %arg2[%c3, %c0_49, %c0_50] : memref<9x8x8xbf16, #tpu.memory_space<vmem>>, vector<1x8x8xbf16>
    %39 = vector.shape_cast %38 : vector<1x8x8xbf16> to vector<8x8xbf16>
    %cst_51 = arith.constant dense<0.000000e+00> : vector<128x8xf32>
    %40 = tpu.matmul %37, %39, %cst_51 {dimension_numbers = #tpu.dot_dimension_numbers<[1], [0], [0], [1], [0, 0, 1, 1], [], []>} : vector<128x8xbf16>, vector<8x8xbf16>, vector<128x8xf32> -> vector<128x8xf32>
    %41 = arith.addf %35, %40 : vector<128x8xf32>
    %c0_52 = arith.constant 0 : index
    %c1_53 = arith.constant 1 : index
    %c1_54 = arith.constant 1 : index
    %c0_55 = arith.constant 0 : index
    %42 = vector.load %arg7[%c0_52, %c1_53, %c1_54, %c0_55] : memref<2x10x10x8xbf16, #tpu.memory_space<vmem>>, vector<2x8x8x8xbf16>
    %43 = vector.shape_cast %42 : vector<2x8x8x8xbf16> to vector<128x8xbf16>
    %c4 = arith.constant 4 : index
    %c0_56 = arith.constant 0 : index
    %c0_57 = arith.constant 0 : index
    %44 = vector.load %arg2[%c4, %c0_56, %c0_57] : memref<9x8x8xbf16, #tpu.memory_space<vmem>>, vector<1x8x8xbf16>
    %45 = vector.shape_cast %44 : vector<1x8x8xbf16> to vector<8x8xbf16>
    %cst_58 = arith.constant dense<0.000000e+00> : vector<128x8xf32>
    %46 = tpu.matmul %43, %45, %cst_58 {dimension_numbers = #tpu.dot_dimension_numbers<[1], [0], [0], [1], [0, 0, 1, 1], [], []>} : vector<128x8xbf16>, vector<8x8xbf16>, vector<128x8xf32> -> vector<128x8xf32>
    %47 = arith.addf %41, %46 : vector<128x8xf32>
    %c0_59 = arith.constant 0 : index
    %c1_60 = arith.constant 1 : index
    %c2_61 = arith.constant 2 : index
    %c0_62 = arith.constant 0 : index
    %48 = vector.load %arg7[%c0_59, %c1_60, %c2_61, %c0_62] : memref<2x10x10x8xbf16, #tpu.memory_space<vmem>>, vector<2x8x8x8xbf16>
    %49 = vector.shape_cast %48 : vector<2x8x8x8xbf16> to vector<128x8xbf16>
    %c5 = arith.constant 5 : index
    %c0_63 = arith.constant 0 : index
    %c0_64 = arith.constant 0 : index
    %50 = vector.load %arg2[%c5, %c0_63, %c0_64] : memref<9x8x8xbf16, #tpu.memory_space<vmem>>, vector<1x8x8xbf16>
    %51 = vector.shape_cast %50 : vector<1x8x8xbf16> to vector<8x8xbf16>
    %cst_65 = arith.constant dense<0.000000e+00> : vector<128x8xf32>
    %52 = tpu.matmul %49, %51, %cst_65 {dimension_numbers = #tpu.dot_dimension_numbers<[1], [0], [0], [1], [0, 0, 1, 1], [], []>} : vector<128x8xbf16>, vector<8x8xbf16>, vector<128x8xf32> -> vector<128x8xf32>
    %53 = arith.addf %47, %52 : vector<128x8xf32>
    %c0_66 = arith.constant 0 : index
    %c2_67 = arith.constant 2 : index
    %c0_68 = arith.constant 0 : index
    %c0_69 = arith.constant 0 : index
    %54 = vector.load %arg7[%c0_66, %c2_67, %c0_68, %c0_69] : memref<2x10x10x8xbf16, #tpu.memory_space<vmem>>, vector<2x8x8x8xbf16>
    %55 = vector.shape_cast %54 : vector<2x8x8x8xbf16> to vector<128x8xbf16>
    %c6 = arith.constant 6 : index
    %c0_70 = arith.constant 0 : index
    %c0_71 = arith.constant 0 : index
    %56 = vector.load %arg2[%c6, %c0_70, %c0_71] : memref<9x8x8xbf16, #tpu.memory_space<vmem>>, vector<1x8x8xbf16>
    %57 = vector.shape_cast %56 : vector<1x8x8xbf16> to vector<8x8xbf16>
    %cst_72 = arith.constant dense<0.000000e+00> : vector<128x8xf32>
    %58 = tpu.matmul %55, %57, %cst_72 {dimension_numbers = #tpu.dot_dimension_numbers<[1], [0], [0], [1], [0, 0, 1, 1], [], []>} : vector<128x8xbf16>, vector<8x8xbf16>, vector<128x8xf32> -> vector<128x8xf32>
    %59 = arith.addf %53, %58 : vector<128x8xf32>
    %c0_73 = arith.constant 0 : index
    %c2_74 = arith.constant 2 : index
    %c1_75 = arith.constant 1 : index
    %c0_76 = arith.constant 0 : index
    %60 = vector.load %arg7[%c0_73, %c2_74, %c1_75, %c0_76] : memref<2x10x10x8xbf16, #tpu.memory_space<vmem>>, vector<2x8x8x8xbf16>
    %61 = vector.shape_cast %60 : vector<2x8x8x8xbf16> to vector<128x8xbf16>
    %c7 = arith.constant 7 : index
    %c0_77 = arith.constant 0 : index
    %c0_78 = arith.constant 0 : index
    %62 = vector.load %arg2[%c7, %c0_77, %c0_78] : memref<9x8x8xbf16, #tpu.memory_space<vmem>>, vector<1x8x8xbf16>
    %63 = vector.shape_cast %62 : vector<1x8x8xbf16> to vector<8x8xbf16>
    %cst_79 = arith.constant dense<0.000000e+00> : vector<128x8xf32>
    %64 = tpu.matmul %61, %63, %cst_79 {dimension_numbers = #tpu.dot_dimension_numbers<[1], [0], [0], [1], [0, 0, 1, 1], [], []>} : vector<128x8xbf16>, vector<8x8xbf16>, vector<128x8xf32> -> vector<128x8xf32>
    %65 = arith.addf %59, %64 : vector<128x8xf32>
    %c0_80 = arith.constant 0 : index
    %c2_81 = arith.constant 2 : index
    %c2_82 = arith.constant 2 : index
    %c0_83 = arith.constant 0 : index
    %66 = vector.load %arg7[%c0_80, %c2_81, %c2_82, %c0_83] : memref<2x10x10x8xbf16, #tpu.memory_space<vmem>>, vector<2x8x8x8xbf16>
    %67 = vector.shape_cast %66 : vector<2x8x8x8xbf16> to vector<128x8xbf16>
    %c8 = arith.constant 8 : index
    %c0_84 = arith.constant 0 : index
    %c0_85 = arith.constant 0 : index
    %68 = vector.load %arg2[%c8, %c0_84, %c0_85] : memref<9x8x8xbf16, #tpu.memory_space<vmem>>, vector<1x8x8xbf16>
    %69 = vector.shape_cast %68 : vector<1x8x8xbf16> to vector<8x8xbf16>
    %cst_86 = arith.constant dense<0.000000e+00> : vector<128x8xf32>
    %70 = tpu.matmul %67, %69, %cst_86 {dimension_numbers = #tpu.dot_dimension_numbers<[1], [0], [0], [1], [0, 0, 1, 1], [], []>} : vector<128x8xbf16>, vector<8x8xbf16>, vector<128x8xf32> -> vector<128x8xf32>
    %71 = arith.addf %65, %70 : vector<128x8xf32>
    %c0_87 = arith.constant 0 : index
    %c0_88 = arith.constant 0 : index
    %72 = vector.load %arg3[%c0_87, %c0_88] : memref<1x8xf32, #tpu.memory_space<vmem>>, vector<1x8xf32>
    %73 = vector.broadcast %72 : vector<1x8xf32> to vector<128x8xf32>
    %74 = arith.addf %71, %73 : vector<128x8xf32>
    %cst_89 = arith.constant 0.000000e+00 : f32
    %75 = vector.broadcast %cst_89 : f32 to vector<128x8xf32>
    %76 = arith.maximumf %74, %75 : vector<128x8xf32>
    %cst_90 = arith.constant 0.000000e+00 : bf16
    %77 = vector.broadcast %cst_90 : bf16 to vector<2x1x10x8xbf16>
    %cst_91 = arith.constant 0.000000e+00 : bf16
    %78 = vector.broadcast %cst_91 : bf16 to vector<2x10x1x8xbf16>
    %c0_92 = arith.constant 0 : index
    %c0_93 = arith.constant 0 : index
    %c0_94 = arith.constant 0 : index
    %c0_95 = arith.constant 0 : index
    %79 = vector.load %arg8[%c0_92, %c0_93, %c0_94, %c0_95] : memref<2x10x10x8xbf16, #tpu.memory_space<vmem>>, vector<2x1x10x8xbf16>
    tpu.vector_store %arg8[%c0_92, %c0_93, %c0_94, %c0_95], %77 {strides = array<i32>} : memref<2x10x10x8xbf16, #tpu.memory_space<vmem>>, vector<2x1x10x8xbf16>,
    %c0_96 = arith.constant 0 : index
    %c9_97 = arith.constant 9 : index
    %c0_98 = arith.constant 0 : index
    %c0_99 = arith.constant 0 : index
    %80 = vector.load %arg8[%c0_96, %c9_97, %c0_98, %c0_99] : memref<2x10x10x8xbf16, #tpu.memory_space<vmem>>, vector<2x1x10x8xbf16>
    tpu.vector_store %arg8[%c0_96, %c9_97, %c0_98, %c0_99], %77 {strides = array<i32>} : memref<2x10x10x8xbf16, #tpu.memory_space<vmem>>, vector<2x1x10x8xbf16>,
    %c0_100 = arith.constant 0 : index
    %c0_101 = arith.constant 0 : index
    %c0_102 = arith.constant 0 : index
    %c0_103 = arith.constant 0 : index
    %81 = vector.load %arg8[%c0_100, %c0_101, %c0_102, %c0_103] : memref<2x10x10x8xbf16, #tpu.memory_space<vmem>>, vector<2x10x1x8xbf16>
    tpu.vector_store %arg8[%c0_100, %c0_101, %c0_102, %c0_103], %78 {strides = array<i32>} : memref<2x10x10x8xbf16, #tpu.memory_space<vmem>>, vector<2x10x1x8xbf16>,
    %c0_104 = arith.constant 0 : index
    %c0_105 = arith.constant 0 : index
    %c9_106 = arith.constant 9 : index
    %c0_107 = arith.constant 0 : index
    %82 = vector.load %arg8[%c0_104, %c0_105, %c9_106, %c0_107] : memref<2x10x10x8xbf16, #tpu.memory_space<vmem>>, vector<2x10x1x8xbf16>
    tpu.vector_store %arg8[%c0_104, %c0_105, %c9_106, %c0_107], %78 {strides = array<i32>} : memref<2x10x10x8xbf16, #tpu.memory_space<vmem>>, vector<2x10x1x8xbf16>,
    %83 = vector.shape_cast %76 : vector<128x8xf32> to vector<2x8x8x8xf32>
    %84 = arith.truncf %83 : vector<2x8x8x8xf32> to vector<2x8x8x8xbf16>
    %c0_108 = arith.constant 0 : index
    %c1_109 = arith.constant 1 : index
    %c1_110 = arith.constant 1 : index
    %c0_111 = arith.constant 0 : index
    %85 = vector.load %arg8[%c0_108, %c1_109, %c1_110, %c0_111] : memref<2x10x10x8xbf16, #tpu.memory_space<vmem>>, vector<2x8x8x8xbf16>
    tpu.vector_store %arg8[%c0_108, %c1_109, %c1_110, %c0_111], %84 {strides = array<i32>} : memref<2x10x10x8xbf16, #tpu.memory_space<vmem>>, vector<2x8x8x8xbf16>,
    %c0_112 = arith.constant 0 : index
    %c0_113 = arith.constant 0 : index
    %c0_114 = arith.constant 0 : index
    %c0_115 = arith.constant 0 : index
    %86 = vector.load %arg8[%c0_112, %c0_113, %c0_114, %c0_115] : memref<2x10x10x8xbf16, #tpu.memory_space<vmem>>, vector<2x8x8x8xbf16>
    %87 = vector.shape_cast %86 : vector<2x8x8x8xbf16> to vector<128x8xbf16>
    %c0_116 = arith.constant 0 : index
    %c0_117 = arith.constant 0 : index
    %c0_118 = arith.constant 0 : index
    %88 = vector.load %arg4[%c0_116, %c0_117, %c0_118] : memref<9x8x8xbf16, #tpu.memory_space<vmem>>, vector<1x8x8xbf16>
    %89 = vector.shape_cast %88 : vector<1x8x8xbf16> to vector<8x8xbf16>
    %cst_119 = arith.constant dense<0.000000e+00> : vector<128x8xf32>
    %90 = tpu.matmul %87, %89, %cst_119 {dimension_numbers = #tpu.dot_dimension_numbers<[1], [0], [0], [1], [0, 0, 1, 1], [], []>} : vector<128x8xbf16>, vector<8x8xbf16>, vector<128x8xf32> -> vector<128x8xf32>
    %c0_120 = arith.constant 0 : index
    %c0_121 = arith.constant 0 : index
    %c1_122 = arith.constant 1 : index
    %c0_123 = arith.constant 0 : index
    %91 = vector.load %arg8[%c0_120, %c0_121, %c1_122, %c0_123] : memref<2x10x10x8xbf16, #tpu.memory_space<vmem>>, vector<2x8x8x8xbf16>
    %92 = vector.shape_cast %91 : vector<2x8x8x8xbf16> to vector<128x8xbf16>
    %c1_124 = arith.constant 1 : index
    %c0_125 = arith.constant 0 : index
    %c0_126 = arith.constant 0 : index
    %93 = vector.load %arg4[%c1_124, %c0_125, %c0_126] : memref<9x8x8xbf16, #tpu.memory_space<vmem>>, vector<1x8x8xbf16>
    %94 = vector.shape_cast %93 : vector<1x8x8xbf16> to vector<8x8xbf16>
    %cst_127 = arith.constant dense<0.000000e+00> : vector<128x8xf32>
    %95 = tpu.matmul %92, %94, %cst_127 {dimension_numbers = #tpu.dot_dimension_numbers<[1], [0], [0], [1], [0, 0, 1, 1], [], []>} : vector<128x8xbf16>, vector<8x8xbf16>, vector<128x8xf32> -> vector<128x8xf32>
    %96 = arith.addf %90, %95 : vector<128x8xf32>
    %c0_128 = arith.constant 0 : index
    %c0_129 = arith.constant 0 : index
    %c2_130 = arith.constant 2 : index
    %c0_131 = arith.constant 0 : index
    %97 = vector.load %arg8[%c0_128, %c0_129, %c2_130, %c0_131] : memref<2x10x10x8xbf16, #tpu.memory_space<vmem>>, vector<2x8x8x8xbf16>
    %98 = vector.shape_cast %97 : vector<2x8x8x8xbf16> to vector<128x8xbf16>
    %c2_132 = arith.constant 2 : index
    %c0_133 = arith.constant 0 : index
    %c0_134 = arith.constant 0 : index
    %99 = vector.load %arg4[%c2_132, %c0_133, %c0_134] : memref<9x8x8xbf16, #tpu.memory_space<vmem>>, vector<1x8x8xbf16>
    %100 = vector.shape_cast %99 : vector<1x8x8xbf16> to vector<8x8xbf16>
    %cst_135 = arith.constant dense<0.000000e+00> : vector<128x8xf32>
    %101 = tpu.matmul %98, %100, %cst_135 {dimension_numbers = #tpu.dot_dimension_numbers<[1], [0], [0], [1], [0, 0, 1, 1], [], []>} : vector<128x8xbf16>, vector<8x8xbf16>, vector<128x8xf32> -> vector<128x8xf32>
    %102 = arith.addf %96, %101 : vector<128x8xf32>
    %c0_136 = arith.constant 0 : index
    %c1_137 = arith.constant 1 : index
    %c0_138 = arith.constant 0 : index
    %c0_139 = arith.constant 0 : index
    %103 = vector.load %arg8[%c0_136, %c1_137, %c0_138, %c0_139] : memref<2x10x10x8xbf16, #tpu.memory_space<vmem>>, vector<2x8x8x8xbf16>
    %104 = vector.shape_cast %103 : vector<2x8x8x8xbf16> to vector<128x8xbf16>
    %c3_140 = arith.constant 3 : index
    %c0_141 = arith.constant 0 : index
    %c0_142 = arith.constant 0 : index
    %105 = vector.load %arg4[%c3_140, %c0_141, %c0_142] : memref<9x8x8xbf16, #tpu.memory_space<vmem>>, vector<1x8x8xbf16>
    %106 = vector.shape_cast %105 : vector<1x8x8xbf16> to vector<8x8xbf16>
    %cst_143 = arith.constant dense<0.000000e+00> : vector<128x8xf32>
    %107 = tpu.matmul %104, %106, %cst_143 {dimension_numbers = #tpu.dot_dimension_numbers<[1], [0], [0], [1], [0, 0, 1, 1], [], []>} : vector<128x8xbf16>, vector<8x8xbf16>, vector<128x8xf32> -> vector<128x8xf32>
    %108 = arith.addf %102, %107 : vector<128x8xf32>
    %c0_144 = arith.constant 0 : index
    %c1_145 = arith.constant 1 : index
    %c1_146 = arith.constant 1 : index
    %c0_147 = arith.constant 0 : index
    %109 = vector.load %arg8[%c0_144, %c1_145, %c1_146, %c0_147] : memref<2x10x10x8xbf16, #tpu.memory_space<vmem>>, vector<2x8x8x8xbf16>
    %110 = vector.shape_cast %109 : vector<2x8x8x8xbf16> to vector<128x8xbf16>
    %c4_148 = arith.constant 4 : index
    %c0_149 = arith.constant 0 : index
    %c0_150 = arith.constant 0 : index
    %111 = vector.load %arg4[%c4_148, %c0_149, %c0_150] : memref<9x8x8xbf16, #tpu.memory_space<vmem>>, vector<1x8x8xbf16>
    %112 = vector.shape_cast %111 : vector<1x8x8xbf16> to vector<8x8xbf16>
    %cst_151 = arith.constant dense<0.000000e+00> : vector<128x8xf32>
    %113 = tpu.matmul %110, %112, %cst_151 {dimension_numbers = #tpu.dot_dimension_numbers<[1], [0], [0], [1], [0, 0, 1, 1], [], []>} : vector<128x8xbf16>, vector<8x8xbf16>, vector<128x8xf32> -> vector<128x8xf32>
    %114 = arith.addf %108, %113 : vector<128x8xf32>
    %c0_152 = arith.constant 0 : index
    %c1_153 = arith.constant 1 : index
    %c2_154 = arith.constant 2 : index
    %c0_155 = arith.constant 0 : index
    %115 = vector.load %arg8[%c0_152, %c1_153, %c2_154, %c0_155] : memref<2x10x10x8xbf16, #tpu.memory_space<vmem>>, vector<2x8x8x8xbf16>
    %116 = vector.shape_cast %115 : vector<2x8x8x8xbf16> to vector<128x8xbf16>
    %c5_156 = arith.constant 5 : index
    %c0_157 = arith.constant 0 : index
    %c0_158 = arith.constant 0 : index
    %117 = vector.load %arg4[%c5_156, %c0_157, %c0_158] : memref<9x8x8xbf16, #tpu.memory_space<vmem>>, vector<1x8x8xbf16>
    %118 = vector.shape_cast %117 : vector<1x8x8xbf16> to vector<8x8xbf16>
    %cst_159 = arith.constant dense<0.000000e+00> : vector<128x8xf32>
    %119 = tpu.matmul %116, %118, %cst_159 {dimension_numbers = #tpu.dot_dimension_numbers<[1], [0], [0], [1], [0, 0, 1, 1], [], []>} : vector<128x8xbf16>, vector<8x8xbf16>, vector<128x8xf32> -> vector<128x8xf32>
    %120 = arith.addf %114, %119 : vector<128x8xf32>
    %c0_160 = arith.constant 0 : index
    %c2_161 = arith.constant 2 : index
    %c0_162 = arith.constant 0 : index
    %c0_163 = arith.constant 0 : index
    %121 = vector.load %arg8[%c0_160, %c2_161, %c0_162, %c0_163] : memref<2x10x10x8xbf16, #tpu.memory_space<vmem>>, vector<2x8x8x8xbf16>
    %122 = vector.shape_cast %121 : vector<2x8x8x8xbf16> to vector<128x8xbf16>
    %c6_164 = arith.constant 6 : index
    %c0_165 = arith.constant 0 : index
    %c0_166 = arith.constant 0 : index
    %123 = vector.load %arg4[%c6_164, %c0_165, %c0_166] : memref<9x8x8xbf16, #tpu.memory_space<vmem>>, vector<1x8x8xbf16>
    %124 = vector.shape_cast %123 : vector<1x8x8xbf16> to vector<8x8xbf16>
    %cst_167 = arith.constant dense<0.000000e+00> : vector<128x8xf32>
    %125 = tpu.matmul %122, %124, %cst_167 {dimension_numbers = #tpu.dot_dimension_numbers<[1], [0], [0], [1], [0, 0, 1, 1], [], []>} : vector<128x8xbf16>, vector<8x8xbf16>, vector<128x8xf32> -> vector<128x8xf32>
    %126 = arith.addf %120, %125 : vector<128x8xf32>
    %c0_168 = arith.constant 0 : index
    %c2_169 = arith.constant 2 : index
    %c1_170 = arith.constant 1 : index
    %c0_171 = arith.constant 0 : index
    %127 = vector.load %arg8[%c0_168, %c2_169, %c1_170, %c0_171] : memref<2x10x10x8xbf16, #tpu.memory_space<vmem>>, vector<2x8x8x8xbf16>
    %128 = vector.shape_cast %127 : vector<2x8x8x8xbf16> to vector<128x8xbf16>
    %c7_172 = arith.constant 7 : index
    %c0_173 = arith.constant 0 : index
    %c0_174 = arith.constant 0 : index
    %129 = vector.load %arg4[%c7_172, %c0_173, %c0_174] : memref<9x8x8xbf16, #tpu.memory_space<vmem>>, vector<1x8x8xbf16>
    %130 = vector.shape_cast %129 : vector<1x8x8xbf16> to vector<8x8xbf16>
    %cst_175 = arith.constant dense<0.000000e+00> : vector<128x8xf32>
    %131 = tpu.matmul %128, %130, %cst_175 {dimension_numbers = #tpu.dot_dimension_numbers<[1], [0], [0], [1], [0, 0, 1, 1], [], []>} : vector<128x8xbf16>, vector<8x8xbf16>, vector<128x8xf32> -> vector<128x8xf32>
    %132 = arith.addf %126, %131 : vector<128x8xf32>
    %c0_176 = arith.constant 0 : index
    %c2_177 = arith.constant 2 : index
    %c2_178 = arith.constant 2 : index
    %c0_179 = arith.constant 0 : index
    %133 = vector.load %arg8[%c0_176, %c2_177, %c2_178, %c0_179] : memref<2x10x10x8xbf16, #tpu.memory_space<vmem>>, vector<2x8x8x8xbf16>
    %134 = vector.shape_cast %133 : vector<2x8x8x8xbf16> to vector<128x8xbf16>
    %c8_180 = arith.constant 8 : index
    %c0_181 = arith.constant 0 : index
    %c0_182 = arith.constant 0 : index
    %135 = vector.load %arg4[%c8_180, %c0_181, %c0_182] : memref<9x8x8xbf16, #tpu.memory_space<vmem>>, vector<1x8x8xbf16>
    %136 = vector.shape_cast %135 : vector<1x8x8xbf16> to vector<8x8xbf16>
    %cst_183 = arith.constant dense<0.000000e+00> : vector<128x8xf32>
    %137 = tpu.matmul %134, %136, %cst_183 {dimension_numbers = #tpu.dot_dimension_numbers<[1], [0], [0], [1], [0, 0, 1, 1], [], []>} : vector<128x8xbf16>, vector<8x8xbf16>, vector<128x8xf32> -> vector<128x8xf32>
    %138 = arith.addf %132, %137 : vector<128x8xf32>
    %c0_184 = arith.constant 0 : index
    %c0_185 = arith.constant 0 : index
    %139 = vector.load %arg5[%c0_184, %c0_185] : memref<1x8xf32, #tpu.memory_space<vmem>>, vector<1x8xf32>
    %140 = vector.broadcast %139 : vector<1x8xf32> to vector<128x8xf32>
    %141 = arith.addf %138, %140 : vector<128x8xf32>
    %cst_186 = arith.constant 0.000000e+00 : f32
    %142 = vector.broadcast %cst_186 : f32 to vector<128x8xf32>
    %143 = arith.maximumf %141, %142 : vector<128x8xf32>
    %144 = vector.shape_cast %143 : vector<128x8xf32> to vector<2x8x8x8xf32>
    %145 = arith.truncf %144 : vector<2x8x8x8xf32> to vector<2x8x8x8xbf16>
    %c0_187 = arith.constant 0 : index
    %c0_188 = arith.constant 0 : index
    %c0_189 = arith.constant 0 : index
    %c0_190 = arith.constant 0 : index
    %146 = vector.load %arg6[%c0_187, %c0_188, %c0_189, %c0_190] : memref<2x8x8x8xbf16, #tpu.memory_space<vmem>>, vector<2x8x8x8xbf16>
    tpu.vector_store %arg6[%c0_187, %c0_188, %c0_189, %c0_190], %145 {strides = array<i32>} : memref<2x8x8x8xbf16, #tpu.memory_space<vmem>>, vector<2x8x8x8xbf16>,
    return
  }
  func.func @transform_0(%arg0: i32) -> (i32, i32, i32, i32) {
    %c0_i32 = arith.constant 0 : i32
    %c0_i32_0 = arith.constant 0 : i32
    %c0_i32_1 = arith.constant 0 : i32
    %c0_i32_2 = arith.constant 0 : i32
    return %arg0, %c0_i32, %c0_i32_0, %c0_i32_1 : i32, i32, i32, i32
  }
  func.func @transform_1(%arg0: i32) -> (i32, i32, i32) {
    %c0_i32 = arith.constant 0 : i32
    %c0_i32_0 = arith.constant 0 : i32
    %c0_i32_1 = arith.constant 0 : i32
    %c0_i32_2 = arith.constant 0 : i32
    return %c0_i32, %c0_i32_0, %c0_i32_1 : i32, i32, i32
  }
  func.func @transform_2(%arg0: i32) -> (i32, i32) {
    %c0_i32 = arith.constant 0 : i32
    %c0_i32_0 = arith.constant 0 : i32
    %c0_i32_1 = arith.constant 0 : i32
    return %c0_i32, %c0_i32_0 : i32, i32
  }
  func.func @transform_3(%arg0: i32) -> (i32, i32, i32) {
    %c0_i32 = arith.constant 0 : i32
    %c0_i32_0 = arith.constant 0 : i32
    %c0_i32_1 = arith.constant 0 : i32
    %c0_i32_2 = arith.constant 0 : i32
    return %c0_i32, %c0_i32_0, %c0_i32_1 : i32, i32, i32
  }
  func.func @transform_4(%arg0: i32) -> (i32, i32) {
    %c0_i32 = arith.constant 0 : i32
    %c0_i32_0 = arith.constant 0 : i32
    %c0_i32_1 = arith.constant 0 : i32
    return %c0_i32, %c0_i32_0 : i32, i32
  }
  func.func @transform_5(%arg0: i32) -> (i32, i32, i32, i32) {
    %c0_i32 = arith.constant 0 : i32
    %c0_i32_0 = arith.constant 0 : i32
    %c0_i32_1 = arith.constant 0 : i32
    %c0_i32_2 = arith.constant 0 : i32
    return %arg0, %c0_i32, %c0_i32_0, %c0_i32_1 : i32, i32, i32, i32
  }
}

</mosaic_0001>

<llo_original>
// kernel: tpu_custom_call.1
$region0: #{tpu_custom_call.1}
  #allocation0 [shape = 'u32[]', space=smem, size = 0x4, offset = 0x4, fixed_abs, tag = 'smem constant byte address 0x4 - core index']
  #allocation1 [shape = 'u32[72,128]{1,0:T(1,128)}', space=vmem, size = 0x9000, scoped, tag = 'internal scratch']
  #allocation2 [shape = 'bf16[2,10,10,8]{3,2,1,0:T(8,128)(2,1)}', space=vmem, size = 0x14000, scoped, tag = 'scratch operand']
  #allocation3 [shape = 'bf16[2,10,10,8]{3,2,1,0:T(8,128)(2,1)}', space=vmem, size = 0x14000, scoped, tag = 'scratch operand']
  %s0 = inlined_call_operand.hbm [shape: f32[2,16,8,16], index: 0, kind: input, shape index: {}]
  %s1 = inlined_call_operand.vmem [shape: bf16[9,8,8], index: 1, kind: input, shape index: {}]
  %s2 = inlined_call_operand.vmem [shape: f32[1,8], index: 2, kind: input, shape index: {}]
  %s3 = inlined_call_operand.vmem [shape: bf16[9,8,8], index: 3, kind: input, shape index: {}]
  %s4 = inlined_call_operand.vmem [shape: f32[1,8], index: 4, kind: input, shape index: {}]
  %s5 = inlined_call_operand.hbm [shape: bf16[2,8,8,8], index: 5, kind: output, shape index: {}]
  %s6 = sld [smem:[#allocation0]]
  $region34: #{tpu_custom_call.1} parent=0
    _
  %s8 = ssub.s32 1, %s6
  %s9 = scalar_select 0, %s8, %s6
  $region1: #{tpu_custom_call.1} parent=0
    #allocation4 [shape = 'u8[131072]{0}', space=vmem, size = 0x20000, scoped, tag = 'input window, operand 0, single buffered']
    #allocation5 [shape = 's32[1]{0}', space=sflag, size = 0x4, scoped, tag = 'scoped memory for tpu_custom_call.1']
    #allocation6 [shape = 's32[1]{0}', space=sflag, size = 0x4, scoped, tag = 'scoped memory for tpu_custom_call.1']
    #allocation7 [shape = 'u8[32768]{0}', space=vmem, size = 0x8000, scoped, tag = 'output window, operand 0, single buffered']
    %10 = vsyncpa [#allocation5], 0
    %11 = vsyncpa [#allocation6], 0
    // Predicated region
    $region2: #{tpu_custom_call.1} parent=1 // pred_check
      _
    $region3: #{tpu_custom_call.1} parent=1 // pred_check_branch
      %13 = sbr.rel (0) target = $region5
    $region4: #{tpu_custom_call.1} parent=1 // pred_region
      %15 = vsyncadd [#allocation5], 0
      %s16 = sshll.u32 %s0, 4
      %s17 = int_to_ptr.hbm [resolvable:$true] %s16
      %s18 = sshll.u32 [#allocation4], 4
      %s19 = int_to_ptr.vmem [resolvable:$true] %s18
      %24 = dma.hbm_to_vmem [thread:$0]  %s17, 4096, %s19, [#allocation5], 128, 128, 8
    $region5: #{tpu_custom_call.1} parent=1 // pred_fallthru
      _
    // Predicated region
    $region6: #{tpu_custom_call.1} parent=1 // pred_check
      _
    $region7: #{tpu_custom_call.1} parent=1 // pred_check_branch
      %26 = sbr.rel (0) target = $region9
    $region8: #{tpu_custom_call.1} parent=1 // pred_region
      _
    $region9: #{tpu_custom_call.1} parent=1 // pred_fallthru
      _
    // Predicated region
    $region10: #{tpu_custom_call.1} parent=1 // pred_check
      _
    $region11: #{tpu_custom_call.1} parent=1 // pred_check_branch
      %28 = sbr.rel (0) target = $region13
    $region12: #{tpu_custom_call.1} parent=1 // pred_region
      _
    $region13: #{tpu_custom_call.1} parent=1 // pred_fallthru
      _
    // Predicated region
    $region14: #{tpu_custom_call.1} parent=1 // pred_check
      _
    $region15: #{tpu_custom_call.1} parent=1 // pred_check_branch
      %30 = sbr.rel (0) target = $region17
    $region16: #{tpu_custom_call.1} parent=1 // pred_region
      _
    $region17: #{tpu_custom_call.1} parent=1 // pred_fallthru
      _
    // Predicated region
    $region18: #{tpu_custom_call.1} parent=1 // pred_check
      _
    $region19: #{tpu_custom_call.1} parent=1 // pred_check_branch
      %32 = sbr.rel (0) target = $region21
    $region20: #{tpu_custom_call.1} parent=1 // pred_region
      _
    $region21: #{tpu_custom_call.1} parent=1 // pred_fallthru
      _
    // Predicated region
    $region22: #{tpu_custom_call.1} parent=1 // pred_check
      _
    $region23: #{tpu_custom_call.1} parent=1 // pred_check_branch
      %34 = sbr.rel (0) target = $region25
    $region24: #{tpu_custom_call.1} parent=1 // pred_region
      %36 = dma.done [#allocation5], 4096
    $region25: #{tpu_custom_call.1} parent=1 // pred_fallthru
      _
    %v38 = vld [vmem:[#allocation4] sm:$0xff]
    %v39 = vld [vmem:[#allocation4 + $0x8] sm:$0xff]
    %v40 = vld [vmem:[#allocation4 + $0x10] sm:$0xff]
    %v41 = vld [vmem:[#allocation4 + $0x18] sm:$0xff]
    %v42 = vld [vmem:[#allocation4 + $0x20] sm:$0xff]
    %v43 = vld [vmem:[#allocation4 + $0x28] sm:$0xff]
    %v44 = vld [vmem:[#allocation4 + $0x30] sm:$0xff]
    %v45 = vld [vmem:[#allocation4 + $0x38] sm:$0xff]
    %v46 = vld [vmem:[#allocation4 + $0x40] sm:$0xff]
    %v47 = vld [vmem:[#allocation4 + $0x48] sm:$0xff]
    %v48 = vld [vmem:[#allocation4 + $0x50] sm:$0xff]
    %v49 = vld [vmem:[#allocation4 + $0x58] sm:$0xff]
    %v50 = vld [vmem:[#allocation4 + $0x60] sm:$0xff]
    %v51 = vld [vmem:[#allocation4 + $0x68] sm:$0xff]
    %v52 = vld [vmem:[#allocation4 + $0x70] sm:$0xff]
    %v53 = vld [vmem:[#allocation4 + $0x78] sm:$0xff]
    %v54 = vld [vmem:[#allocation4 + $0x80] sm:$0xff]
    %v55 = vld [vmem:[#allocation4 + $0x88] sm:$0xff]
    %v56 = vld [vmem:[#allocation4 + $0x90] sm:$0xff]
    %v57 = vld [vmem:[#allocation4 + $0x98] sm:$0xff]
    %v58 = vld [vmem:[#allocation4 + $0xa0] sm:$0xff]
    %v59 = vld [vmem:[#allocation4 + $0xa8] sm:$0xff]
    %v60 = vld [vmem:[#allocation4 + $0xb0] sm:$0xff]
    %v61 = vld [vmem:[#allocation4 + $0xb8] sm:$0xff]
    %v62 = vld [vmem:[#allocation4 + $0xc0] sm:$0xff]
    %v63 = vld [vmem:[#allocation4 + $0xc8] sm:$0xff]
    %v64 = vld [vmem:[#allocation4 + $0xd0] sm:$0xff]
    %v65 = vld [vmem:[#allocation4 + $0xd8] sm:$0xff]
    %v66 = vld [vmem:[#allocation4 + $0xe0] sm:$0xff]
    %v67 = vld [vmem:[#allocation4 + $0xe8] sm:$0xff]
    %v68 = vld [vmem:[#allocation4 + $0xf0] sm:$0xff]
    %v69 = vld [vmem:[#allocation4 + $0xf8] sm:$0xff]
    %102 = vrot.lane.b32.xlu0 %v38, 120
    %v103 = vpop.permute.xlu0 %102
    %104 = vrot.lane.b32.xlu0 %v39, 120
    %v105 = vpop.permute.xlu0 %104
    %106 = vrot.lane.b32.xlu0 %v40, 120
    %v107 = vpop.permute.xlu0 %106
    %108 = vrot.lane.b32.xlu0 %v41, 120
    %v109 = vpop.permute.xlu0 %108
    %110 = vrot.lane.b32.xlu0 %v42, 120
    %v111 = vpop.permute.xlu0 %110
    %112 = vrot.lane.b32.xlu0 %v43, 120
    %v113 = vpop.permute.xlu0 %112
    %114 = vrot.lane.b32.xlu0 %v44, 120
    %v115 = vpop.permute.xlu0 %114
    %116 = vrot.lane.b32.xlu0 %v45, 120
    %v117 = vpop.permute.xlu0 %116
    %118 = vrot.lane.b32.xlu0 %v46, 120
    %v119 = vpop.permute.xlu0 %118
    %120 = vrot.lane.b32.xlu0 %v47, 120
    %v121 = vpop.permute.xlu0 %120
    %122 = vrot.lane.b32.xlu0 %v48, 120
    %v123 = vpop.permute.xlu0 %122
    %124 = vrot.lane.b32.xlu0 %v49, 120
    %v125 = vpop.permute.xlu0 %124
    %126 = vrot.lane.b32.xlu0 %v50, 120
    %v127 = vpop.permute.xlu0 %126
    %128 = vrot.lane.b32.xlu0 %v51, 120
    %v129 = vpop.permute.xlu0 %128
    %130 = vrot.lane.b32.xlu0 %v52, 120
    %v131 = vpop.permute.xlu0 %130
    %132 = vrot.lane.b32.xlu0 %v53, 120
    %v133 = vpop.permute.xlu0 %132
    %134 = vrot.lane.b32.xlu0 %v54, 120
    %v135 = vpop.permute.xlu0 %134
    %136 = vrot.lane.b32.xlu0 %v55, 120
    %v137 = vpop.permute.xlu0 %136
    %138 = vrot.lane.b32.xlu0 %v56, 120
    %v139 = vpop.permute.xlu0 %138
    %140 = vrot.lane.b32.xlu0 %v57, 120
    %v141 = vpop.permute.xlu0 %140
    %142 = vrot.lane.b32.xlu0 %v58, 120
    %v143 = vpop.permute.xlu0 %142
    %144 = vrot.lane.b32.xlu0 %v59, 120
    %v145 = vpop.permute.xlu0 %144
    %146 = vrot.lane.b32.xlu0 %v60, 120
    %v147 = vpop.permute.xlu0 %146
    %148 = vrot.lane.b32.xlu0 %v61, 120
    %v149 = vpop.permute.xlu0 %148
    %150 = vrot.lane.b32.xlu0 %v62, 120
    %v151 = vpop.permute.xlu0 %150
    %152 = vrot.lane.b32.xlu0 %v63, 120
    %v153 = vpop.permute.xlu0 %152
    %154 = vrot.lane.b32.xlu0 %v64, 120
    %v155 = vpop.permute.xlu0 %154
    %156 = vrot.lane.b32.xlu0 %v65, 120
    %v157 = vpop.permute.xlu0 %156
    %158 = vrot.lane.b32.xlu0 %v66, 120
    %v159 = vpop.permute.xlu0 %158
    %160 = vrot.lane.b32.xlu0 %v67, 120
    %v161 = vpop.permute.xlu0 %160
    %162 = vrot.lane.b32.xlu0 %v68, 120
    %v163 = vpop.permute.xlu0 %162
    %164 = vrot.lane.b32.xlu0 %v69, 120
    %v165 = vpop.permute.xlu0 %164
    %v198 = vmax.f32 %v38, %v103
    %v199 = vmax.f32 %v39, %v105
    %v200 = vmax.f32 %v40, %v107
    %v201 = vmax.f32 %v41, %v109
    %v202 = vmax.f32 %v42, %v111
    %v203 = vmax.f32 %v43, %v113
    %v204 = vmax.f32 %v44, %v115
    %v205 = vmax.f32 %v45, %v117
    %v206 = vmax.f32 %v46, %v119
    %v207 = vmax.f32 %v47, %v121
    %v208 = vmax.f32 %v48, %v123
    %v209 = vmax.f32 %v49, %v125
    %v210 = vmax.f32 %v50, %v127
    %v211 = vmax.f32 %v51, %v129
    %v212 = vmax.f32 %v52, %v131
    %v213 = vmax.f32 %v53, %v133
    %v214 = vmax.f32 %v54, %v135
    %v215 = vmax.f32 %v55, %v137
    %v216 = vmax.f32 %v56, %v139
    %v217 = vmax.f32 %v57, %v141
    %v218 = vmax.f32 %v58, %v143
    %v219 = vmax.f32 %v59, %v145
    %v220 = vmax.f32 %v60, %v147
    %v221 = vmax.f32 %v61, %v149
    %v222 = vmax.f32 %v62, %v151
    %v223 = vmax.f32 %v63, %v153
    %v224 = vmax.f32 %v64, %v155
    %v225 = vmax.f32 %v65, %v157
    %v226 = vmax.f32 %v66, %v159
    %v227 = vmax.f32 %v67, %v161
    %v228 = vmax.f32 %v68, %v163
    %v229 = vmax.f32 %v69, %v165
    %v230 = vmax.f32 %v198, %v199
    %v231 = vmax.f32 %v200, %v201
    %v232 = vmax.f32 %v202, %v203
    %v233 = vmax.f32 %v204, %v205
    %v234 = vmax.f32 %v206, %v207
    %v235 = vmax.f32 %v208, %v209
    %v236 = vmax.f32 %v210, %v211
    %v237 = vmax.f32 %v212, %v213
    %v238 = vmax.f32 %v214, %v215
    %v239 = vmax.f32 %v216, %v217
    %v240 = vmax.f32 %v218, %v219
    %v241 = vmax.f32 %v220, %v221
    %v242 = vmax.f32 %v222, %v223
    %v243 = vmax.f32 %v224, %v225
    %v244 = vmax.f32 %v226, %v227
    %v245 = vmax.f32 %v228, %v229
    %vm246 = vcmask 60416
    %247 = vst.msk [vmem:[#allocation2] sm:$0xf] %vm246, 0
    %vm248 = vcmask 57344
    %249 = vst.msk [vmem:[#allocation2 + $0x4] sm:$0x1] %vm248, 0
    %250 = vst.msk [vmem:[#allocation2 + $0x50] sm:$0xf] %vm246, 0
    %251 = vst.msk [vmem:[#allocation2 + $0x54] sm:$0x1] %vm248, 0
    %s252 = scalar_lea.vmem [#allocation2], 72
    %253 = vst.msk [vmem:[%s252] sm:$0xf] %vm246, 0
    %254 = vst.msk [vmem:[%s252 + $0x4] sm:$0x1] %vm248, 0
    %255 = vst.msk [vmem:[%s252 + $0x50] sm:$0xf] %vm246, 0
    %256 = vst.msk [vmem:[%s252 + $0x54] sm:$0x1] %vm248, 0
    %vm257 = vcmask 57344
    %vm258 = vsmask.f32 256
    %vm259 = vmand %vm257, %vm258
    %v260 = vld [vmem:[#allocation2] sm:$0x1]
    %v261 = vsel %vm259, 0, %v260
    %262 = vst [vmem:[#allocation2] sm:$0x1] %v261
    %v263 = vld [vmem:[#allocation2 + $0x8] sm:$0x1]
    %v264 = vsel %vm259, 0, %v263
    %265 = vst [vmem:[#allocation2 + $0x8] sm:$0x1] %v264
    %v266 = vld [vmem:[#allocation2 + $0x10] sm:$0x1]
    %v267 = vsel %vm259, 0, %v266
    %268 = vst [vmem:[#allocation2 + $0x10] sm:$0x1] %v267
    %v269 = vld [vmem:[#allocation2 + $0x18] sm:$0x1]
    %v270 = vsel %vm259, 0, %v269
    %271 = vst [vmem:[#allocation2 + $0x18] sm:$0x1] %v270
    %v272 = vld [vmem:[#allocation2 + $0x20] sm:$0x1]
    %v273 = vsel %vm259, 0, %v272
    %274 = vst [vmem:[#allocation2 + $0x20] sm:$0x1] %v273
    %v275 = vld [vmem:[#allocation2 + $0x28] sm:$0x1]
    %v276 = vsel %vm259, 0, %v275
    %277 = vst [vmem:[#allocation2 + $0x28] sm:$0x1] %v276
    %v278 = vld [vmem:[#allocation2 + $0x30] sm:$0x1]
    %v279 = vsel %vm259, 0, %v278
    %280 = vst [vmem:[#allocation2 + $0x30] sm:$0x1] %v279
    %v281 = vld [vmem:[#allocation2 + $0x38] sm:$0x1]
    %v282 = vsel %vm259, 0, %v281
    %283 = vst [vmem:[#allocation2 + $0x38] sm:$0x1] %v282
    %v284 = vld [vmem:[#allocation2 + $0x40] sm:$0x1]
    %v285 = vsel %vm259, 0, %v284
    %286 = vst [vmem:[#allocation2 + $0x40] sm:$0x1] %v285
    %v287 = vld [vmem:[#allocation2 + $0x48] sm:$0x1]
    %v288 = vsel %vm259, 0, %v287
    %289 = vst [vmem:[#allocation2 + $0x48] sm:$0x1] %v288
    %v290 = vld [vmem:[#allocation2 + $0x50] sm:$0x1]
    %v291 = vsel %vm259, 0, %v290
    %292 = vst [vmem:[#allocation2 + $0x50] sm:$0x1] %v291
    %v293 = vld [vmem:[#allocation2 + $0x58] sm:$0x1]
    %v294 = vsel %vm259, 0, %v293
    %295 = vst [vmem:[#allocation2 + $0x58] sm:$0x1] %v294
    %v296 = vld [vmem:[#allocation2 + $0x60] sm:$0x1]
    %v297 = vsel %vm259, 0, %v296
    %298 = vst [vmem:[#allocation2 + $0x60] sm:$0x1] %v297
    %v299 = vld [vmem:[#allocation2 + $0x68] sm:$0x1]
    %v300 = vsel %vm259, 0, %v299
    %301 = vst [vmem:[#allocation2 + $0x68] sm:$0x1] %v300
    %v302 = vld [vmem:[#allocation2 + $0x70] sm:$0x1]
    %v303 = vsel %vm259, 0, %v302
    %304 = vst [vmem:[#allocation2 + $0x70] sm:$0x1] %v303
    %v305 = vld [vmem:[#allocation2 + $0x78] sm:$0x1]
    %v306 = vsel %vm259, 0, %v305
    %307 = vst [vmem:[#allocation2 + $0x78] sm:$0x1] %v306
    %v308 = vld [vmem:[#allocation2 + $0x80] sm:$0x1]
    %v309 = vsel %vm259, 0, %v308
    %310 = vst [vmem:[#allocation2 + $0x80] sm:$0x1] %v309
    %v311 = vld [vmem:[#allocation2 + $0x88] sm:$0x1]
    %v312 = vsel %vm259, 0, %v311
    %313 = vst [vmem:[#allocation2 + $0x88] sm:$0x1] %v312
    %v314 = vld [vmem:[#allocation2 + $0x90] sm:$0x1]
    %v315 = vsel %vm259, 0, %v314
    %316 = vst [vmem:[#allocation2 + $0x90] sm:$0x1] %v315
    %v317 = vld [vmem:[#allocation2 + $0x98] sm:$0x1]
    %v318 = vsel %vm259, 0, %v317
    %319 = vst [vmem:[#allocation2 + $0x98] sm:$0x1] %v318
    %vm320 = vsmask.f32 7938
    %vm321 = vmand %vm257, %vm320
    %v322 = vld [vmem:[#allocation2 + $0x4] sm:$0x1]
    %v323 = vsel %vm321, 0, %v322
    %324 = vst [vmem:[#allocation2 + $0x4] sm:$0x1] %v323
    %v325 = vld [vmem:[#allocation2 + $0xc] sm:$0x1]
    %v326 = vsel %vm321, 0, %v325
    %327 = vst [vmem:[#allocation2 + $0xc] sm:$0x1] %v326
    %v328 = vld [vmem:[#allocation2 + $0x14] sm:$0x1]
    %v329 = vsel %vm321, 0, %v328
    %330 = vst [vmem:[#allocation2 + $0x14] sm:$0x1] %v329
    %v331 = vld [vmem:[#allocation2 + $0x1c] sm:$0x1]
    %v332 = vsel %vm321, 0, %v331
    %333 = vst [vmem:[#allocation2 + $0x1c] sm:$0x1] %v332
    %v334 = vld [vmem:[#allocation2 + $0x24] sm:$0x1]
    %v335 = vsel %vm321, 0, %v334
    %336 = vst [vmem:[#allocation2 + $0x24] sm:$0x1] %v335
    %v337 = vld [vmem:[#allocation2 + $0x2c] sm:$0x1]
    %v338 = vsel %vm321, 0, %v337
    %339 = vst [vmem:[#allocation2 + $0x2c] sm:$0x1] %v338
    %v340 = vld [vmem:[#allocation2 + $0x34] sm:$0x1]
    %v341 = vsel %vm321, 0, %v340
    %342 = vst [vmem:[#allocation2 + $0x34] sm:$0x1] %v341
    %v343 = vld [vmem:[#allocation2 + $0x3c] sm:$0x1]
    %v344 = vsel %vm321, 0, %v343
    %345 = vst [vmem:[#allocation2 + $0x3c] sm:$0x1] %v344
    %v346 = vld [vmem:[#allocation2 + $0x44] sm:$0x1]
    %v347 = vsel %vm321, 0, %v346
    %348 = vst [vmem:[#allocation2 + $0x44] sm:$0x1] %v347
    %v349 = vld [vmem:[#allocation2 + $0x4c] sm:$0x1]
    %v350 = vsel %vm321, 0, %v349
    %351 = vst [vmem:[#allocation2 + $0x4c] sm:$0x1] %v350
    %v352 = vld [vmem:[#allocation2 + $0x54] sm:$0x1]
    %v353 = vsel %vm321, 0, %v352
    %354 = vst [vmem:[#allocation2 + $0x54] sm:$0x1] %v353
    %v355 = vld [vmem:[#allocation2 + $0x5c] sm:$0x1]
    %v356 = vsel %vm321, 0, %v355
    %357 = vst [vmem:[#allocation2 + $0x5c] sm:$0x1] %v356
    %v358 = vld [vmem:[#allocation2 + $0x64] sm:$0x1]
    %v359 = vsel %vm321, 0, %v358
    %360 = vst [vmem:[#allocation2 + $0x64] sm:$0x1] %v359
    %v361 = vld [vmem:[#allocation2 + $0x6c] sm:$0x1]
    %v362 = vsel %vm321, 0, %v361
    %363 = vst [vmem:[#allocation2 + $0x6c] sm:$0x1] %v362
    %v364 = vld [vmem:[#allocation2 + $0x74] sm:$0x1]
    %v365 = vsel %vm321, 0, %v364
    %366 = vst [vmem:[#allocation2 + $0x74] sm:$0x1] %v365
    %v367 = vld [vmem:[#allocation2 + $0x7c] sm:$0x1]
    %v368 = vsel %vm321, 0, %v367
    %369 = vst [vmem:[#allocation2 + $0x7c] sm:$0x1] %v368
    %v370 = vld [vmem:[#allocation2 + $0x84] sm:$0x1]
    %v371 = vsel %vm321, 0, %v370
    %372 = vst [vmem:[#allocation2 + $0x84] sm:$0x1] %v371
    %v373 = vld [vmem:[#allocation2 + $0x8c] sm:$0x1]
    %v374 = vsel %vm321, 0, %v373
    %375 = vst [vmem:[#allocation2 + $0x8c] sm:$0x1] %v374
    %v376 = vld [vmem:[#allocation2 + $0x94] sm:$0x1]
    %v377 = vsel %vm321, 0, %v376
    %378 = vst [vmem:[#allocation2 + $0x94] sm:$0x1] %v377
    %v379 = vld [vmem:[#allocation2 + $0x9c] sm:$0x1]
    %v380 = vsel %vm321, 0, %v379
    %381 = vst [vmem:[#allocation2 + $0x9c] sm:$0x1] %v380
    %v382 = vpack.c.bf16 %v230, %v230
    %v383 = vpack.c.bf16 %v231, %v231
    %v384 = vpack.c.bf16 %v232, %v232
    %v385 = vpack.c.bf16 %v233, %v233
    %v386 = vpack.c.bf16 %v234, %v234
    %v387 = vpack.c.bf16 %v235, %v235
    %v388 = vpack.c.bf16 %v236, %v236
    %v389 = vpack.c.bf16 %v237, %v237
    %v390 = vpack.c.bf16 %v238, %v238
    %v391 = vpack.c.bf16 %v239, %v239
    %v392 = vpack.c.bf16 %v240, %v240
    %v393 = vpack.c.bf16 %v241, %v241
    %v394 = vpack.c.bf16 %v242, %v242
    %v395 = vpack.c.bf16 %v243, %v243
    %v396 = vpack.c.bf16 %v244, %v244
    %v397 = vpack.c.bf16 %v245, %v245
    %v399 = vshrl.u32 %v382, 16
    %v401 = vrot.slane %v399, 7
    %v402 = vshll.u32 %v382, 16
    %v404 = vor.u32 %v401, %v402
    %v405 = vrot.slane %v401, 4
    %v407 = vshrl.u32 %v383, 16
    %v409 = vrot.slane %v407, 7
    %v410 = vshll.u32 %v383, 16
    %v412 = vor.u32 %v409, %v410
    %v413 = vrot.slane %v409, 4
    %v415 = vshrl.u32 %v384, 16
    %v417 = vrot.slane %v415, 7
    %v418 = vshll.u32 %v384, 16
    %v420 = vor.u32 %v417, %v418
    %v421 = vrot.slane %v417, 4
    %v423 = vshrl.u32 %v385, 16
    %v425 = vrot.slane %v423, 7
    %v426 = vshll.u32 %v385, 16
    %v428 = vor.u32 %v425, %v426
    %v429 = vrot.slane %v425, 4
    %v431 = vshrl.u32 %v386, 16
    %v433 = vrot.slane %v431, 7
    %v434 = vshll.u32 %v386, 16
    %v436 = vor.u32 %v433, %v434
    %v437 = vrot.slane %v433, 4
    %v439 = vshrl.u32 %v387, 16
    %v441 = vrot.slane %v439, 7
    %v442 = vshll.u32 %v387, 16
    %v444 = vor.u32 %v441, %v442
    %v445 = vrot.slane %v441, 4
    %v447 = vshrl.u32 %v388, 16
    %v449 = vrot.slane %v447, 7
    %v450 = vshll.u32 %v388, 16
    %v452 = vor.u32 %v449, %v450
    %v453 = vrot.slane %v449, 4
    %v455 = vshrl.u32 %v389, 16
    %v457 = vrot.slane %v455, 7
    %v458 = vshll.u32 %v389, 16
    %v460 = vor.u32 %v457, %v458
    %v461 = vrot.slane %v457, 4
    %v463 = vshrl.u32 %v390, 16
    %v465 = vrot.slane %v463, 7
    %v466 = vshll.u32 %v390, 16
    %v468 = vor.u32 %v465, %v466
    %v469 = vrot.slane %v465, 4
    %v471 = vshrl.u32 %v391, 16
    %v473 = vrot.slane %v471, 7
    %v474 = vshll.u32 %v391, 16
    %v476 = vor.u32 %v473, %v474
    %v477 = vrot.slane %v473, 4
    %v479 = vshrl.u32 %v392, 16
    %v481 = vrot.slane %v479, 7
    %v482 = vshll.u32 %v392, 16
    %v484 = vor.u32 %v481, %v482
    %v485 = vrot.slane %v481, 4
    %v487 = vshrl.u32 %v393, 16
    %v489 = vrot.slane %v487, 7
    %v490 = vshll.u32 %v393, 16
    %v492 = vor.u32 %v489, %v490
    %v493 = vrot.slane %v489, 4
    %v495 = vshrl.u32 %v394, 16
    %v497 = vrot.slane %v495, 7
    %v498 = vshll.u32 %v394, 16
    %v500 = vor.u32 %v497, %v498
    %v501 = vrot.slane %v497, 4
    %v503 = vshrl.u32 %v395, 16
    %v505 = vrot.slane %v503, 7
    %v506 = vshll.u32 %v395, 16
    %v508 = vor.u32 %v505, %v506
    %v509 = vrot.slane %v505, 4
    %v511 = vshrl.u32 %v396, 16
    %v513 = vrot.slane %v511, 7
    %v514 = vshll.u32 %v396, 16
    %v516 = vor.u32 %v513, %v514
    %v517 = vrot.slane %v513, 4
    %v519 = vshrl.u32 %v397, 16
    %v521 = vrot.slane %v519, 7
    %v522 = vshll.u32 %v397, 16
    %v524 = vor.u32 %v521, %v522
    %v525 = vrot.slane %v521, 4
    %s558 = scalar_lea.vmem [#allocation2], 8
    %vm559 = vcmask 60416
    %vm560 = vmand %vm559, %vm320
    %v561 = vld [vmem:[%s558] sm:$0xf]
    %v562 = vsel %vm560, %v404, %v561
    %563 = vst [vmem:[%s558] sm:$0xf] %v562
    %v564 = vld [vmem:[%s558 + $0x4] sm:$0x1]
    %v565 = vsel %vm259, %v405, %v564
    %566 = vst [vmem:[%s558 + $0x4] sm:$0x1] %v565
    %v567 = vld [vmem:[%s558 + $0x8] sm:$0xf]
    %v568 = vsel %vm560, %v412, %v567
    %569 = vst [vmem:[%s558 + $0x8] sm:$0xf] %v568
    %v570 = vld [vmem:[%s558 + $0xc] sm:$0x1]
    %v571 = vsel %vm259, %v413, %v570
    %572 = vst [vmem:[%s558 + $0xc] sm:$0x1] %v571
    %v573 = vld [vmem:[%s558 + $0x10] sm:$0xf]
    %v574 = vsel %vm560, %v420, %v573
    %575 = vst [vmem:[%s558 + $0x10] sm:$0xf] %v574
    %v576 = vld [vmem:[%s558 + $0x14] sm:$0x1]
    %v577 = vsel %vm259, %v421, %v576
    %578 = vst [vmem:[%s558 + $0x14] sm:$0x1] %v577
    %v579 = vld [vmem:[%s558 + $0x18] sm:$0xf]
    %v580 = vsel %vm560, %v428, %v579
    %581 = vst [vmem:[%s558 + $0x18] sm:$0xf] %v580
    %v582 = vld [vmem:[%s558 + $0x1c] sm:$0x1]
    %v583 = vsel %vm259, %v429, %v582
    %584 = vst [vmem:[%s558 + $0x1c] sm:$0x1] %v583
    %v585 = vld [vmem:[%s558 + $0x20] sm:$0xf]
    %v586 = vsel %vm560, %v436, %v585
    %587 = vst [vmem:[%s558 + $0x20] sm:$0xf] %v586
    %v588 = vld [vmem:[%s558 + $0x24] sm:$0x1]
    %v589 = vsel %vm259, %v437, %v588
    %590 = vst [vmem:[%s558 + $0x24] sm:$0x1] %v589
    %v591 = vld [vmem:[%s558 + $0x28] sm:$0xf]
    %v592 = vsel %vm560, %v444, %v591
    %593 = vst [vmem:[%s558 + $0x28] sm:$0xf] %v592
    %v594 = vld [vmem:[%s558 + $0x2c] sm:$0x1]
    %v595 = vsel %vm259, %v445, %v594
    %596 = vst [vmem:[%s558 + $0x2c] sm:$0x1] %v595
    %v597 = vld [vmem:[%s558 + $0x30] sm:$0xf]
    %v598 = vsel %vm560, %v452, %v597
    %599 = vst [vmem:[%s558 + $0x30] sm:$0xf] %v598
    %v600 = vld [vmem:[%s558 + $0x34] sm:$0x1]
    %v601 = vsel %vm259, %v453, %v600
    %602 = vst [vmem:[%s558 + $0x34] sm:$0x1] %v601
    %v603 = vld [vmem:[%s558 + $0x38] sm:$0xf]
    %v604 = vsel %vm560, %v460, %v603
    %605 = vst [vmem:[%s558 + $0x38] sm:$0xf] %v604
    %v606 = vld [vmem:[%s558 + $0x3c] sm:$0x1]
    %v607 = vsel %vm259, %v461, %v606
    %608 = vst [vmem:[%s558 + $0x3c] sm:$0x1] %v607
    %v609 = vld [vmem:[%s558 + $0x50] sm:$0xf]
    %v610 = vsel %vm560, %v468, %v609
    %611 = vst [vmem:[%s558 + $0x50] sm:$0xf] %v610
    %v612 = vld [vmem:[%s558 + $0x54] sm:$0x1]
    %v613 = vsel %vm259, %v469, %v612
    %614 = vst [vmem:[%s558 + $0x54] sm:$0x1] %v613
    %v615 = vld [vmem:[%s558 + $0x58] sm:$0xf]
    %v616 = vsel %vm560, %v476, %v615
    %617 = vst [vmem:[%s558 + $0x58] sm:$0xf] %v616
    %v618 = vld [vmem:[%s558 + $0x5c] sm:$0x1]
    %v619 = vsel %vm259, %v477, %v618
    %620 = vst [vmem:[%s558 + $0x5c] sm:$0x1] %v619
    %v621 = vld [vmem:[%s558 + $0x60] sm:$0xf]
    %v622 = vsel %vm560, %v484, %v621
    %623 = vst [vmem:[%s558 + $0x60] sm:$0xf] %v622
    %v624 = vld [vmem:[%s558 + $0x64] sm:$0x1]
    %v625 = vsel %vm259, %v485, %v624
    %626 = vst [vmem:[%s558 + $0x64] sm:$0x1] %v625
    %v627 = vld [vmem:[%s558 + $0x68] sm:$0xf]
    %v628 = vsel %vm560, %v492, %v627
    %629 = vst [vmem:[%s558 + $0x68] sm:$0xf] %v628
    %v630 = vld [vmem:[%s558 + $0x6c] sm:$0x1]
    %v631 = vsel %vm259, %v493, %v630
    %632 = vst [vmem:[%s558 + $0x6c] sm:$0x1] %v631
    %v633 = vld [vmem:[%s558 + $0x70] sm:$0xf]
    %v634 = vsel %vm560, %v500, %v633
    %635 = vst [vmem:[%s558 + $0x70] sm:$0xf] %v634
    %v636 = vld [vmem:[%s558 + $0x74] sm:$0x1]
    %v637 = vsel %vm259, %v501, %v636
    %638 = vst [vmem:[%s558 + $0x74] sm:$0x1] %v637
    %v639 = vld [vmem:[%s558 + $0x78] sm:$0xf]
    %v640 = vsel %vm560, %v508, %v639
    %641 = vst [vmem:[%s558 + $0x78] sm:$0xf] %v640
    %v642 = vld [vmem:[%s558 + $0x7c] sm:$0x1]
    %v643 = vsel %vm259, %v509, %v642
    %644 = vst [vmem:[%s558 + $0x7c] sm:$0x1] %v643
    %v645 = vld [vmem:[%s558 + $0x80] sm:$0xf]
    %v646 = vsel %vm560, %v516, %v645
    %647 = vst [vmem:[%s558 + $0x80] sm:$0xf] %v646
    %v648 = vld [vmem:[%s558 + $0x84] sm:$0x1]
    %v649 = vsel %vm259, %v517, %v648
    %650 = vst [vmem:[%s558 + $0x84] sm:$0x1] %v649
    %v651 = vld [vmem:[%s558 + $0x88] sm:$0xf]
    %v652 = vsel %vm560, %v524, %v651
    %653 = vst [vmem:[%s558 + $0x88] sm:$0xf] %v652
    %v654 = vld [vmem:[%s558 + $0x8c] sm:$0x1]
    %v655 = vsel %vm259, %v525, %v654
    %656 = vst [vmem:[%s558 + $0x8c] sm:$0x1] %v655
    %v657 = vld [vmem:[#allocation2] sm:$0xf]
    %v658 = vld [vmem:[#allocation2 + $0x8] sm:$0xf]
    %v659 = vld [vmem:[#allocation2 + $0x10] sm:$0xf]
    %v660 = vld [vmem:[#allocation2 + $0x18] sm:$0xf]
    %v661 = vld [vmem:[#allocation2 + $0x20] sm:$0xf]
    %v662 = vld [vmem:[#allocation2 + $0x28] sm:$0xf]
    %v663 = vld [vmem:[#allocation2 + $0x30] sm:$0xf]
    %v664 = vld [vmem:[#allocation2 + $0x38] sm:$0xf]
    %v665 = vld [vmem:[#allocation2 + $0x50] sm:$0xf]
    %v666 = vld [vmem:[#allocation2 + $0x58] sm:$0xf]
    %v667 = vld [vmem:[#allocation2 + $0x60] sm:$0xf]
    %v668 = vld [vmem:[#allocation2 + $0x68] sm:$0xf]
    %v669 = vld [vmem:[#allocation2 + $0x70] sm:$0xf]
    %v670 = vld [vmem:[#allocation2 + $0x78] sm:$0xf]
    %v671 = vld [vmem:[#allocation2 + $0x80] sm:$0xf]
    %v672 = vld [vmem:[#allocation2 + $0x88] sm:$0xf]
    %v673 = vld [vmem:[%s1] sm:$0xf]
    %v674 = vld [vmem:[#allocation2 + $0x4] sm:$0x1]
    %v675 = vld [vmem:[#allocation2 + $0xc] sm:$0x1]
    %v676 = vld [vmem:[#allocation2 + $0x14] sm:$0x1]
    %v677 = vld [vmem:[#allocation2 + $0x1c] sm:$0x1]
    %v678 = vld [vmem:[#allocation2 + $0x24] sm:$0x1]
    %v679 = vld [vmem:[#allocation2 + $0x2c] sm:$0x1]
    %v680 = vld [vmem:[#allocation2 + $0x34] sm:$0x1]
    %v681 = vld [vmem:[#allocation2 + $0x3c] sm:$0x1]
    %v682 = vld [vmem:[#allocation2 + $0x54] sm:$0x1]
    %v683 = vld [vmem:[#allocation2 + $0x5c] sm:$0x1]
    %v684 = vld [vmem:[#allocation2 + $0x64] sm:$0x1]
    %v685 = vld [vmem:[#allocation2 + $0x6c] sm:$0x1]
    %v686 = vld [vmem:[#allocation2 + $0x74] sm:$0x1]
    %v687 = vld [vmem:[#allocation2 + $0x7c] sm:$0x1]
    %v688 = vld [vmem:[#allocation2 + $0x84] sm:$0x1]
    %v689 = vld [vmem:[#allocation2 + $0x8c] sm:$0x1]
    %vm690 = vsmask.f32 3328
    %vm691 = vsmask.f32 7440
    %vm692 = vmor %vm690, %vm691
    %v694 = vshrl.u32 %v657, 16
    %v696 = vrot.slane %v694, 4
    %v697 = vshll.u32 %v657, 16
    %v699 = vrot.slane %v697, 5
    %v700 = vor.u32 %v696, %v699
    %v701 = vrot.slane %v700, 4
    %v703 = vshll.u32 %v674, 16
    %v705 = vrot.slane %v703, 5
    %v706 = vsel %vm692, %v701, %v705
    %v708 = vshrl.u32 %v658, 16
    %v710 = vrot.slane %v708, 4
    %v711 = vshll.u32 %v658, 16
    %v713 = vrot.slane %v711, 5
    %v714 = vor.u32 %v710, %v713
    %v715 = vrot.slane %v714, 4
    %v717 = vshll.u32 %v675, 16
    %v719 = vrot.slane %v717, 5
    %v720 = vsel %vm692, %v715, %v719
    %v722 = vshrl.u32 %v659, 16
    %v724 = vrot.slane %v722, 4
    %v725 = vshll.u32 %v659, 16
    %v727 = vrot.slane %v725, 5
    %v728 = vor.u32 %v724, %v727
    %v729 = vrot.slane %v728, 4
    %v731 = vshll.u32 %v676, 16
    %v733 = vrot.slane %v731, 5
    %v734 = vsel %vm692, %v729, %v733
    %v736 = vshrl.u32 %v660, 16
    %v738 = vrot.slane %v736, 4
    %v739 = vshll.u32 %v660, 16
    %v741 = vrot.slane %v739, 5
    %v742 = vor.u32 %v738, %v741
    %v743 = vrot.slane %v742, 4
    %v745 = vshll.u32 %v677, 16
    %v747 = vrot.slane %v745, 5
    %v748 = vsel %vm692, %v743, %v747
    %v750 = vshrl.u32 %v661, 16
    %v752 = vrot.slane %v750, 4
    %v753 = vshll.u32 %v661, 16
    %v755 = vrot.slane %v753, 5
    %v756 = vor.u32 %v752, %v755
    %v757 = vrot.slane %v756, 4
    %v759 = vshll.u32 %v678, 16
    %v761 = vrot.slane %v759, 5
    %v762 = vsel %vm692, %v757, %v761
    %v764 = vshrl.u32 %v662, 16
    %v766 = vrot.slane %v764, 4
    %v767 = vshll.u32 %v662, 16
    %v769 = vrot.slane %v767, 5
    %v770 = vor.u32 %v766, %v769
    %v771 = vrot.slane %v770, 4
    %v773 = vshll.u32 %v679, 16
    %v775 = vrot.slane %v773, 5
    %v776 = vsel %vm692, %v771, %v775
    %v778 = vshrl.u32 %v663, 16
    %v780 = vrot.slane %v778, 4
    %v781 = vshll.u32 %v663, 16
    %v783 = vrot.slane %v781, 5
    %v784 = vor.u32 %v780, %v783
    %v785 = vrot.slane %v784, 4
    %v787 = vshll.u32 %v680, 16
    %v789 = vrot.slane %v787, 5
    %v790 = vsel %vm692, %v785, %v789
    %v792 = vshrl.u32 %v664, 16
    %v794 = vrot.slane %v792, 4
    %v795 = vshll.u32 %v664, 16
    %v797 = vrot.slane %v795, 5
    %v798 = vor.u32 %v794, %v797
    %v799 = vrot.slane %v798, 4
    %v801 = vshll.u32 %v681, 16
    %v803 = vrot.slane %v801, 5
    %v804 = vsel %vm692, %v799, %v803
    %v806 = vshrl.u32 %v665, 16
    %v808 = vrot.slane %v806, 4
    %v809 = vshll.u32 %v665, 16
    %v811 = vrot.slane %v809, 5
    %v812 = vor.u32 %v808, %v811
    %v813 = vrot.slane %v812, 4
    %v815 = vshll.u32 %v682, 16
    %v817 = vrot.slane %v815, 5
    %v818 = vsel %vm692, %v813, %v817
    %v820 = vshrl.u32 %v666, 16
    %v822 = vrot.slane %v820, 4
    %v823 = vshll.u32 %v666, 16
    %v825 = vrot.slane %v823, 5
    %v826 = vor.u32 %v822, %v825
    %v827 = vrot.slane %v826, 4
    %v829 = vshll.u32 %v683, 16
    %v831 = vrot.slane %v829, 5
    %v832 = vsel %vm692, %v827, %v831
    %v834 = vshrl.u32 %v667, 16
    %v836 = vrot.slane %v834, 4
    %v837 = vshll.u32 %v667, 16
    %v839 = vrot.slane %v837, 5
    %v840 = vor.u32 %v836, %v839
    %v841 = vrot.slane %v840, 4
    %v843 = vshll.u32 %v684, 16
    %v845 = vrot.slane %v843, 5
    %v846 = vsel %vm692, %v841, %v845
    %v848 = vshrl.u32 %v668, 16
    %v850 = vrot.slane %v848, 4
    %v851 = vshll.u32 %v668, 16
    %v853 = vrot.slane %v851, 5
    %v854 = vor.u32 %v850, %v853
    %v855 = vrot.slane %v854, 4
    %v857 = vshll.u32 %v685, 16
    %v859 = vrot.slane %v857, 5
    %v860 = vsel %vm692, %v855, %v859
    %v862 = vshrl.u32 %v669, 16
    %v864 = vrot.slane %v862, 4
    %v865 = vshll.u32 %v669, 16
    %v867 = vrot.slane %v865, 5
    %v868 = vor.u32 %v864, %v867
    %v869 = vrot.slane %v868, 4
    %v871 = vshll.u32 %v686, 16
    %v873 = vrot.slane %v871, 5
    %v874 = vsel %vm692, %v869, %v873
    %v876 = vshrl.u32 %v670, 16
    %v878 = vrot.slane %v876, 4
    %v879 = vshll.u32 %v670, 16
    %v881 = vrot.slane %v879, 5
    %v882 = vor.u32 %v878, %v881
    %v883 = vrot.slane %v882, 4
    %v885 = vshll.u32 %v687, 16
    %v887 = vrot.slane %v885, 5
    %v888 = vsel %vm692, %v883, %v887
    %v890 = vshrl.u32 %v671, 16
    %v892 = vrot.slane %v890, 4
    %v893 = vshll.u32 %v671, 16
    %v895 = vrot.slane %v893, 5
    %v896 = vor.u32 %v892, %v895
    %v897 = vrot.slane %v896, 4
    %v899 = vshll.u32 %v688, 16
    %v901 = vrot.slane %v899, 5
    %v902 = vsel %vm692, %v897, %v901
    %v904 = vshrl.u32 %v672, 16
    %v906 = vrot.slane %v904, 4
    %v907 = vshll.u32 %v672, 16
    %v909 = vrot.slane %v907, 5
    %v910 = vor.u32 %v906, %v909
    %v911 = vrot.slane %v910, 4
    %v913 = vshll.u32 %v689, 16
    %v915 = vrot.slane %v913, 5
    %v916 = vsel %vm692, %v911, %v915
    %s917 = scalar_lea.vmem %s1, 4
    %v918 = vld [vmem:[%s917] sm:$0xf]
    %v919 = vunpack.c.l.b16 %v706
    %v920 = vunpack.c.l.b16 %v720
    %v921 = vunpack.c.l.b16 %v734
    %v922 = vunpack.c.l.b16 %v748
    %v923 = vunpack.c.l.b16 %v762
    %v924 = vunpack.c.l.b16 %v776
    %v925 = vunpack.c.l.b16 %v790
    %v926 = vunpack.c.l.b16 %v804
    %v927 = vunpack.c.l.b16 %v818
    %v928 = vunpack.c.l.b16 %v832
    %v929 = vunpack.c.l.b16 %v846
    %v930 = vunpack.c.l.b16 %v860
    %v931 = vunpack.c.l.b16 %v874
    %v932 = vunpack.c.l.b16 %v888
    %v933 = vunpack.c.l.b16 %v902
    %v934 = vunpack.c.l.b16 %v916
    %v935 = vpack.c.b16 %v920, %v919
    %v936 = vpack.c.b16 %v922, %v921
    %v937 = vpack.c.b16 %v924, %v923
    %v938 = vpack.c.b16 %v926, %v925
    %v939 = vpack.c.b16 %v928, %v927
    %v940 = vpack.c.b16 %v930, %v929
    %v941 = vpack.c.b16 %v932, %v931
    %v942 = vpack.c.b16 %v934, %v933
    %vm943 = vcmask 64512
    %v945 = vsel %vm943, %v935, 0
    %v948 = vsel %vm943, %v936, 0
    %v951 = vsel %vm943, %v937, 0
    %v954 = vsel %vm943, %v938, 0
    %v957 = vsel %vm943, %v939, 0
    %v960 = vsel %vm943, %v940, 0
    %v963 = vsel %vm943, %v941, 0
    %v966 = vsel %vm943, %v942, 0
    %vm968 = vcmask 1043456
    %v970 = vsel %vm968, %v918, 0
    %972 = vmatpush.bf16.msra.mxu0 0
    %973 = vmatpush.bf16.msra.mxu0 0
    %974 = vmatpush.bf16.msra.mxu0 0
    %975 = vmatpush.bf16.msra.mxu0 0
    %976 = vmatpush.bf16.msra.mxu0 0
    %977 = vmatpush.bf16.msra.mxu0 0
    %978 = vmatpush.bf16.msra.mxu0 0
    %979 = vmatpush.bf16.msra.mxu0 %v970
    %980 = vmatmul.bf16.gmra.mxu0 %v945
    %v981 = vpop.f32.mrf.mxu0
    %v982 = vadd.f32 0.0, %v981
    %v983 = vpop.f32.mrf.mxu0
    %v984 = vadd.f32 0.0, %v983
    %985 = vmatmul.bf16.gmra.mxu0 %v948
    %v986 = vpop.f32.mrf.mxu0
    %v987 = vadd.f32 0.0, %v986
    %v988 = vpop.f32.mrf.mxu0
    %v989 = vadd.f32 0.0, %v988
    %990 = vmatmul.bf16.gmra.mxu0 %v951
    %v991 = vpop.f32.mrf.mxu0
    %v992 = vadd.f32 0.0, %v991
    %v993 = vpop.f32.mrf.mxu0
    %v994 = vadd.f32 0.0, %v993
    %995 = vmatmul.bf16.gmra.mxu0 %v954
    %v996 = vpop.f32.mrf.mxu0
    %v997 = vadd.f32 0.0, %v996
    %v998 = vpop.f32.mrf.mxu0
    %v999 = vadd.f32 0.0, %v998
    %1000 = vmatmul.bf16.gmra.mxu0 %v957
    %v1001 = vpop.f32.mrf.mxu0
    %v1002 = vadd.f32 0.0, %v1001
    %v1003 = vpop.f32.mrf.mxu0
    %v1004 = vadd.f32 0.0, %v1003
    %1005 = vmatmul.bf16.gmra.mxu0 %v960
    %v1006 = vpop.f32.mrf.mxu0
    %v1007 = vadd.f32 0.0, %v1006
    %v1008 = vpop.f32.mrf.mxu0
    %v1009 = vadd.f32 0.0, %v1008
    %1010 = vmatmul.bf16.gmra.mxu0 %v963
    %v1011 = vpop.f32.mrf.mxu0
    %v1012 = vadd.f32 0.0, %v1011
    %v1013 = vpop.f32.mrf.mxu0
    %v1014 = vadd.f32 0.0, %v1013
    %1015 = vmatmul.bf16.gmra.mxu0 %v966
    %v1016 = vpop.f32.mrf.mxu0
    %v1017 = vadd.f32 0.0, %v1016
    %v1018 = vpop.f32.mrf.mxu0
    %v1019 = vadd.f32 0.0, %v1018
    %1020 = vdwg.mxu0
    %v1037 = vunpack.c.l.b16 %v657
    %v1038 = vunpack.c.l.b16 %v658
    %v1039 = vunpack.c.l.b16 %v659
    %v1040 = vunpack.c.l.b16 %v660
    %v1041 = vunpack.c.l.b16 %v661
    %v1042 = vunpack.c.l.b16 %v662
    %v1043 = vunpack.c.l.b16 %v663
    %v1044 = vunpack.c.l.b16 %v664
    %v1045 = vunpack.c.l.b16 %v665
    %v1046 = vunpack.c.l.b16 %v666
    %v1047 = vunpack.c.l.b16 %v667
    %v1048 = vunpack.c.l.b16 %v668
    %v1049 = vunpack.c.l.b16 %v669
    %v1050 = vunpack.c.l.b16 %v670
    %v1051 = vunpack.c.l.b16 %v671
    %v1052 = vunpack.c.l.b16 %v672
    %v1053 = vpack.c.b16 %v1038, %v1037
    %v1054 = vpack.c.b16 %v1040, %v1039
    %v1055 = vpack.c.b16 %v1042, %v1041
    %v1056 = vpack.c.b16 %v1044, %v1043
    %v1057 = vpack.c.b16 %v1046, %v1045
    %v1058 = vpack.c.b16 %v1048, %v1047
    %v1059 = vpack.c.b16 %v1050, %v1049
    %v1060 = vpack.c.b16 %v1052, %v1051
    %v1062 = vsel %vm943, %v1053, 0
    %v1065 = vsel %vm943, %v1054, 0
    %v1068 = vsel %vm943, %v1055, 0
    %v1071 = vsel %vm943, %v1056, 0
    %v1074 = vsel %vm943, %v1057, 0
    %v1077 = vsel %vm943, %v1058, 0
    %v1080 = vsel %vm943, %v1059, 0
    %v1083 = vsel %vm943, %v1060, 0
    %v1086 = vsel %vm968, %v673, 0
    %1088 = vmatpush.bf16.msra.mxu0 0
    %1089 = vmatpush.bf16.msra.mxu0 0
    %1090 = vmatpush.bf16.msra.mxu0 0
    %1091 = vmatpush.bf16.msra.mxu0 0
    %1092 = vmatpush.bf16.msra.mxu0 0
    %1093 = vmatpush.bf16.msra.mxu0 0
    %1094 = vmatpush.bf16.msra.mxu0 0
    %1095 = vmatpush.bf16.msra.mxu0 %v1086
    %1096 = vmatmul.bf16.gmra.mxu0 %v1062
    %v1097 = vpop.f32.mrf.mxu0
    %v1098 = vadd.f32 %v982, %v1097
    %v1099 = vpop.f32.mrf.mxu0
    %v1100 = vadd.f32 %v984, %v1099
    %1101 = vmatmul.bf16.gmra.mxu0 %v1065
    %v1102 = vpop.f32.mrf.mxu0
    %v1103 = vadd.f32 %v987, %v1102
    %v1104 = vpop.f32.mrf.mxu0
    %v1105 = vadd.f32 %v989, %v1104
    %1106 = vmatmul.bf16.gmra.mxu0 %v1068
    %v1107 = vpop.f32.mrf.mxu0
    %v1108 = vadd.f32 %v992, %v1107
    %v1109 = vpop.f32.mrf.mxu0
    %v1110 = vadd.f32 %v994, %v1109
    %1111 = vmatmul.bf16.gmra.mxu0 %v1071
    %v1112 = vpop.f32.mrf.mxu0
    %v1113 = vadd.f32 %v997, %v1112
    %v1114 = vpop.f32.mrf.mxu0
    %v1115 = vadd.f32 %v999, %v1114
    %1116 = vmatmul.bf16.gmra.mxu0 %v1074
    %v1117 = vpop.f32.mrf.mxu0
    %v1118 = vadd.f32 %v1002, %v1117
    %v1119 = vpop.f32.mrf.mxu0
    %v1120 = vadd.f32 %v1004, %v1119
    %1121 = vmatmul.bf16.gmra.mxu0 %v1077
    %v1122 = vpop.f32.mrf.mxu0
    %v1123 = vadd.f32 %v1007, %v1122
    %v1124 = vpop.f32.mrf.mxu0
    %v1125 = vadd.f32 %v1009, %v1124
    %1126 = vmatmul.bf16.gmra.mxu0 %v1080
    %v1127 = vpop.f32.mrf.mxu0
    %v1128 = vadd.f32 %v1012, %v1127
    %v1129 = vpop.f32.mrf.mxu0
    %v1130 = vadd.f32 %v1014, %v1129
    %1131 = vmatmul.bf16.gmra.mxu0 %v1083
    %v1132 = vpop.f32.mrf.mxu0
    %v1133 = vadd.f32 %v1017, %v1132
    %v1134 = vpop.f32.mrf.mxu0
    %v1135 = vadd.f32 %v1019, %v1134
    %1136 = vdwg.mxu0
    %v1137 = vld [vmem:[#allocation2] sm:$0xe]
    %v1138 = vld [vmem:[#allocation2 + $0x8] sm:$0xe]
    %v1139 = vld [vmem:[#allocation2 + $0x10] sm:$0xe]
    %v1140 = vld [vmem:[#allocation2 + $0x18] sm:$0xe]
    %v1141 = vld [vmem:[#allocation2 + $0x20] sm:$0xe]
    %v1142 = vld [vmem:[#allocation2 + $0x28] sm:$0xe]
    %v1143 = vld [vmem:[#allocation2 + $0x30] sm:$0xe]
    %v1144 = vld [vmem:[#allocation2 + $0x38] sm:$0xe]
    %v1145 = vld [vmem:[#allocation2 + $0x50] sm:$0xe]
    %v1146 = vld [vmem:[#allocation2 + $0x58] sm:$0xe]
    %v1147 = vld [vmem:[#allocation2 + $0x60] sm:$0xe]
    %v1148 = vld [vmem:[#allocation2 + $0x68] sm:$0xe]
    %v1149 = vld [vmem:[#allocation2 + $0x70] sm:$0xe]
    %v1150 = vld [vmem:[#allocation2 + $0x78] sm:$0xe]
    %v1151 = vld [vmem:[#allocation2 + $0x80] sm:$0xe]
    %v1152 = vld [vmem:[#allocation2 + $0x88] sm:$0xe]
    %vm1185 = vcmask 1042432
    %vm1186 = vcmask 1046532
    %vm1187 = vmor %vm1185, %vm1186
    %v1188 = vrot.slane %v1137, 5
    %v1189 = vrot.slane %v1188, 4
    %v1190 = vrot.slane %v674, 5
    %v1191 = vsel %vm1187, %v1189, %v1190
    %v1192 = vrot.slane %v1138, 5
    %v1193 = vrot.slane %v1192, 4
    %v1194 = vrot.slane %v675, 5
    %v1195 = vsel %vm1187, %v1193, %v1194
    %v1196 = vrot.slane %v1139, 5
    %v1197 = vrot.slane %v1196, 4
    %v1198 = vrot.slane %v676, 5
    %v1199 = vsel %vm1187, %v1197, %v1198
    %v1200 = vrot.slane %v1140, 5
    %v1201 = vrot.slane %v1200, 4
    %v1202 = vrot.slane %v677, 5
    %v1203 = vsel %vm1187, %v1201, %v1202
    %v1204 = vrot.slane %v1141, 5
    %v1205 = vrot.slane %v1204, 4
    %v1206 = vrot.slane %v678, 5
    %v1207 = vsel %vm1187, %v1205, %v1206
    %v1208 = vrot.slane %v1142, 5
    %v1209 = vrot.slane %v1208, 4
    %v1210 = vrot.slane %v679, 5
    %v1211 = vsel %vm1187, %v1209, %v1210
    %v1212 = vrot.slane %v1143, 5
    %v1213 = vrot.slane %v1212, 4
    %v1214 = vrot.slane %v680, 5
    %v1215 = vsel %vm1187, %v1213, %v1214
    %v1216 = vrot.slane %v1144, 5
    %v1217 = vrot.slane %v1216, 4
    %v1218 = vrot.slane %v681, 5
    %v1219 = vsel %vm1187, %v1217, %v1218
    %v1220 = vrot.slane %v1145, 5
    %v1221 = vrot.slane %v1220, 4
    %v1222 = vrot.slane %v682, 5
    %v1223 = vsel %vm1187, %v1221, %v1222
    %v1224 = vrot.slane %v1146, 5
    %v1225 = vrot.slane %v1224, 4
    %v1226 = vrot.slane %v683, 5
    %v1227 = vsel %vm1187, %v1225, %v1226
    %v1228 = vrot.slane %v1147, 5
    %v1229 = vrot.slane %v1228, 4
    %v1230 = vrot.slane %v684, 5
    %v1231 = vsel %vm1187, %v1229, %v1230
    %v1232 = vrot.slane %v1148, 5
    %v1233 = vrot.slane %v1232, 4
    %v1234 = vrot.slane %v685, 5
    %v1235 = vsel %vm1187, %v1233, %v1234
    %v1236 = vrot.slane %v1149, 5
    %v1237 = vrot.slane %v1236, 4
    %v1238 = vrot.slane %v686, 5
    %v1239 = vsel %vm1187, %v1237, %v1238
    %v1240 = vrot.slane %v1150, 5
    %v1241 = vrot.slane %v1240, 4
    %v1242 = vrot.slane %v687, 5
    %v1243 = vsel %vm1187, %v1241, %v1242
    %v1244 = vrot.slane %v1151, 5
    %v1245 = vrot.slane %v1244, 4
    %v1246 = vrot.slane %v688, 5
    %v1247 = vsel %vm1187, %v1245, %v1246
    %v1248 = vrot.slane %v1152, 5
    %v1249 = vrot.slane %v1248, 4
    %v1250 = vrot.slane %v689, 5
    %v1251 = vsel %vm1187, %v1249, %v1250
    %s1252 = scalar_lea.vmem %s1, 8
    %v1253 = vld [vmem:[%s1252] sm:$0xf]
    %v1254 = vunpack.c.l.b16 %v1191
    %v1255 = vunpack.c.l.b16 %v1195
    %v1256 = vunpack.c.l.b16 %v1199
    %v1257 = vunpack.c.l.b16 %v1203
    %v1258 = vunpack.c.l.b16 %v1207
    %v1259 = vunpack.c.l.b16 %v1211
    %v1260 = vunpack.c.l.b16 %v1215
    %v1261 = vunpack.c.l.b16 %v1219
    %v1262 = vunpack.c.l.b16 %v1223
    %v1263 = vunpack.c.l.b16 %v1227
    %v1264 = vunpack.c.l.b16 %v1231
    %v1265 = vunpack.c.l.b16 %v1235
    %v1266 = vunpack.c.l.b16 %v1239
    %v1267 = vunpack.c.l.b16 %v1243
    %v1268 = vunpack.c.l.b16 %v1247
    %v1269 = vunpack.c.l.b16 %v1251
    %v1270 = vpack.c.b16 %v1255, %v1254
    %v1271 = vpack.c.b16 %v1257, %v1256
    %v1272 = vpack.c.b16 %v1259, %v1258
    %v1273 = vpack.c.b16 %v1261, %v1260
    %v1274 = vpack.c.b16 %v1263, %v1262
    %v1275 = vpack.c.b16 %v1265, %v1264
    %v1276 = vpack.c.b16 %v1267, %v1266
    %v1277 = vpack.c.b16 %v1269, %v1268
    %v1279 = vsel %vm943, %v1270, 0
    %v1282 = vsel %vm943, %v1271, 0
    %v1285 = vsel %vm943, %v1272, 0
    %v1288 = vsel %vm943, %v1273, 0
    %v1291 = vsel %vm943, %v1274, 0
    %v1294 = vsel %vm943, %v1275, 0
    %v1297 = vsel %vm943, %v1276, 0
    %v1300 = vsel %vm943, %v1277, 0
    %v1303 = vsel %vm968, %v1253, 0
    %1305 = vmatpush.bf16.msra.mxu0 0
    %1306 = vmatpush.bf16.msra.mxu0 0
    %1307 = vmatpush.bf16.msra.mxu0 0
    %1308 = vmatpush.bf16.msra.mxu0 0
    %1309 = vmatpush.bf16.msra.mxu0 0
    %1310 = vmatpush.bf16.msra.mxu0 0
    %1311 = vmatpush.bf16.msra.mxu0 0
    %1312 = vmatpush.bf16.msra.mxu0 %v1303
    %1313 = vmatmul.bf16.gmra.mxu0 %v1279
    %v1314 = vpop.f32.mrf.mxu0
    %v1315 = vadd.f32 0.0, %v1314
    %v1316 = vpop.f32.mrf.mxu0
    %v1317 = vadd.f32 0.0, %v1316
    %1318 = vmatmul.bf16.gmra.mxu0 %v1282
    %v1319 = vpop.f32.mrf.mxu0
    %v1320 = vadd.f32 0.0, %v1319
    %v1321 = vpop.f32.mrf.mxu0
    %v1322 = vadd.f32 0.0, %v1321
    %1323 = vmatmul.bf16.gmra.mxu0 %v1285
    %v1324 = vpop.f32.mrf.mxu0
    %v1325 = vadd.f32 0.0, %v1324
    %v1326 = vpop.f32.mrf.mxu0
    %v1327 = vadd.f32 0.0, %v1326
    %1328 = vmatmul.bf16.gmra.mxu0 %v1288
    %v1329 = vpop.f32.mrf.mxu0
    %v1330 = vadd.f32 0.0, %v1329
    %v1331 = vpop.f32.mrf.mxu0
    %v1332 = vadd.f32 0.0, %v1331
    %1333 = vmatmul.bf16.gmra.mxu0 %v1291
    %v1334 = vpop.f32.mrf.mxu0
    %v1335 = vadd.f32 0.0, %v1334
    %v1336 = vpop.f32.mrf.mxu0
    %v1337 = vadd.f32 0.0, %v1336
    %1338 = vmatmul.bf16.gmra.mxu0 %v1294
    %v1339 = vpop.f32.mrf.mxu0
    %v1340 = vadd.f32 0.0, %v1339
    %v1341 = vpop.f32.mrf.mxu0
    %v1342 = vadd.f32 0.0, %v1341
    %1343 = vmatmul.bf16.gmra.mxu0 %v1297
    %v1344 = vpop.f32.mrf.mxu0
    %v1345 = vadd.f32 0.0, %v1344
    %v1346 = vpop.f32.mrf.mxu0
    %v1347 = vadd.f32 0.0, %v1346
    %1348 = vmatmul.bf16.gmra.mxu0 %v1300
    %v1349 = vpop.f32.mrf.mxu0
    %v1350 = vadd.f32 0.0, %v1349
    %v1351 = vpop.f32.mrf.mxu0
    %v1352 = vadd.f32 0.0, %v1351
    %1353 = vdwg.mxu0
    %v1354 = vadd.f32 %v1098, %v1315
    %v1355 = vadd.f32 %v1100, %v1317
    %v1356 = vadd.f32 %v1103, %v1320
    %v1357 = vadd.f32 %v1105, %v1322
    %v1358 = vadd.f32 %v1108, %v1325
    %v1359 = vadd.f32 %v1110, %v1327
    %v1360 = vadd.f32 %v1113, %v1330
    %v1361 = vadd.f32 %v1115, %v1332
    %v1362 = vadd.f32 %v1118, %v1335
    %v1363 = vadd.f32 %v1120, %v1337
    %v1364 = vadd.f32 %v1123, %v1340
    %v1365 = vadd.f32 %v1125, %v1342
    %v1366 = vadd.f32 %v1128, %v1345
    %v1367 = vadd.f32 %v1130, %v1347
    %v1368 = vadd.f32 %v1133, %v1350
    %v1369 = vadd.f32 %v1135, %v1352
    %v1370 = vld [vmem:[%s558] sm:$0xf]
    %v1371 = vld [vmem:[%s558 + $0x8] sm:$0xf]
    %v1372 = vld [vmem:[%s558 + $0x10] sm:$0xf]
    %v1373 = vld [vmem:[%s558 + $0x18] sm:$0xf]
    %v1374 = vld [vmem:[%s558 + $0x20] sm:$0xf]
    %v1375 = vld [vmem:[%s558 + $0x28] sm:$0xf]
    %v1376 = vld [vmem:[%s558 + $0x30] sm:$0xf]
    %v1377 = vld [vmem:[%s558 + $0x38] sm:$0xf]
    %v1378 = vld [vmem:[%s558 + $0x50] sm:$0xf]
    %v1379 = vld [vmem:[%s558 + $0x58] sm:$0xf]
    %v1380 = vld [vmem:[%s558 + $0x60] sm:$0xf]
    %v1381 = vld [vmem:[%s558 + $0x68] sm:$0xf]
    %v1382 = vld [vmem:[%s558 + $0x70] sm:$0xf]
    %v1383 = vld [vmem:[%s558 + $0x78] sm:$0xf]
    %v1384 = vld [vmem:[%s558 + $0x80] sm:$0xf]
    %v1385 = vld [vmem:[%s558 + $0x88] sm:$0xf]
    %s1386 = scalar_lea.vmem %s1, 12
    %v1387 = vld [vmem:[%s1386] sm:$0xf]
    %v1404 = vunpack.c.l.b16 %v1370
    %v1405 = vunpack.c.l.b16 %v1371
    %v1406 = vunpack.c.l.b16 %v1372
    %v1407 = vunpack.c.l.b16 %v1373
    %v1408 = vunpack.c.l.b16 %v1374
    %v1409 = vunpack.c.l.b16 %v1375
    %v1410 = vunpack.c.l.b16 %v1376
    %v1411 = vunpack.c.l.b16 %v1377
    %v1412 = vunpack.c.l.b16 %v1378
    %v1413 = vunpack.c.l.b16 %v1379
    %v1414 = vunpack.c.l.b16 %v1380
    %v1415 = vunpack.c.l.b16 %v1381
    %v1416 = vunpack.c.l.b16 %v1382
    %v1417 = vunpack.c.l.b16 %v1383
    %v1418 = vunpack.c.l.b16 %v1384
    %v1419 = vunpack.c.l.b16 %v1385
    %v1420 = vpack.c.b16 %v1405, %v1404
    %v1421 = vpack.c.b16 %v1407, %v1406
    %v1422 = vpack.c.b16 %v1409, %v1408
    %v1423 = vpack.c.b16 %v1411, %v1410
    %v1424 = vpack.c.b16 %v1413, %v1412
    %v1425 = vpack.c.b16 %v1415, %v1414
    %v1426 = vpack.c.b16 %v1417, %v1416
    %v1427 = vpack.c.b16 %v1419, %v1418
    %v1429 = vsel %vm943, %v1420, 0
    %v1432 = vsel %vm943, %v1421, 0
    %v1435 = vsel %vm943, %v1422, 0
    %v1438 = vsel %vm943, %v1423, 0
    %v1441 = vsel %vm943, %v1424, 0
    %v1444 = vsel %vm943, %v1425, 0
    %v1447 = vsel %vm943, %v1426, 0
    %v1450 = vsel %vm943, %v1427, 0
    %v1453 = vsel %vm968, %v1387, 0
    %1455 = vmatpush.bf16.msra.mxu0 0
    %1456 = vmatpush.bf16.msra.mxu0 0
    %1457 = vmatpush.bf16.msra.mxu0 0
    %1458 = vmatpush.bf16.msra.mxu0 0
    %1459 = vmatpush.bf16.msra.mxu0 0
    %1460 = vmatpush.bf16.msra.mxu0 0
    %1461 = vmatpush.bf16.msra.mxu0 0
    %1462 = vmatpush.bf16.msra.mxu0 %v1453
    %1463 = vmatmul.bf16.gmra.mxu0 %v1429
    %v1464 = vpop.f32.mrf.mxu0
    %v1465 = vadd.f32 0.0, %v1464
    %v1466 = vpop.f32.mrf.mxu0
    %v1467 = vadd.f32 0.0, %v1466
    %1468 = vmatmul.bf16.gmra.mxu0 %v1432
    %v1469 = vpop.f32.mrf.mxu0
    %v1470 = vadd.f32 0.0, %v1469
    %v1471 = vpop.f32.mrf.mxu0
    %v1472 = vadd.f32 0.0, %v1471
    %1473 = vmatmul.bf16.gmra.mxu0 %v1435
    %v1474 = vpop.f32.mrf.mxu0
    %v1475 = vadd.f32 0.0, %v1474
    %v1476 = vpop.f32.mrf.mxu0
    %v1477 = vadd.f32 0.0, %v1476
    %1478 = vmatmul.bf16.gmra.mxu0 %v1438
    %v1479 = vpop.f32.mrf.mxu0
    %v1480 = vadd.f32 0.0, %v1479
    %v1481 = vpop.f32.mrf.mxu0
    %v1482 = vadd.f32 0.0, %v1481
    %1483 = vmatmul.bf16.gmra.mxu0 %v1441
    %v1484 = vpop.f32.mrf.mxu0
    %v1485 = vadd.f32 0.0, %v1484
    %v1486 = vpop.f32.mrf.mxu0
    %v1487 = vadd.f32 0.0, %v1486
    %1488 = vmatmul.bf16.gmra.mxu0 %v1444
    %v1489 = vpop.f32.mrf.mxu0
    %v1490 = vadd.f32 0.0, %v1489
    %v1491 = vpop.f32.mrf.mxu0
    %v1492 = vadd.f32 0.0, %v1491
    %1493 = vmatmul.bf16.gmra.mxu0 %v1447
    %v1494 = vpop.f32.mrf.mxu0
    %v1495 = vadd.f32 0.0, %v1494
    %v1496 = vpop.f32.mrf.mxu0
    %v1497 = vadd.f32 0.0, %v1496
    %1498 = vmatmul.bf16.gmra.mxu0 %v1450
    %v1499 = vpop.f32.mrf.mxu0
    %v1500 = vadd.f32 0.0, %v1499
    %v1501 = vpop.f32.mrf.mxu0
    %v1502 = vadd.f32 0.0, %v1501
    %1503 = vdwg.mxu0
    %v1504 = vadd.f32 %v1354, %v1465
    %v1505 = vadd.f32 %v1355, %v1467
    %v1506 = vadd.f32 %v1356, %v1470
    %v1507 = vadd.f32 %v1357, %v1472
    %v1508 = vadd.f32 %v1358, %v1475
    %v1509 = vadd.f32 %v1359, %v1477
    %v1510 = vadd.f32 %v1360, %v1480
    %v1511 = vadd.f32 %v1361, %v1482
    %v1512 = vadd.f32 %v1362, %v1485
    %v1513 = vadd.f32 %v1363, %v1487
    %v1514 = vadd.f32 %v1364, %v1490
    %v1515 = vadd.f32 %v1365, %v1492
    %v1516 = vadd.f32 %v1366, %v1495
    %v1517 = vadd.f32 %v1367, %v1497
    %v1518 = vadd.f32 %v1368, %v1500
    %v1519 = vadd.f32 %v1369, %v1502
    %v1520 = vld [vmem:[%s558] sm:$0xf]
    %v1521 = vld [vmem:[%s558 + $0x4] sm:$0x1]
    %v1522 = vld [vmem:[%s558 + $0x8] sm:$0xf]
    %v1523 = vld [vmem:[%s558 + $0xc] sm:$0x1]
    %v1524 = vld [vmem:[%s558 + $0x10] sm:$0xf]
    %v1525 = vld [vmem:[%s558 + $0x14] sm:$0x1]
    %v1526 = vld [vmem:[%s558 + $0x18] sm:$0xf]
    %v1527 = vld [vmem:[%s558 + $0x1c] sm:$0x1]
    %v1528 = vld [vmem:[%s558 + $0x20] sm:$0xf]
    %v1529 = vld [vmem:[%s558 + $0x24] sm:$0x1]
    %v1530 = vld [vmem:[%s558 + $0x28] sm:$0xf]
    %v1531 = vld [vmem:[%s558 + $0x2c] sm:$0x1]
    %v1532 = vld [vmem:[%s558 + $0x30] sm:$0xf]
    %v1533 = vld [vmem:[%s558 + $0x34] sm:$0x1]
    %v1534 = vld [vmem:[%s558 + $0x38] sm:$0xf]
    %v1535 = vld [vmem:[%s558 + $0x3c] sm:$0x1]
    %v1536 = vld [vmem:[%s558 + $0x50] sm:$0xf]
    %v1537 = vld [vmem:[%s558 + $0x54] sm:$0x1]
    %v1538 = vld [vmem:[%s558 + $0x58] sm:$0xf]
    %v1539 = vld [vmem:[%s558 + $0x5c] sm:$0x1]
    %v1540 = vld [vmem:[%s558 + $0x60] sm:$0xf]
    %v1541 = vld [vmem:[%s558 + $0x64] sm:$0x1]
    %v1542 = vld [vmem:[%s558 + $0x68] sm:$0xf]
    %v1543 = vld [vmem:[%s558 + $0x6c] sm:$0x1]
    %v1544 = vld [vmem:[%s558 + $0x70] sm:$0xf]
    %v1545 = vld [vmem:[%s558 + $0x74] sm:$0x1]
    %v1546 = vld [vmem:[%s558 + $0x78] sm:$0xf]
    %v1547 = vld [vmem:[%s558 + $0x7c] sm:$0x1]
    %v1548 = vld [vmem:[%s558 + $0x80] sm:$0xf]
    %v1549 = vld [vmem:[%s558 + $0x84] sm:$0x1]
    %v1550 = vld [vmem:[%s558 + $0x88] sm:$0xf]
    %v1551 = vld [vmem:[%s558 + $0x8c] sm:$0x1]
    %v1553 = vshrl.u32 %v1520, 16
    %v1555 = vrot.slane %v1553, 4
    %v1556 = vshll.u32 %v1520, 16
    %v1558 = vrot.slane %v1556, 5
    %v1559 = vor.u32 %v1555, %v1558
    %v1560 = vrot.slane %v1559, 4
    %v1562 = vshll.u32 %v1521, 16
    %v1564 = vrot.slane %v1562, 5
    %v1565 = vsel %vm692, %v1560, %v1564
    %v1567 = vshrl.u32 %v1522, 16
    %v1569 = vrot.slane %v1567, 4
    %v1570 = vshll.u32 %v1522, 16
    %v1572 = vrot.slane %v1570, 5
    %v1573 = vor.u32 %v1569, %v1572
    %v1574 = vrot.slane %v1573, 4
    %v1576 = vshll.u32 %v1523, 16
    %v1578 = vrot.slane %v1576, 5
    %v1579 = vsel %vm692, %v1574, %v1578
    %v1581 = vshrl.u32 %v1524, 16
    %v1583 = vrot.slane %v1581, 4
    %v1584 = vshll.u32 %v1524, 16
    %v1586 = vrot.slane %v1584, 5
    %v1587 = vor.u32 %v1583, %v1586
    %v1588 = vrot.slane %v1587, 4
    %v1590 = vshll.u32 %v1525, 16
    %v1592 = vrot.slane %v1590, 5
    %v1593 = vsel %vm692, %v1588, %v1592
    %v1595 = vshrl.u32 %v1526, 16
    %v1597 = vrot.slane %v1595, 4
    %v1598 = vshll.u32 %v1526, 16
    %v1600 = vrot.slane %v1598, 5
    %v1601 = vor.u32 %v1597, %v1600
    %v1602 = vrot.slane %v1601, 4
    %v1604 = vshll.u32 %v1527, 16
    %v1606 = vrot.slane %v1604, 5
    %v1607 = vsel %vm692, %v1602, %v1606
    %v1609 = vshrl.u32 %v1528, 16
    %v1611 = vrot.slane %v1609, 4
    %v1612 = vshll.u32 %v1528, 16
    %v1614 = vrot.slane %v1612, 5
    %v1615 = vor.u32 %v1611, %v1614
    %v1616 = vrot.slane %v1615, 4
    %v1618 = vshll.u32 %v1529, 16
    %v1620 = vrot.slane %v1618, 5
    %v1621 = vsel %vm692, %v1616, %v1620
    %v1623 = vshrl.u32 %v1530, 16
    %v1625 = vrot.slane %v1623, 4
    %v1626 = vshll.u32 %v1530, 16
    %v1628 = vrot.slane %v1626, 5
    %v1629 = vor.u32 %v1625, %v1628
    %v1630 = vrot.slane %v1629, 4
    %v1632 = vshll.u32 %v1531, 16
    %v1634 = vrot.slane %v1632, 5
    %v1635 = vsel %vm692, %v1630, %v1634
    %v1637 = vshrl.u32 %v1532, 16
    %v1639 = vrot.slane %v1637, 4
    %v1640 = vshll.u32 %v1532, 16
    %v1642 = vrot.slane %v1640, 5
    %v1643 = vor.u32 %v1639, %v1642
    %v1644 = vrot.slane %v1643, 4
    %v1646 = vshll.u32 %v1533, 16
    %v1648 = vrot.slane %v1646, 5
    %v1649 = vsel %vm692, %v1644, %v1648
    %v1651 = vshrl.u32 %v1534, 16
    %v1653 = vrot.slane %v1651, 4
    %v1654 = vshll.u32 %v1534, 16
    %v1656 = vrot.slane %v1654, 5
    %v1657 = vor.u32 %v1653, %v1656
    %v1658 = vrot.slane %v1657, 4
    %v1660 = vshll.u32 %v1535, 16
    %v1662 = vrot.slane %v1660, 5
    %v1663 = vsel %vm692, %v1658, %v1662
    %v1665 = vshrl.u32 %v1536, 16
    %v1667 = vrot.slane %v1665, 4
    %v1668 = vshll.u32 %v1536, 16
    %v1670 = vrot.slane %v1668, 5
    %v1671 = vor.u32 %v1667, %v1670
    %v1672 = vrot.slane %v1671, 4
    %v1674 = vshll.u32 %v1537, 16
    %v1676 = vrot.slane %v1674, 5
    %v1677 = vsel %vm692, %v1672, %v1676
    %v1679 = vshrl.u32 %v1538, 16
    %v1681 = vrot.slane %v1679, 4
    %v1682 = vshll.u32 %v1538, 16
    %v1684 = vrot.slane %v1682, 5
    %v1685 = vor.u32 %v1681, %v1684
    %v1686 = vrot.slane %v1685, 4
    %v1688 = vshll.u32 %v1539, 16
    %v1690 = vrot.slane %v1688, 5
    %v1691 = vsel %vm692, %v1686, %v1690
    %v1693 = vshrl.u32 %v1540, 16
    %v1695 = vrot.slane %v1693, 4
    %v1696 = vshll.u32 %v1540, 16
    %v1698 = vrot.slane %v1696, 5
    %v1699 = vor.u32 %v1695, %v1698
    %v1700 = vrot.slane %v1699, 4
    %v1702 = vshll.u32 %v1541, 16
    %v1704 = vrot.slane %v1702, 5
    %v1705 = vsel %vm692, %v1700, %v1704
    %v1707 = vshrl.u32 %v1542, 16
    %v1709 = vrot.slane %v1707, 4
    %v1710 = vshll.u32 %v1542, 16
    %v1712 = vrot.slane %v1710, 5
    %v1713 = vor.u32 %v1709, %v1712
    %v1714 = vrot.slane %v1713, 4
    %v1716 = vshll.u32 %v1543, 16
    %v1718 = vrot.slane %v1716, 5
    %v1719 = vsel %vm692, %v1714, %v1718
    %v1721 = vshrl.u32 %v1544, 16
    %v1723 = vrot.slane %v1721, 4
    %v1724 = vshll.u32 %v1544, 16
    %v1726 = vrot.slane %v1724, 5
    %v1727 = vor.u32 %v1723, %v1726
    %v1728 = vrot.slane %v1727, 4
    %v1730 = vshll.u32 %v1545, 16
    %v1732 = vrot.slane %v1730, 5
    %v1733 = vsel %vm692, %v1728, %v1732
    %v1735 = vshrl.u32 %v1546, 16
    %v1737 = vrot.slane %v1735, 4
    %v1738 = vshll.u32 %v1546, 16
    %v1740 = vrot.slane %v1738, 5
    %v1741 = vor.u32 %v1737, %v1740
    %v1742 = vrot.slane %v1741, 4
    %v1744 = vshll.u32 %v1547, 16
    %v1746 = vrot.slane %v1744, 5
    %v1747 = vsel %vm692, %v1742, %v1746
    %v1749 = vshrl.u32 %v1548, 16
    %v1751 = vrot.slane %v1749, 4
    %v1752 = vshll.u32 %v1548, 16
    %v1754 = vrot.slane %v1752, 5
    %v1755 = vor.u32 %v1751, %v1754
    %v1756 = vrot.slane %v1755, 4
    %v1758 = vshll.u32 %v1549, 16
    %v1760 = vrot.slane %v1758, 5
    %v1761 = vsel %vm692, %v1756, %v1760
    %v1763 = vshrl.u32 %v1550, 16
    %v1765 = vrot.slane %v1763, 4
    %v1766 = vshll.u32 %v1550, 16
    %v1768 = vrot.slane %v1766, 5
    %v1769 = vor.u32 %v1765, %v1768
    %v1770 = vrot.slane %v1769, 4
    %v1772 = vshll.u32 %v1551, 16
    %v1774 = vrot.slane %v1772, 5
    %v1775 = vsel %vm692, %v1770, %v1774
    %s1776 = scalar_lea.vmem %s1, 16
    %v1777 = vld [vmem:[%s1776] sm:$0xf]
    %v1778 = vunpack.c.l.b16 %v1565
    %v1779 = vunpack.c.l.b16 %v1579
    %v1780 = vunpack.c.l.b16 %v1593
    %v1781 = vunpack.c.l.b16 %v1607
    %v1782 = vunpack.c.l.b16 %v1621
    %v1783 = vunpack.c.l.b16 %v1635
    %v1784 = vunpack.c.l.b16 %v1649
    %v1785 = vunpack.c.l.b16 %v1663
    %v1786 = vunpack.c.l.b16 %v1677
    %v1787 = vunpack.c.l.b16 %v1691
    %v1788 = vunpack.c.l.b16 %v1705
    %v1789 = vunpack.c.l.b16 %v1719
    %v1790 = vunpack.c.l.b16 %v1733
    %v1791 = vunpack.c.l.b16 %v1747
    %v1792 = vunpack.c.l.b16 %v1761
    %v1793 = vunpack.c.l.b16 %v1775
    %v1794 = vpack.c.b16 %v1779, %v1778
    %v1795 = vpack.c.b16 %v1781, %v1780
    %v1796 = vpack.c.b16 %v1783, %v1782
    %v1797 = vpack.c.b16 %v1785, %v1784
    %v1798 = vpack.c.b16 %v1787, %v1786
    %v1799 = vpack.c.b16 %v1789, %v1788
    %v1800 = vpack.c.b16 %v1791, %v1790
    %v1801 = vpack.c.b16 %v1793, %v1792
    %v1803 = vsel %vm943, %v1794, 0
    %v1806 = vsel %vm943, %v1795, 0
    %v1809 = vsel %vm943, %v1796, 0
    %v1812 = vsel %vm943, %v1797, 0
    %v1815 = vsel %vm943, %v1798, 0
    %v1818 = vsel %vm943, %v1799, 0
    %v1821 = vsel %vm943, %v1800, 0
    %v1824 = vsel %vm943, %v1801, 0
    %v1827 = vsel %vm968, %v1777, 0
    %1829 = vmatpush.bf16.msra.mxu0 0
    %1830 = vmatpush.bf16.msra.mxu0 0
    %1831 = vmatpush.bf16.msra.mxu0 0
    %1832 = vmatpush.bf16.msra.mxu0 0
    %1833 = vmatpush.bf16.msra.mxu0 0
    %1834 = vmatpush.bf16.msra.mxu0 0
    %1835 = vmatpush.bf16.msra.mxu0 0
    %1836 = vmatpush.bf16.msra.mxu0 %v1827
    %1837 = vmatmul.bf16.gmra.mxu0 %v1803
    %v1838 = vpop.f32.mrf.mxu0
    %v1839 = vadd.f32 0.0, %v1838
    %v1840 = vpop.f32.mrf.mxu0
    %v1841 = vadd.f32 0.0, %v1840
    %1842 = vmatmul.bf16.gmra.mxu0 %v1806
    %v1843 = vpop.f32.mrf.mxu0
    %v1844 = vadd.f32 0.0, %v1843
    %v1845 = vpop.f32.mrf.mxu0
    %v1846 = vadd.f32 0.0, %v1845
    %1847 = vmatmul.bf16.gmra.mxu0 %v1809
    %v1848 = vpop.f32.mrf.mxu0
    %v1849 = vadd.f32 0.0, %v1848
    %v1850 = vpop.f32.mrf.mxu0
    %v1851 = vadd.f32 0.0, %v1850
    %1852 = vmatmul.bf16.gmra.mxu0 %v1812
    %v1853 = vpop.f32.mrf.mxu0
    %v1854 = vadd.f32 0.0, %v1853
    %v1855 = vpop.f32.mrf.mxu0
    %v1856 = vadd.f32 0.0, %v1855
    %1857 = vmatmul.bf16.gmra.mxu0 %v1815
    %v1858 = vpop.f32.mrf.mxu0
    %v1859 = vadd.f32 0.0, %v1858
    %v1860 = vpop.f32.mrf.mxu0
    %v1861 = vadd.f32 0.0, %v1860
    %1862 = vmatmul.bf16.gmra.mxu0 %v1818
    %v1863 = vpop.f32.mrf.mxu0
    %v1864 = vadd.f32 0.0, %v1863
    %v1865 = vpop.f32.mrf.mxu0
    %v1866 = vadd.f32 0.0, %v1865
    %1867 = vmatmul.bf16.gmra.mxu0 %v1821
    %v1868 = vpop.f32.mrf.mxu0
    %v1869 = vadd.f32 0.0, %v1868
    %v1870 = vpop.f32.mrf.mxu0
    %v1871 = vadd.f32 0.0, %v1870
    %1872 = vmatmul.bf16.gmra.mxu0 %v1824
    %v1873 = vpop.f32.mrf.mxu0
    %v1874 = vadd.f32 0.0, %v1873
    %v1875 = vpop.f32.mrf.mxu0
    %v1876 = vadd.f32 0.0, %v1875
    %1877 = vdwg.mxu0
    %v1878 = vadd.f32 %v1504, %v1839
    %v1879 = vadd.f32 %v1505, %v1841
    %v1880 = vadd.f32 %v1506, %v1844
    %v1881 = vadd.f32 %v1507, %v1846
    %v1882 = vadd.f32 %v1508, %v1849
    %v1883 = vadd.f32 %v1509, %v1851
    %v1884 = vadd.f32 %v1510, %v1854
    %v1885 = vadd.f32 %v1511, %v1856
    %v1886 = vadd.f32 %v1512, %v1859
    %v1887 = vadd.f32 %v1513, %v1861
    %v1888 = vadd.f32 %v1514, %v1864
    %v1889 = vadd.f32 %v1515, %v1866
    %v1890 = vadd.f32 %v1516, %v1869
    %v1891 = vadd.f32 %v1517, %v1871
    %v1892 = vadd.f32 %v1518, %v1874
    %v1893 = vadd.f32 %v1519, %v1876
    %v1894 = vld [vmem:[%s558] sm:$0xe]
    %v1895 = vld [vmem:[%s558 + $0x8] sm:$0xe]
    %v1896 = vld [vmem:[%s558 + $0x10] sm:$0xe]
    %v1897 = vld [vmem:[%s558 + $0x18] sm:$0xe]
    %v1898 = vld [vmem:[%s558 + $0x20] sm:$0xe]
    %v1899 = vld [vmem:[%s558 + $0x28] sm:$0xe]
    %v1900 = vld [vmem:[%s558 + $0x30] sm:$0xe]
    %v1901 = vld [vmem:[%s558 + $0x38] sm:$0xe]
    %v1902 = vld [vmem:[%s558 + $0x50] sm:$0xe]
    %v1903 = vld [vmem:[%s558 + $0x58] sm:$0xe]
    %v1904 = vld [vmem:[%s558 + $0x60] sm:$0xe]
    %v1905 = vld [vmem:[%s558 + $0x68] sm:$0xe]
    %v1906 = vld [vmem:[%s558 + $0x70] sm:$0xe]
    %v1907 = vld [vmem:[%s558 + $0x78] sm:$0xe]
    %v1908 = vld [vmem:[%s558 + $0x80] sm:$0xe]
    %v1909 = vld [vmem:[%s558 + $0x88] sm:$0xe]
    %v1942 = vrot.slane %v1894, 5
    %v1943 = vrot.slane %v1942, 4
    %v1944 = vrot.slane %v1521, 5
    %v1945 = vsel %vm1187, %v1943, %v1944
    %v1946 = vrot.slane %v1895, 5
    %v1947 = vrot.slane %v1946, 4
    %v1948 = vrot.slane %v1523, 5
    %v1949 = vsel %vm1187, %v1947, %v1948
    %v1950 = vrot.slane %v1896, 5
    %v1951 = vrot.slane %v1950, 4
    %v1952 = vrot.slane %v1525, 5
    %v1953 = vsel %vm1187, %v1951, %v1952
    %v1954 = vrot.slane %v1897, 5
    %v1955 = vrot.slane %v1954, 4
    %v1956 = vrot.slane %v1527, 5
    %v1957 = vsel %vm1187, %v1955, %v1956
    %v1958 = vrot.slane %v1898, 5
    %v1959 = vrot.slane %v1958, 4
    %v1960 = vrot.slane %v1529, 5
    %v1961 = vsel %vm1187, %v1959, %v1960
    %v1962 = vrot.slane %v1899, 5
    %v1963 = vrot.slane %v1962, 4
    %v1964 = vrot.slane %v1531, 5
    %v1965 = vsel %vm1187, %v1963, %v1964
    %v1966 = vrot.slane %v1900, 5
    %v1967 = vrot.slane %v1966, 4
    %v1968 = vrot.slane %v1533, 5
    %v1969 = vsel %vm1187, %v1967, %v1968
    %v1970 = vrot.slane %v1901, 5
    %v1971 = vrot.slane %v1970, 4
    %v1972 = vrot.slane %v1535, 5
    %v1973 = vsel %vm1187, %v1971, %v1972
    %v1974 = vrot.slane %v1902, 5
    %v1975 = vrot.slane %v1974, 4
    %v1976 = vrot.slane %v1537, 5
    %v1977 = vsel %vm1187, %v1975, %v1976
    %v1978 = vrot.slane %v1903, 5
    %v1979 = vrot.slane %v1978, 4
    %v1980 = vrot.slane %v1539, 5
    %v1981 = vsel %vm1187, %v1979, %v1980
    %v1982 = vrot.slane %v1904, 5
    %v1983 = vrot.slane %v1982, 4
    %v1984 = vrot.slane %v1541, 5
    %v1985 = vsel %vm1187, %v1983, %v1984
    %v1986 = vrot.slane %v1905, 5
    %v1987 = vrot.slane %v1986, 4
    %v1988 = vrot.slane %v1543, 5
    %v1989 = vsel %vm1187, %v1987, %v1988
    %v1990 = vrot.slane %v1906, 5
    %v1991 = vrot.slane %v1990, 4
    %v1992 = vrot.slane %v1545, 5
    %v1993 = vsel %vm1187, %v1991, %v1992
    %v1994 = vrot.slane %v1907, 5
    %v1995 = vrot.slane %v1994, 4
    %v1996 = vrot.slane %v1547, 5
    %v1997 = vsel %vm1187, %v1995, %v1996
    %v1998 = vrot.slane %v1908, 5
    %v1999 = vrot.slane %v1998, 4
    %v2000 = vrot.slane %v1549, 5
    %v2001 = vsel %vm1187, %v1999, %v2000
    %v2002 = vrot.slane %v1909, 5
    %v2003 = vrot.slane %v2002, 4
    %v2004 = vrot.slane %v1551, 5
    %v2005 = vsel %vm1187, %v2003, %v2004
    %s2006 = scalar_lea.vmem %s1, 20
    %v2007 = vld [vmem:[%s2006] sm:$0xf]
    %v2008 = vunpack.c.l.b16 %v1945
    %v2009 = vunpack.c.l.b16 %v1949
    %v2010 = vunpack.c.l.b16 %v1953
    %v2011 = vunpack.c.l.b16 %v1957
    %v2012 = vunpack.c.l.b16 %v1961
    %v2013 = vunpack.c.l.b16 %v1965
    %v2014 = vunpack.c.l.b16 %v1969
    %v2015 = vunpack.c.l.b16 %v1973
    %v2016 = vunpack.c.l.b16 %v1977
    %v2017 = vunpack.c.l.b16 %v1981
    %v2018 = vunpack.c.l.b16 %v1985
    %v2019 = vunpack.c.l.b16 %v1989
    %v2020 = vunpack.c.l.b16 %v1993
    %v2021 = vunpack.c.l.b16 %v1997
    %v2022 = vunpack.c.l.b16 %v2001
    %v2023 = vunpack.c.l.b16 %v2005
    %v2024 = vpack.c.b16 %v2009, %v2008
    %v2025 = vpack.c.b16 %v2011, %v2010
    %v2026 = vpack.c.b16 %v2013, %v2012
    %v2027 = vpack.c.b16 %v2015, %v2014
    %v2028 = vpack.c.b16 %v2017, %v2016
    %v2029 = vpack.c.b16 %v2019, %v2018
    %v2030 = vpack.c.b16 %v2021, %v2020
    %v2031 = vpack.c.b16 %v2023, %v2022
    %v2033 = vsel %vm943, %v2024, 0
    %v2036 = vsel %vm943, %v2025, 0
    %v2039 = vsel %vm943, %v2026, 0
    %v2042 = vsel %vm943, %v2027, 0
    %v2045 = vsel %vm943, %v2028, 0
    %v2048 = vsel %vm943, %v2029, 0
    %v2051 = vsel %vm943, %v2030, 0
    %v2054 = vsel %vm943, %v2031, 0
    %v2057 = vsel %vm968, %v2007, 0
    %2059 = vmatpush.bf16.msra.mxu0 0
    %2060 = vmatpush.bf16.msra.mxu0 0
    %2061 = vmatpush.bf16.msra.mxu0 0
    %2062 = vmatpush.bf16.msra.mxu0 0
    %2063 = vmatpush.bf16.msra.mxu0 0
    %2064 = vmatpush.bf16.msra.mxu0 0
    %2065 = vmatpush.bf16.msra.mxu0 0
    %2066 = vmatpush.bf16.msra.mxu0 %v2057
    %2067 = vmatmul.bf16.gmra.mxu0 %v2033
    %v2068 = vpop.f32.mrf.mxu0
    %v2069 = vadd.f32 0.0, %v2068
    %v2070 = vpop.f32.mrf.mxu0
    %v2071 = vadd.f32 0.0, %v2070
    %2072 = vmatmul.bf16.gmra.mxu0 %v2036
    %v2073 = vpop.f32.mrf.mxu0
    %v2074 = vadd.f32 0.0, %v2073
    %v2075 = vpop.f32.mrf.mxu0
    %v2076 = vadd.f32 0.0, %v2075
    %2077 = vmatmul.bf16.gmra.mxu0 %v2039
    %v2078 = vpop.f32.mrf.mxu0
    %v2079 = vadd.f32 0.0, %v2078
    %v2080 = vpop.f32.mrf.mxu0
    %v2081 = vadd.f32 0.0, %v2080
    %2082 = vmatmul.bf16.gmra.mxu0 %v2042
    %v2083 = vpop.f32.mrf.mxu0
    %v2084 = vadd.f32 0.0, %v2083
    %v2085 = vpop.f32.mrf.mxu0
    %v2086 = vadd.f32 0.0, %v2085
    %2087 = vmatmul.bf16.gmra.mxu0 %v2045
    %v2088 = vpop.f32.mrf.mxu0
    %v2089 = vadd.f32 0.0, %v2088
    %v2090 = vpop.f32.mrf.mxu0
    %v2091 = vadd.f32 0.0, %v2090
    %2092 = vmatmul.bf16.gmra.mxu0 %v2048
    %v2093 = vpop.f32.mrf.mxu0
    %v2094 = vadd.f32 0.0, %v2093
    %v2095 = vpop.f32.mrf.mxu0
    %v2096 = vadd.f32 0.0, %v2095
    %2097 = vmatmul.bf16.gmra.mxu0 %v2051
    %v2098 = vpop.f32.mrf.mxu0
    %v2099 = vadd.f32 0.0, %v2098
    %v2100 = vpop.f32.mrf.mxu0
    %v2101 = vadd.f32 0.0, %v2100
    %2102 = vmatmul.bf16.gmra.mxu0 %v2054
    %v2103 = vpop.f32.mrf.mxu0
    %v2104 = vadd.f32 0.0, %v2103
    %v2105 = vpop.f32.mrf.mxu0
    %v2106 = vadd.f32 0.0, %v2105
    %2107 = vdwg.mxu0
    %v2108 = vadd.f32 %v1878, %v2069
    %v2109 = vadd.f32 %v1879, %v2071
    %v2110 = vadd.f32 %v1880, %v2074
    %v2111 = vadd.f32 %v1881, %v2076
    %v2112 = vadd.f32 %v1882, %v2079
    %v2113 = vadd.f32 %v1883, %v2081
    %v2114 = vadd.f32 %v1884, %v2084
    %v2115 = vadd.f32 %v1885, %v2086
    %v2116 = vadd.f32 %v1886, %v2089
    %v2117 = vadd.f32 %v1887, %v2091
    %v2118 = vadd.f32 %v1888, %v2094
    %v2119 = vadd.f32 %v1889, %v2096
    %v2120 = vadd.f32 %v1890, %v2099
    %v2121 = vadd.f32 %v1891, %v2101
    %v2122 = vadd.f32 %v1892, %v2104
    %v2123 = vadd.f32 %v1893, %v2106
    %s2124 = scalar_lea.vmem [#allocation2], 16
    %v2125 = vld [vmem:[%s2124] sm:$0xf]
    %v2126 = vld [vmem:[%s2124 + $0x8] sm:$0xf]
    %v2127 = vld [vmem:[%s2124 + $0x10] sm:$0xf]
    %v2128 = vld [vmem:[%s2124 + $0x18] sm:$0xf]
    %v2129 = vld [vmem:[%s2124 + $0x20] sm:$0xf]
    %v2130 = vld [vmem:[%s2124 + $0x28] sm:$0xf]
    %v2131 = vld [vmem:[%s2124 + $0x30] sm:$0xf]
    %v2132 = vld [vmem:[%s2124 + $0x38] sm:$0xf]
    %v2133 = vld [vmem:[%s2124 + $0x50] sm:$0xf]
    %v2134 = vld [vmem:[%s2124 + $0x58] sm:$0xf]
    %v2135 = vld [vmem:[%s2124 + $0x60] sm:$0xf]
    %v2136 = vld [vmem:[%s2124 + $0x68] sm:$0xf]
    %v2137 = vld [vmem:[%s2124 + $0x70] sm:$0xf]
    %v2138 = vld [vmem:[%s2124 + $0x78] sm:$0xf]
    %v2139 = vld [vmem:[%s2124 + $0x80] sm:$0xf]
    %v2140 = vld [vmem:[%s2124 + $0x88] sm:$0xf]
    %s2141 = scalar_lea.vmem %s1, 24
    %v2142 = vld [vmem:[%s2141] sm:$0xf]
    %v2159 = vunpack.c.l.b16 %v2125
    %v2160 = vunpack.c.l.b16 %v2126
    %v2161 = vunpack.c.l.b16 %v2127
    %v2162 = vunpack.c.l.b16 %v2128
    %v2163 = vunpack.c.l.b16 %v2129
    %v2164 = vunpack.c.l.b16 %v2130
    %v2165 = vunpack.c.l.b16 %v2131
    %v2166 = vunpack.c.l.b16 %v2132
    %v2167 = vunpack.c.l.b16 %v2133
    %v2168 = vunpack.c.l.b16 %v2134
    %v2169 = vunpack.c.l.b16 %v2135
    %v2170 = vunpack.c.l.b16 %v2136
    %v2171 = vunpack.c.l.b16 %v2137
    %v2172 = vunpack.c.l.b16 %v2138
    %v2173 = vunpack.c.l.b16 %v2139
    %v2174 = vunpack.c.l.b16 %v2140
    %v2175 = vpack.c.b16 %v2160, %v2159
    %v2176 = vpack.c.b16 %v2162, %v2161
    %v2177 = vpack.c.b16 %v2164, %v2163
    %v2178 = vpack.c.b16 %v2166, %v2165
    %v2179 = vpack.c.b16 %v2168, %v2167
    %v2180 = vpack.c.b16 %v2170, %v2169
    %v2181 = vpack.c.b16 %v2172, %v2171
    %v2182 = vpack.c.b16 %v2174, %v2173
    %v2184 = vsel %vm943, %v2175, 0
    %v2187 = vsel %vm943, %v2176, 0
    %v2190 = vsel %vm943, %v2177, 0
    %v2193 = vsel %vm943, %v2178, 0
    %v2196 = vsel %vm943, %v2179, 0
    %v2199 = vsel %vm943, %v2180, 0
    %v2202 = vsel %vm943, %v2181, 0
    %v2205 = vsel %vm943, %v2182, 0
    %v2208 = vsel %vm968, %v2142, 0
    %2210 = vmatpush.bf16.msra.mxu0 0
    %2211 = vmatpush.bf16.msra.mxu0 0
    %2212 = vmatpush.bf16.msra.mxu0 0
    %2213 = vmatpush.bf16.msra.mxu0 0
    %2214 = vmatpush.bf16.msra.mxu0 0
    %2215 = vmatpush.bf16.msra.mxu0 0
    %2216 = vmatpush.bf16.msra.mxu0 0
    %2217 = vmatpush.bf16.msra.mxu0 %v2208
    %2218 = vmatmul.bf16.gmra.mxu0 %v2184
    %v2219 = vpop.f32.mrf.mxu0
    %v2220 = vadd.f32 0.0, %v2219
    %v2221 = vpop.f32.mrf.mxu0
    %v2222 = vadd.f32 0.0, %v2221
    %2223 = vmatmul.bf16.gmra.mxu0 %v2187
    %v2224 = vpop.f32.mrf.mxu0
    %v2225 = vadd.f32 0.0, %v2224
    %v2226 = vpop.f32.mrf.mxu0
    %v2227 = vadd.f32 0.0, %v2226
    %2228 = vmatmul.bf16.gmra.mxu0 %v2190
    %v2229 = vpop.f32.mrf.mxu0
    %v2230 = vadd.f32 0.0, %v2229
    %v2231 = vpop.f32.mrf.mxu0
    %v2232 = vadd.f32 0.0, %v2231
    %2233 = vmatmul.bf16.gmra.mxu0 %v2193
    %v2234 = vpop.f32.mrf.mxu0
    %v2235 = vadd.f32 0.0, %v2234
    %v2236 = vpop.f32.mrf.mxu0
    %v2237 = vadd.f32 0.0, %v2236
    %2238 = vmatmul.bf16.gmra.mxu0 %v2196
    %v2239 = vpop.f32.mrf.mxu0
    %v2240 = vadd.f32 0.0, %v2239
    %v2241 = vpop.f32.mrf.mxu0
    %v2242 = vadd.f32 0.0, %v2241
    %2243 = vmatmul.bf16.gmra.mxu0 %v2199
    %v2244 = vpop.f32.mrf.mxu0
    %v2245 = vadd.f32 0.0, %v2244
    %v2246 = vpop.f32.mrf.mxu0
    %v2247 = vadd.f32 0.0, %v2246
    %2248 = vmatmul.bf16.gmra.mxu0 %v2202
    %v2249 = vpop.f32.mrf.mxu0
    %v2250 = vadd.f32 0.0, %v2249
    %v2251 = vpop.f32.mrf.mxu0
    %v2252 = vadd.f32 0.0, %v2251
    %2253 = vmatmul.bf16.gmra.mxu0 %v2205
    %v2254 = vpop.f32.mrf.mxu0
    %v2255 = vadd.f32 0.0, %v2254
    %v2256 = vpop.f32.mrf.mxu0
    %v2257 = vadd.f32 0.0, %v2256
    %2258 = vdwg.mxu0
    %v2259 = vadd.f32 %v2108, %v2220
    %v2260 = vadd.f32 %v2109, %v2222
    %v2261 = vadd.f32 %v2110, %v2225
    %v2262 = vadd.f32 %v2111, %v2227
    %v2263 = vadd.f32 %v2112, %v2230
    %v2264 = vadd.f32 %v2113, %v2232
    %v2265 = vadd.f32 %v2114, %v2235
    %v2266 = vadd.f32 %v2115, %v2237
    %v2267 = vadd.f32 %v2116, %v2240
    %v2268 = vadd.f32 %v2117, %v2242
    %v2269 = vadd.f32 %v2118, %v2245
    %v2270 = vadd.f32 %v2119, %v2247
    %v2271 = vadd.f32 %v2120, %v2250
    %v2272 = vadd.f32 %v2121, %v2252
    %v2273 = vadd.f32 %v2122, %v2255
    %v2274 = vadd.f32 %v2123, %v2257
    %v2275 = vld [vmem:[%s2124] sm:$0xf]
    %v2276 = vld [vmem:[%s2124 + $0x4] sm:$0x1]
    %v2277 = vld [vmem:[%s2124 + $0x8] sm:$0xf]
    %v2278 = vld [vmem:[%s2124 + $0xc] sm:$0x1]
    %v2279 = vld [vmem:[%s2124 + $0x10] sm:$0xf]
    %v2280 = vld [vmem:[%s2124 + $0x14] sm:$0x1]
    %v2281 = vld [vmem:[%s2124 + $0x18] sm:$0xf]
    %v2282 = vld [vmem:[%s2124 + $0x1c] sm:$0x1]
    %v2283 = vld [vmem:[%s2124 + $0x20] sm:$0xf]
    %v2284 = vld [vmem:[%s2124 + $0x24] sm:$0x1]
    %v2285 = vld [vmem:[%s2124 + $0x28] sm:$0xf]
    %v2286 = vld [vmem:[%s2124 + $0x2c] sm:$0x1]
    %v2287 = vld [vmem:[%s2124 + $0x30] sm:$0xf]
    %v2288 = vld [vmem:[%s2124 + $0x34] sm:$0x1]
    %v2289 = vld [vmem:[%s2124 + $0x38] sm:$0xf]
    %v2290 = vld [vmem:[%s2124 + $0x3c] sm:$0x1]
    %v2291 = vld [vmem:[%s2124 + $0x50] sm:$0xf]
    %v2292 = vld [vmem:[%s2124 + $0x54] sm:$0x1]
    %v2293 = vld [vmem:[%s2124 + $0x58] sm:$0xf]
    %v2294 = vld [vmem:[%s2124 + $0x5c] sm:$0x1]
    %v2295 = vld [vmem:[%s2124 + $0x60] sm:$0xf]
    %v2296 = vld [vmem:[%s2124 + $0x64] sm:$0x1]
    %v2297 = vld [vmem:[%s2124 + $0x68] sm:$0xf]
    %v2298 = vld [vmem:[%s2124 + $0x6c] sm:$0x1]
    %v2299 = vld [vmem:[%s2124 + $0x70] sm:$0xf]
    %v2300 = vld [vmem:[%s2124 + $0x74] sm:$0x1]
    %v2301 = vld [vmem:[%s2124 + $0x78] sm:$0xf]
    %v2302 = vld [vmem:[%s2124 + $0x7c] sm:$0x1]
    %v2303 = vld [vmem:[%s2124 + $0x80] sm:$0xf]
    %v2304 = vld [vmem:[%s2124 + $0x84] sm:$0x1]
    %v2305 = vld [vmem:[%s2124 + $0x88] sm:$0xf]
    %v2306 = vld [vmem:[%s2124 + $0x8c] sm:$0x1]
    %v2308 = vshrl.u32 %v2275, 16
    %v2310 = vrot.slane %v2308, 4
    %v2311 = vshll.u32 %v2275, 16
    %v2313 = vrot.slane %v2311, 5
    %v2314 = vor.u32 %v2310, %v2313
    %v2315 = vrot.slane %v2314, 4
    %v2317 = vshll.u32 %v2276, 16
    %v2319 = vrot.slane %v2317, 5
    %v2320 = vsel %vm692, %v2315, %v2319
    %v2322 = vshrl.u32 %v2277, 16
    %v2324 = vrot.slane %v2322, 4
    %v2325 = vshll.u32 %v2277, 16
    %v2327 = vrot.slane %v2325, 5
    %v2328 = vor.u32 %v2324, %v2327
    %v2329 = vrot.slane %v2328, 4
    %v2331 = vshll.u32 %v2278, 16
    %v2333 = vrot.slane %v2331, 5
    %v2334 = vsel %vm692, %v2329, %v2333
    %v2336 = vshrl.u32 %v2279, 16
    %v2338 = vrot.slane %v2336, 4
    %v2339 = vshll.u32 %v2279, 16
    %v2341 = vrot.slane %v2339, 5
    %v2342 = vor.u32 %v2338, %v2341
    %v2343 = vrot.slane %v2342, 4
    %v2345 = vshll.u32 %v2280, 16
    %v2347 = vrot.slane %v2345, 5
    %v2348 = vsel %vm692, %v2343, %v2347
    %v2350 = vshrl.u32 %v2281, 16
    %v2352 = vrot.slane %v2350, 4
    %v2353 = vshll.u32 %v2281, 16
    %v2355 = vrot.slane %v2353, 5
    %v2356 = vor.u32 %v2352, %v2355
    %v2357 = vrot.slane %v2356, 4
    %v2359 = vshll.u32 %v2282, 16
    %v2361 = vrot.slane %v2359, 5
    %v2362 = vsel %vm692, %v2357, %v2361
    %v2364 = vshrl.u32 %v2283, 16
    %v2366 = vrot.slane %v2364, 4
    %v2367 = vshll.u32 %v2283, 16
    %v2369 = vrot.slane %v2367, 5
    %v2370 = vor.u32 %v2366, %v2369
    %v2371 = vrot.slane %v2370, 4
    %v2373 = vshll.u32 %v2284, 16
    %v2375 = vrot.slane %v2373, 5
    %v2376 = vsel %vm692, %v2371, %v2375
    %v2378 = vshrl.u32 %v2285, 16
    %v2380 = vrot.slane %v2378, 4
    %v2381 = vshll.u32 %v2285, 16
    %v2383 = vrot.slane %v2381, 5
    %v2384 = vor.u32 %v2380, %v2383
    %v2385 = vrot.slane %v2384, 4
    %v2387 = vshll.u32 %v2286, 16
    %v2389 = vrot.slane %v2387, 5
    %v2390 = vsel %vm692, %v2385, %v2389
    %v2392 = vshrl.u32 %v2287, 16
    %v2394 = vrot.slane %v2392, 4
    %v2395 = vshll.u32 %v2287, 16
    %v2397 = vrot.slane %v2395, 5
    %v2398 = vor.u32 %v2394, %v2397
    %v2399 = vrot.slane %v2398, 4
    %v2401 = vshll.u32 %v2288, 16
    %v2403 = vrot.slane %v2401, 5
    %v2404 = vsel %vm692, %v2399, %v2403
    %v2406 = vshrl.u32 %v2289, 16
    %v2408 = vrot.slane %v2406, 4
    %v2409 = vshll.u32 %v2289, 16
    %v2411 = vrot.slane %v2409, 5
    %v2412 = vor.u32 %v2408, %v2411
    %v2413 = vrot.slane %v2412, 4
    %v2415 = vshll.u32 %v2290, 16
    %v2417 = vrot.slane %v2415, 5
    %v2418 = vsel %vm692, %v2413, %v2417
    %v2420 = vshrl.u32 %v2291, 16
    %v2422 = vrot.slane %v2420, 4
    %v2423 = vshll.u32 %v2291, 16
    %v2425 = vrot.slane %v2423, 5
    %v2426 = vor.u32 %v2422, %v2425
    %v2427 = vrot.slane %v2426, 4
    %v2429 = vshll.u32 %v2292, 16
    %v2431 = vrot.slane %v2429, 5
    %v2432 = vsel %vm692, %v2427, %v2431
    %v2434 = vshrl.u32 %v2293, 16
    %v2436 = vrot.slane %v2434, 4
    %v2437 = vshll.u32 %v2293, 16
    %v2439 = vrot.slane %v2437, 5
    %v2440 = vor.u32 %v2436, %v2439
    %v2441 = vrot.slane %v2440, 4
    %v2443 = vshll.u32 %v2294, 16
    %v2445 = vrot.slane %v2443, 5
    %v2446 = vsel %vm692, %v2441, %v2445
    %v2448 = vshrl.u32 %v2295, 16
    %v2450 = vrot.slane %v2448, 4
    %v2451 = vshll.u32 %v2295, 16
    %v2453 = vrot.slane %v2451, 5
    %v2454 = vor.u32 %v2450, %v2453
    %v2455 = vrot.slane %v2454, 4
    %v2457 = vshll.u32 %v2296, 16
    %v2459 = vrot.slane %v2457, 5
    %v2460 = vsel %vm692, %v2455, %v2459
    %v2462 = vshrl.u32 %v2297, 16
    %v2464 = vrot.slane %v2462, 4
    %v2465 = vshll.u32 %v2297, 16
    %v2467 = vrot.slane %v2465, 5
    %v2468 = vor.u32 %v2464, %v2467
    %v2469 = vrot.slane %v2468, 4
    %v2471 = vshll.u32 %v2298, 16
    %v2473 = vrot.slane %v2471, 5
    %v2474 = vsel %vm692, %v2469, %v2473
    %v2476 = vshrl.u32 %v2299, 16
    %v2478 = vrot.slane %v2476, 4
    %v2479 = vshll.u32 %v2299, 16
    %v2481 = vrot.slane %v2479, 5
    %v2482 = vor.u32 %v2478, %v2481
    %v2483 = vrot.slane %v2482, 4
    %v2485 = vshll.u32 %v2300, 16
    %v2487 = vrot.slane %v2485, 5
    %v2488 = vsel %vm692, %v2483, %v2487
    %v2490 = vshrl.u32 %v2301, 16
    %v2492 = vrot.slane %v2490, 4
    %v2493 = vshll.u32 %v2301, 16
    %v2495 = vrot.slane %v2493, 5
    %v2496 = vor.u32 %v2492, %v2495
    %v2497 = vrot.slane %v2496, 4
    %v2499 = vshll.u32 %v2302, 16
    %v2501 = vrot.slane %v2499, 5
    %v2502 = vsel %vm692, %v2497, %v2501
    %v2504 = vshrl.u32 %v2303, 16
    %v2506 = vrot.slane %v2504, 4
    %v2507 = vshll.u32 %v2303, 16
    %v2509 = vrot.slane %v2507, 5
    %v2510 = vor.u32 %v2506, %v2509
    %v2511 = vrot.slane %v2510, 4
    %v2513 = vshll.u32 %v2304, 16
    %v2515 = vrot.slane %v2513, 5
    %v2516 = vsel %vm692, %v2511, %v2515
    %v2518 = vshrl.u32 %v2305, 16
    %v2520 = vrot.slane %v2518, 4
    %v2521 = vshll.u32 %v2305, 16
    %v2523 = vrot.slane %v2521, 5
    %v2524 = vor.u32 %v2520, %v2523
    %v2525 = vrot.slane %v2524, 4
    %v2527 = vshll.u32 %v2306, 16
    %v2529 = vrot.slane %v2527, 5
    %v2530 = vsel %vm692, %v2525, %v2529
    %s2531 = scalar_lea.vmem %s1, 28
    %v2532 = vld [vmem:[%s2531] sm:$0xf]
    %v2533 = vunpack.c.l.b16 %v2320
    %v2534 = vunpack.c.l.b16 %v2334
    %v2535 = vunpack.c.l.b16 %v2348
    %v2536 = vunpack.c.l.b16 %v2362
    %v2537 = vunpack.c.l.b16 %v2376
    %v2538 = vunpack.c.l.b16 %v2390
    %v2539 = vunpack.c.l.b16 %v2404
    %v2540 = vunpack.c.l.b16 %v2418
    %v2541 = vunpack.c.l.b16 %v2432
    %v2542 = vunpack.c.l.b16 %v2446
    %v2543 = vunpack.c.l.b16 %v2460
    %v2544 = vunpack.c.l.b16 %v2474
    %v2545 = vunpack.c.l.b16 %v2488
    %v2546 = vunpack.c.l.b16 %v2502
    %v2547 = vunpack.c.l.b16 %v2516
    %v2548 = vunpack.c.l.b16 %v2530
    %v2549 = vpack.c.b16 %v2534, %v2533
    %v2550 = vpack.c.b16 %v2536, %v2535
    %v2551 = vpack.c.b16 %v2538, %v2537
    %v2552 = vpack.c.b16 %v2540, %v2539
    %v2553 = vpack.c.b16 %v2542, %v2541
    %v2554 = vpack.c.b16 %v2544, %v2543
    %v2555 = vpack.c.b16 %v2546, %v2545
    %v2556 = vpack.c.b16 %v2548, %v2547
    %v2558 = vsel %vm943, %v2549, 0
    %v2561 = vsel %vm943, %v2550, 0
    %v2564 = vsel %vm943, %v2551, 0
    %v2567 = vsel %vm943, %v2552, 0
    %v2570 = vsel %vm943, %v2553, 0
    %v2573 = vsel %vm943, %v2554, 0
    %v2576 = vsel %vm943, %v2555, 0
    %v2579 = vsel %vm943, %v2556, 0
    %v2582 = vsel %vm968, %v2532, 0
    %2584 = vmatpush.bf16.msra.mxu0 0
    %2585 = vmatpush.bf16.msra.mxu0 0
    %2586 = vmatpush.bf16.msra.mxu0 0
    %2587 = vmatpush.bf16.msra.mxu0 0
    %2588 = vmatpush.bf16.msra.mxu0 0
    %2589 = vmatpush.bf16.msra.mxu0 0
    %2590 = vmatpush.bf16.msra.mxu0 0
    %2591 = vmatpush.bf16.msra.mxu0 %v2582
    %2592 = vmatmul.bf16.gmra.mxu0 %v2558
    %v2593 = vpop.f32.mrf.mxu0
    %v2594 = vadd.f32 0.0, %v2593
    %v2595 = vpop.f32.mrf.mxu0
    %v2596 = vadd.f32 0.0, %v2595
    %2597 = vmatmul.bf16.gmra.mxu0 %v2561
    %v2598 = vpop.f32.mrf.mxu0
    %v2599 = vadd.f32 0.0, %v2598
    %v2600 = vpop.f32.mrf.mxu0
    %v2601 = vadd.f32 0.0, %v2600
    %2602 = vmatmul.bf16.gmra.mxu0 %v2564
    %v2603 = vpop.f32.mrf.mxu0
    %v2604 = vadd.f32 0.0, %v2603
    %v2605 = vpop.f32.mrf.mxu0
    %v2606 = vadd.f32 0.0, %v2605
    %2607 = vmatmul.bf16.gmra.mxu0 %v2567
    %v2608 = vpop.f32.mrf.mxu0
    %v2609 = vadd.f32 0.0, %v2608
    %v2610 = vpop.f32.mrf.mxu0
    %v2611 = vadd.f32 0.0, %v2610
    %2612 = vmatmul.bf16.gmra.mxu0 %v2570
    %v2613 = vpop.f32.mrf.mxu0
    %v2614 = vadd.f32 0.0, %v2613
    %v2615 = vpop.f32.mrf.mxu0
    %v2616 = vadd.f32 0.0, %v2615
    %2617 = vmatmul.bf16.gmra.mxu0 %v2573
    %v2618 = vpop.f32.mrf.mxu0
    %v2619 = vadd.f32 0.0, %v2618
    %v2620 = vpop.f32.mrf.mxu0
    %v2621 = vadd.f32 0.0, %v2620
    %2622 = vmatmul.bf16.gmra.mxu0 %v2576
    %v2623 = vpop.f32.mrf.mxu0
    %v2624 = vadd.f32 0.0, %v2623
    %v2625 = vpop.f32.mrf.mxu0
    %v2626 = vadd.f32 0.0, %v2625
    %2627 = vmatmul.bf16.gmra.mxu0 %v2579
    %v2628 = vpop.f32.mrf.mxu0
    %v2629 = vadd.f32 0.0, %v2628
    %v2630 = vpop.f32.mrf.mxu0
    %v2631 = vadd.f32 0.0, %v2630
    %2632 = vdwg.mxu0
    %v2633 = vadd.f32 %v2259, %v2594
    %v2634 = vadd.f32 %v2260, %v2596
    %v2635 = vadd.f32 %v2261, %v2599
    %v2636 = vadd.f32 %v2262, %v2601
    %v2637 = vadd.f32 %v2263, %v2604
    %v2638 = vadd.f32 %v2264, %v2606
    %v2639 = vadd.f32 %v2265, %v2609
    %v2640 = vadd.f32 %v2266, %v2611
    %v2641 = vadd.f32 %v2267, %v2614
    %v2642 = vadd.f32 %v2268, %v2616
    %v2643 = vadd.f32 %v2269, %v2619
    %v2644 = vadd.f32 %v2270, %v2621
    %v2645 = vadd.f32 %v2271, %v2624
    %v2646 = vadd.f32 %v2272, %v2626
    %v2647 = vadd.f32 %v2273, %v2629
    %v2648 = vadd.f32 %v2274, %v2631
    %v2649 = vld [vmem:[%s2124] sm:$0xe]
    %v2650 = vld [vmem:[%s2124 + $0x8] sm:$0xe]
    %v2651 = vld [vmem:[%s2124 + $0x10] sm:$0xe]
    %v2652 = vld [vmem:[%s2124 + $0x18] sm:$0xe]
    %v2653 = vld [vmem:[%s2124 + $0x20] sm:$0xe]
    %v2654 = vld [vmem:[%s2124 + $0x28] sm:$0xe]
    %v2655 = vld [vmem:[%s2124 + $0x30] sm:$0xe]
    %v2656 = vld [vmem:[%s2124 + $0x38] sm:$0xe]
    %v2657 = vld [vmem:[%s2124 + $0x50] sm:$0xe]
    %v2658 = vld [vmem:[%s2124 + $0x58] sm:$0xe]
    %v2659 = vld [vmem:[%s2124 + $0x60] sm:$0xe]
    %v2660 = vld [vmem:[%s2124 + $0x68] sm:$0xe]
    %v2661 = vld [vmem:[%s2124 + $0x70] sm:$0xe]
    %v2662 = vld [vmem:[%s2124 + $0x78] sm:$0xe]
    %v2663 = vld [vmem:[%s2124 + $0x80] sm:$0xe]
    %v2664 = vld [vmem:[%s2124 + $0x88] sm:$0xe]
    %v2697 = vrot.slane %v2649, 5
    %v2698 = vrot.slane %v2697, 4
    %v2699 = vrot.slane %v2276, 5
    %v2700 = vsel %vm1187, %v2698, %v2699
    %v2701 = vrot.slane %v2650, 5
    %v2702 = vrot.slane %v2701, 4
    %v2703 = vrot.slane %v2278, 5
    %v2704 = vsel %vm1187, %v2702, %v2703
    %v2705 = vrot.slane %v2651, 5
    %v2706 = vrot.slane %v2705, 4
    %v2707 = vrot.slane %v2280, 5
    %v2708 = vsel %vm1187, %v2706, %v2707
    %v2709 = vrot.slane %v2652, 5
    %v2710 = vrot.slane %v2709, 4
    %v2711 = vrot.slane %v2282, 5
    %v2712 = vsel %vm1187, %v2710, %v2711
    %v2713 = vrot.slane %v2653, 5
    %v2714 = vrot.slane %v2713, 4
    %v2715 = vrot.slane %v2284, 5
    %v2716 = vsel %vm1187, %v2714, %v2715
    %v2717 = vrot.slane %v2654, 5
    %v2718 = vrot.slane %v2717, 4
    %v2719 = vrot.slane %v2286, 5
    %v2720 = vsel %vm1187, %v2718, %v2719
    %v2721 = vrot.slane %v2655, 5
    %v2722 = vrot.slane %v2721, 4
    %v2723 = vrot.slane %v2288, 5
    %v2724 = vsel %vm1187, %v2722, %v2723
    %v2725 = vrot.slane %v2656, 5
    %v2726 = vrot.slane %v2725, 4
    %v2727 = vrot.slane %v2290, 5
    %v2728 = vsel %vm1187, %v2726, %v2727
    %v2729 = vrot.slane %v2657, 5
    %v2730 = vrot.slane %v2729, 4
    %v2731 = vrot.slane %v2292, 5
    %v2732 = vsel %vm1187, %v2730, %v2731
    %v2733 = vrot.slane %v2658, 5
    %v2734 = vrot.slane %v2733, 4
    %v2735 = vrot.slane %v2294, 5
    %v2736 = vsel %vm1187, %v2734, %v2735
    %v2737 = vrot.slane %v2659, 5
    %v2738 = vrot.slane %v2737, 4
    %v2739 = vrot.slane %v2296, 5
    %v2740 = vsel %vm1187, %v2738, %v2739
    %v2741 = vrot.slane %v2660, 5
    %v2742 = vrot.slane %v2741, 4
    %v2743 = vrot.slane %v2298, 5
    %v2744 = vsel %vm1187, %v2742, %v2743
    %v2745 = vrot.slane %v2661, 5
    %v2746 = vrot.slane %v2745, 4
    %v2747 = vrot.slane %v2300, 5
    %v2748 = vsel %vm1187, %v2746, %v2747
    %v2749 = vrot.slane %v2662, 5
    %v2750 = vrot.slane %v2749, 4
    %v2751 = vrot.slane %v2302, 5
    %v2752 = vsel %vm1187, %v2750, %v2751
    %v2753 = vrot.slane %v2663, 5
    %v2754 = vrot.slane %v2753, 4
    %v2755 = vrot.slane %v2304, 5
    %v2756 = vsel %vm1187, %v2754, %v2755
    %v2757 = vrot.slane %v2664, 5
    %v2758 = vrot.slane %v2757, 4
    %v2759 = vrot.slane %v2306, 5
    %v2760 = vsel %vm1187, %v2758, %v2759
    %s2761 = scalar_lea.vmem %s1, 32
    %v2762 = vld [vmem:[%s2761] sm:$0xf]
    %v2763 = vunpack.c.l.b16 %v2700
    %v2764 = vunpack.c.l.b16 %v2704
    %v2765 = vunpack.c.l.b16 %v2708
    %v2766 = vunpack.c.l.b16 %v2712
    %v2767 = vunpack.c.l.b16 %v2716
    %v2768 = vunpack.c.l.b16 %v2720
    %v2769 = vunpack.c.l.b16 %v2724
    %v2770 = vunpack.c.l.b16 %v2728
    %v2771 = vunpack.c.l.b16 %v2732
    %v2772 = vunpack.c.l.b16 %v2736
    %v2773 = vunpack.c.l.b16 %v2740
    %v2774 = vunpack.c.l.b16 %v2744
    %v2775 = vunpack.c.l.b16 %v2748
    %v2776 = vunpack.c.l.b16 %v2752
    %v2777 = vunpack.c.l.b16 %v2756
    %v2778 = vunpack.c.l.b16 %v2760
    %v2779 = vpack.c.b16 %v2764, %v2763
    %v2780 = vpack.c.b16 %v2766, %v2765
    %v2781 = vpack.c.b16 %v2768, %v2767
    %v2782 = vpack.c.b16 %v2770, %v2769
    %v2783 = vpack.c.b16 %v2772, %v2771
    %v2784 = vpack.c.b16 %v2774, %v2773
    %v2785 = vpack.c.b16 %v2776, %v2775
    %v2786 = vpack.c.b16 %v2778, %v2777
    %v2788 = vsel %vm943, %v2779, 0
    %v2791 = vsel %vm943, %v2780, 0
    %v2794 = vsel %vm943, %v2781, 0
    %v2797 = vsel %vm943, %v2782, 0
    %v2800 = vsel %vm943, %v2783, 0
    %v2803 = vsel %vm943, %v2784, 0
    %v2806 = vsel %vm943, %v2785, 0
    %v2809 = vsel %vm943, %v2786, 0
    %v2812 = vsel %vm968, %v2762, 0
    %2814 = vmatpush.bf16.msra.mxu0 0
    %2815 = vmatpush.bf16.msra.mxu0 0
    %2816 = vmatpush.bf16.msra.mxu0 0
    %2817 = vmatpush.bf16.msra.mxu0 0
    %2818 = vmatpush.bf16.msra.mxu0 0
    %2819 = vmatpush.bf16.msra.mxu0 0
    %2820 = vmatpush.bf16.msra.mxu0 0
    %2821 = vmatpush.bf16.msra.mxu0 %v2812
    %2822 = vmatmul.bf16.gmra.mxu0 %v2788
    %v2823 = vpop.f32.mrf.mxu0
    %v2824 = vadd.f32 0.0, %v2823
    %v2825 = vpop.f32.mrf.mxu0
    %v2826 = vadd.f32 0.0, %v2825
    %2827 = vmatmul.bf16.gmra.mxu0 %v2791
    %v2828 = vpop.f32.mrf.mxu0
    %v2829 = vadd.f32 0.0, %v2828
    %v2830 = vpop.f32.mrf.mxu0
    %v2831 = vadd.f32 0.0, %v2830
    %2832 = vmatmul.bf16.gmra.mxu0 %v2794
    %v2833 = vpop.f32.mrf.mxu0
    %v2834 = vadd.f32 0.0, %v2833
    %v2835 = vpop.f32.mrf.mxu0
    %v2836 = vadd.f32 0.0, %v2835
    %2837 = vmatmul.bf16.gmra.mxu0 %v2797
    %v2838 = vpop.f32.mrf.mxu0
    %v2839 = vadd.f32 0.0, %v2838
    %v2840 = vpop.f32.mrf.mxu0
    %v2841 = vadd.f32 0.0, %v2840
    %2842 = vmatmul.bf16.gmra.mxu0 %v2800
    %v2843 = vpop.f32.mrf.mxu0
    %v2844 = vadd.f32 0.0, %v2843
    %v2845 = vpop.f32.mrf.mxu0
    %v2846 = vadd.f32 0.0, %v2845
    %2847 = vmatmul.bf16.gmra.mxu0 %v2803
    %v2848 = vpop.f32.mrf.mxu0
    %v2849 = vadd.f32 0.0, %v2848
    %v2850 = vpop.f32.mrf.mxu0
    %v2851 = vadd.f32 0.0, %v2850
    %2852 = vmatmul.bf16.gmra.mxu0 %v2806
    %v2853 = vpop.f32.mrf.mxu0
    %v2854 = vadd.f32 0.0, %v2853
    %v2855 = vpop.f32.mrf.mxu0
    %v2856 = vadd.f32 0.0, %v2855
    %2857 = vmatmul.bf16.gmra.mxu0 %v2809
    %v2858 = vpop.f32.mrf.mxu0
    %v2859 = vadd.f32 0.0, %v2858
    %v2860 = vpop.f32.mrf.mxu0
    %v2861 = vadd.f32 0.0, %v2860
    %2862 = vdwg.mxu0
    %v2863 = vadd.f32 %v2633, %v2824
    %v2864 = vadd.f32 %v2634, %v2826
    %v2865 = vadd.f32 %v2635, %v2829
    %v2866 = vadd.f32 %v2636, %v2831
    %v2867 = vadd.f32 %v2637, %v2834
    %v2868 = vadd.f32 %v2638, %v2836
    %v2869 = vadd.f32 %v2639, %v2839
    %v2870 = vadd.f32 %v2640, %v2841
    %v2871 = vadd.f32 %v2641, %v2844
    %v2872 = vadd.f32 %v2642, %v2846
    %v2873 = vadd.f32 %v2643, %v2849
    %v2874 = vadd.f32 %v2644, %v2851
    %v2875 = vadd.f32 %v2645, %v2854
    %v2876 = vadd.f32 %v2646, %v2856
    %v2877 = vadd.f32 %v2647, %v2859
    %v2878 = vadd.f32 %v2648, %v2861
    %v2879 = vld [vmem:[%s2] sm:$0x1]
    %v2881 = vperm.slane %v2879, 0
    %v2883 = vadd.f32 %v2863, %v2881
    %v2884 = vadd.f32 %v2864, %v2881
    %v2885 = vadd.f32 %v2865, %v2881
    %v2886 = vadd.f32 %v2866, %v2881
    %v2887 = vadd.f32 %v2867, %v2881
    %v2888 = vadd.f32 %v2868, %v2881
    %v2889 = vadd.f32 %v2869, %v2881
    %v2890 = vadd.f32 %v2870, %v2881
    %v2891 = vadd.f32 %v2871, %v2881
    %v2892 = vadd.f32 %v2872, %v2881
    %v2893 = vadd.f32 %v2873, %v2881
    %v2894 = vadd.f32 %v2874, %v2881
    %v2895 = vadd.f32 %v2875, %v2881
    %v2896 = vadd.f32 %v2876, %v2881
    %v2897 = vadd.f32 %v2877, %v2881
    %v2898 = vadd.f32 %v2878, %v2881
    %v2899 = vmax.f32 %v2883, 0.0
    %v2900 = vmax.f32 %v2884, 0.0
    %v2901 = vmax.f32 %v2885, 0.0
    %v2902 = vmax.f32 %v2886, 0.0
    %v2903 = vmax.f32 %v2887, 0.0
    %v2904 = vmax.f32 %v2888, 0.0
    %v2905 = vmax.f32 %v2889, 0.0
    %v2906 = vmax.f32 %v2890, 0.0
    %v2907 = vmax.f32 %v2891, 0.0
    %v2908 = vmax.f32 %v2892, 0.0
    %v2909 = vmax.f32 %v2893, 0.0
    %v2910 = vmax.f32 %v2894, 0.0
    %v2911 = vmax.f32 %v2895, 0.0
    %v2912 = vmax.f32 %v2896, 0.0
    %v2913 = vmax.f32 %v2897, 0.0
    %v2914 = vmax.f32 %v2898, 0.0
    %2915 = vst.msk [vmem:[#allocation3] sm:$0xf] %vm246, 0
    %2916 = vst.msk [vmem:[#allocation3 + $0x4] sm:$0x1] %vm248, 0
    %2917 = vst.msk [vmem:[#allocation3 + $0x50] sm:$0xf] %vm246, 0
    %2918 = vst.msk [vmem:[#allocation3 + $0x54] sm:$0x1] %vm248, 0
    %s2919 = scalar_lea.vmem [#allocation3], 72
    %2920 = vst.msk [vmem:[%s2919] sm:$0xf] %vm246, 0
    %2921 = vst.msk [vmem:[%s2919 + $0x4] sm:$0x1] %vm248, 0
    %2922 = vst.msk [vmem:[%s2919 + $0x50] sm:$0xf] %vm246, 0
    %2923 = vst.msk [vmem:[%s2919 + $0x54] sm:$0x1] %vm248, 0
    %v2924 = vld [vmem:[#allocation3] sm:$0x1]
    %v2925 = vsel %vm259, 0, %v2924
    %2926 = vst [vmem:[#allocation3] sm:$0x1] %v2925
    %v2927 = vld [vmem:[#allocation3 + $0x8] sm:$0x1]
    %v2928 = vsel %vm259, 0, %v2927
    %2929 = vst [vmem:[#allocation3 + $0x8] sm:$0x1] %v2928
    %v2930 = vld [vmem:[#allocation3 + $0x10] sm:$0x1]
    %v2931 = vsel %vm259, 0, %v2930
    %2932 = vst [vmem:[#allocation3 + $0x10] sm:$0x1] %v2931
    %v2933 = vld [vmem:[#allocation3 + $0x18] sm:$0x1]
    %v2934 = vsel %vm259, 0, %v2933
    %2935 = vst [vmem:[#allocation3 + $0x18] sm:$0x1] %v2934
    %v2936 = vld [vmem:[#allocation3 + $0x20] sm:$0x1]
    %v2937 = vsel %vm259, 0, %v2936
    %2938 = vst [vmem:[#allocation3 + $0x20] sm:$0x1] %v2937
    %v2939 = vld [vmem:[#allocation3 + $0x28] sm:$0x1]
    %v2940 = vsel %vm259, 0, %v2939
    %2941 = vst [vmem:[#allocation3 + $0x28] sm:$0x1] %v2940
    %v2942 = vld [vmem:[#allocation3 + $0x30] sm:$0x1]
    %v2943 = vsel %vm259, 0, %v2942
    %2944 = vst [vmem:[#allocation3 + $0x30] sm:$0x1] %v2943
    %v2945 = vld [vmem:[#allocation3 + $0x38] sm:$0x1]
    %v2946 = vsel %vm259, 0, %v2945
    %2947 = vst [vmem:[#allocation3 + $0x38] sm:$0x1] %v2946
    %v2948 = vld [vmem:[#allocation3 + $0x40] sm:$0x1]
    %v2949 = vsel %vm259, 0, %v2948
    %2950 = vst [vmem:[#allocation3 + $0x40] sm:$0x1] %v2949
    %v2951 = vld [vmem:[#allocation3 + $0x48] sm:$0x1]
    %v2952 = vsel %vm259, 0, %v2951
    %2953 = vst [vmem:[#allocation3 + $0x48] sm:$0x1] %v2952
    %v2954 = vld [vmem:[#allocation3 + $0x50] sm:$0x1]
    %v2955 = vsel %vm259, 0, %v2954
    %2956 = vst [vmem:[#allocation3 + $0x50] sm:$0x1] %v2955
    %v2957 = vld [vmem:[#allocation3 + $0x58] sm:$0x1]
    %v2958 = vsel %vm259, 0, %v2957
    %2959 = vst [vmem:[#allocation3 + $0x58] sm:$0x1] %v2958
    %v2960 = vld [vmem:[#allocation3 + $0x60] sm:$0x1]
    %v2961 = vsel %vm259, 0, %v2960
    %2962 = vst [vmem:[#allocation3 + $0x60] sm:$0x1] %v2961
    %v2963 = vld [vmem:[#allocation3 + $0x68] sm:$0x1]
    %v2964 = vsel %vm259, 0, %v2963
    %2965 = vst [vmem:[#allocation3 + $0x68] sm:$0x1] %v2964
    %v2966 = vld [vmem:[#allocation3 + $0x70] sm:$0x1]
    %v2967 = vsel %vm259, 0, %v2966
    %2968 = vst [vmem:[#allocation3 + $0x70] sm:$0x1] %v2967
    %v2969 = vld [vmem:[#allocation3 + $0x78] sm:$0x1]
    %v2970 = vsel %vm259, 0, %v2969
    %2971 = vst [vmem:[#allocation3 + $0x78] sm:$0x1] %v2970
    %v2972 = vld [vmem:[#allocation3 + $0x80] sm:$0x1]
    %v2973 = vsel %vm259, 0, %v2972
    %2974 = vst [vmem:[#allocation3 + $0x80] sm:$0x1] %v2973
    %v2975 = vld [vmem:[#allocation3 + $0x88] sm:$0x1]
    %v2976 = vsel %vm259, 0, %v2975
    %2977 = vst [vmem:[#allocation3 + $0x88] sm:$0x1] %v2976
    %v2978 = vld [vmem:[#allocation3 + $0x90] sm:$0x1]
    %v2979 = vsel %vm259, 0, %v2978
    %2980 = vst [vmem:[#allocation3 + $0x90] sm:$0x1] %v2979
    %v2981 = vld [vmem:[#allocation3 + $0x98] sm:$0x1]
    %v2982 = vsel %vm259, 0, %v2981
    %2983 = vst [vmem:[#allocation3 + $0x98] sm:$0x1] %v2982
    %v2984 = vld [vmem:[#allocation3 + $0x4] sm:$0x1]
    %v2985 = vsel %vm321, 0, %v2984
    %2986 = vst [vmem:[#allocation3 + $0x4] sm:$0x1] %v2985
    %v2987 = vld [vmem:[#allocation3 + $0xc] sm:$0x1]
    %v2988 = vsel %vm321, 0, %v2987
    %2989 = vst [vmem:[#allocation3 + $0xc] sm:$0x1] %v2988
    %v2990 = vld [vmem:[#allocation3 + $0x14] sm:$0x1]
    %v2991 = vsel %vm321, 0, %v2990
    %2992 = vst [vmem:[#allocation3 + $0x14] sm:$0x1] %v2991
    %v2993 = vld [vmem:[#allocation3 + $0x1c] sm:$0x1]
    %v2994 = vsel %vm321, 0, %v2993
    %2995 = vst [vmem:[#allocation3 + $0x1c] sm:$0x1] %v2994
    %v2996 = vld [vmem:[#allocation3 + $0x24] sm:$0x1]
    %v2997 = vsel %vm321, 0, %v2996
    %2998 = vst [vmem:[#allocation3 + $0x24] sm:$0x1] %v2997
    %v2999 = vld [vmem:[#allocation3 + $0x2c] sm:$0x1]
    %v3000 = vsel %vm321, 0, %v2999
    %3001 = vst [vmem:[#allocation3 + $0x2c] sm:$0x1] %v3000
    %v3002 = vld [vmem:[#allocation3 + $0x34] sm:$0x1]
    %v3003 = vsel %vm321, 0, %v3002
    %3004 = vst [vmem:[#allocation3 + $0x34] sm:$0x1] %v3003
    %v3005 = vld [vmem:[#allocation3 + $0x3c] sm:$0x1]
    %v3006 = vsel %vm321, 0, %v3005
    %3007 = vst [vmem:[#allocation3 + $0x3c] sm:$0x1] %v3006
    %v3008 = vld [vmem:[#allocation3 + $0x44] sm:$0x1]
    %v3009 = vsel %vm321, 0, %v3008
    %3010 = vst [vmem:[#allocation3 + $0x44] sm:$0x1] %v3009
    %v3011 = vld [vmem:[#allocation3 + $0x4c] sm:$0x1]
    %v3012 = vsel %vm321, 0, %v3011
    %3013 = vst [vmem:[#allocation3 + $0x4c] sm:$0x1] %v3012
    %v3014 = vld [vmem:[#allocation3 + $0x54] sm:$0x1]
    %v3015 = vsel %vm321, 0, %v3014
    %3016 = vst [vmem:[#allocation3 + $0x54] sm:$0x1] %v3015
    %v3017 = vld [vmem:[#allocation3 + $0x5c] sm:$0x1]
    %v3018 = vsel %vm321, 0, %v3017
    %3019 = vst [vmem:[#allocation3 + $0x5c] sm:$0x1] %v3018
    %v3020 = vld [vmem:[#allocation3 + $0x64] sm:$0x1]
    %v3021 = vsel %vm321, 0, %v3020
    %3022 = vst [vmem:[#allocation3 + $0x64] sm:$0x1] %v3021
    %v3023 = vld [vmem:[#allocation3 + $0x6c] sm:$0x1]
    %v3024 = vsel %vm321, 0, %v3023
    %3025 = vst [vmem:[#allocation3 + $0x6c] sm:$0x1] %v3024
    %v3026 = vld [vmem:[#allocation3 + $0x74] sm:$0x1]
    %v3027 = vsel %vm321, 0, %v3026
    %3028 = vst [vmem:[#allocation3 + $0x74] sm:$0x1] %v3027
    %v3029 = vld [vmem:[#allocation3 + $0x7c] sm:$0x1]
    %v3030 = vsel %vm321, 0, %v3029
    %3031 = vst [vmem:[#allocation3 + $0x7c] sm:$0x1] %v3030
    %v3032 = vld [vmem:[#allocation3 + $0x84] sm:$0x1]
    %v3033 = vsel %vm321, 0, %v3032
    %3034 = vst [vmem:[#allocation3 + $0x84] sm:$0x1] %v3033
    %v3035 = vld [vmem:[#allocation3 + $0x8c] sm:$0x1]
    %v3036 = vsel %vm321, 0, %v3035
    %3037 = vst [vmem:[#allocation3 + $0x8c] sm:$0x1] %v3036
    %v3038 = vld [vmem:[#allocation3 + $0x94] sm:$0x1]
    %v3039 = vsel %vm321, 0, %v3038
    %3040 = vst [vmem:[#allocation3 + $0x94] sm:$0x1] %v3039
    %v3041 = vld [vmem:[#allocation3 + $0x9c] sm:$0x1]
    %v3042 = vsel %vm321, 0, %v3041
    %3043 = vst [vmem:[#allocation3 + $0x9c] sm:$0x1] %v3042
    %v3044 = vpack.c.bf16 %v2899, %v2899
    %v3045 = vpack.c.bf16 %v2900, %v2900
    %v3046 = vpack.c.bf16 %v2901, %v2901
    %v3047 = vpack.c.bf16 %v2902, %v2902
    %v3048 = vpack.c.bf16 %v2903, %v2903
    %v3049 = vpack.c.bf16 %v2904, %v2904
    %v3050 = vpack.c.bf16 %v2905, %v2905
    %v3051 = vpack.c.bf16 %v2906, %v2906
    %v3052 = vpack.c.bf16 %v2907, %v2907
    %v3053 = vpack.c.bf16 %v2908, %v2908
    %v3054 = vpack.c.bf16 %v2909, %v2909
    %v3055 = vpack.c.bf16 %v2910, %v2910
    %v3056 = vpack.c.bf16 %v2911, %v2911
    %v3057 = vpack.c.bf16 %v2912, %v2912
    %v3058 = vpack.c.bf16 %v2913, %v2913
    %v3059 = vpack.c.bf16 %v2914, %v2914
    %v3061 = vshrl.u32 %v3044, 16
    %v3063 = vrot.slane %v3061, 7
    %v3064 = vshll.u32 %v3044, 16
    %v3066 = vor.u32 %v3063, %v3064
    %v3067 = vrot.slane %v3063, 4
    %v3069 = vshrl.u32 %v3045, 16
    %v3071 = vrot.slane %v3069, 7
    %v3072 = vshll.u32 %v3045, 16
    %v3074 = vor.u32 %v3071, %v3072
    %v3075 = vrot.slane %v3071, 4
    %v3077 = vshrl.u32 %v3046, 16
    %v3079 = vrot.slane %v3077, 7
    %v3080 = vshll.u32 %v3046, 16
    %v3082 = vor.u32 %v3079, %v3080
    %v3083 = vrot.slane %v3079, 4
    %v3085 = vshrl.u32 %v3047, 16
    %v3087 = vrot.slane %v3085, 7
    %v3088 = vshll.u32 %v3047, 16
    %v3090 = vor.u32 %v3087, %v3088
    %v3091 = vrot.slane %v3087, 4
    %v3093 = vshrl.u32 %v3048, 16
    %v3095 = vrot.slane %v3093, 7
    %v3096 = vshll.u32 %v3048, 16
    %v3098 = vor.u32 %v3095, %v3096
    %v3099 = vrot.slane %v3095, 4
    %v3101 = vshrl.u32 %v3049, 16
    %v3103 = vrot.slane %v3101, 7
    %v3104 = vshll.u32 %v3049, 16
    %v3106 = vor.u32 %v3103, %v3104
    %v3107 = vrot.slane %v3103, 4
    %v3109 = vshrl.u32 %v3050, 16
    %v3111 = vrot.slane %v3109, 7
    %v3112 = vshll.u32 %v3050, 16
    %v3114 = vor.u32 %v3111, %v3112
    %v3115 = vrot.slane %v3111, 4
    %v3117 = vshrl.u32 %v3051, 16
    %v3119 = vrot.slane %v3117, 7
    %v3120 = vshll.u32 %v3051, 16
    %v3122 = vor.u32 %v3119, %v3120
    %v3123 = vrot.slane %v3119, 4
    %v3125 = vshrl.u32 %v3052, 16
    %v3127 = vrot.slane %v3125, 7
    %v3128 = vshll.u32 %v3052, 16
    %v3130 = vor.u32 %v3127, %v3128
    %v3131 = vrot.slane %v3127, 4
    %v3133 = vshrl.u32 %v3053, 16
    %v3135 = vrot.slane %v3133, 7
    %v3136 = vshll.u32 %v3053, 16
    %v3138 = vor.u32 %v3135, %v3136
    %v3139 = vrot.slane %v3135, 4
    %v3141 = vshrl.u32 %v3054, 16
    %v3143 = vrot.slane %v3141, 7
    %v3144 = vshll.u32 %v3054, 16
    %v3146 = vor.u32 %v3143, %v3144
    %v3147 = vrot.slane %v3143, 4
    %v3149 = vshrl.u32 %v3055, 16
    %v3151 = vrot.slane %v3149, 7
    %v3152 = vshll.u32 %v3055, 16
    %v3154 = vor.u32 %v3151, %v3152
    %v3155 = vrot.slane %v3151, 4
    %v3157 = vshrl.u32 %v3056, 16
    %v3159 = vrot.slane %v3157, 7
    %v3160 = vshll.u32 %v3056, 16
    %v3162 = vor.u32 %v3159, %v3160
    %v3163 = vrot.slane %v3159, 4
    %v3165 = vshrl.u32 %v3057, 16
    %v3167 = vrot.slane %v3165, 7
    %v3168 = vshll.u32 %v3057, 16
    %v3170 = vor.u32 %v3167, %v3168
    %v3171 = vrot.slane %v3167, 4
    %v3173 = vshrl.u32 %v3058, 16
    %v3175 = vrot.slane %v3173, 7
    %v3176 = vshll.u32 %v3058, 16
    %v3178 = vor.u32 %v3175, %v3176
    %v3179 = vrot.slane %v3175, 4
    %v3181 = vshrl.u32 %v3059, 16
    %v3183 = vrot.slane %v3181, 7
    %v3184 = vshll.u32 %v3059, 16
    %v3186 = vor.u32 %v3183, %v3184
    %v3187 = vrot.slane %v3183, 4
    %s3220 = scalar_lea.vmem [#allocation3], 8
    %v3221 = vld [vmem:[%s3220] sm:$0xf]
    %v3222 = vsel %vm560, %v3066, %v3221
    %3223 = vst [vmem:[%s3220] sm:$0xf] %v3222
    %v3224 = vld [vmem:[%s3220 + $0x4] sm:$0x1]
    %v3225 = vsel %vm259, %v3067, %v3224
    %3226 = vst [vmem:[%s3220 + $0x4] sm:$0x1] %v3225
    %v3227 = vld [vmem:[%s3220 + $0x8] sm:$0xf]
    %v3228 = vsel %vm560, %v3074, %v3227
    %3229 = vst [vmem:[%s3220 + $0x8] sm:$0xf] %v3228
    %v3230 = vld [vmem:[%s3220 + $0xc] sm:$0x1]
    %v3231 = vsel %vm259, %v3075, %v3230
    %3232 = vst [vmem:[%s3220 + $0xc] sm:$0x1] %v3231
    %v3233 = vld [vmem:[%s3220 + $0x10] sm:$0xf]
    %v3234 = vsel %vm560, %v3082, %v3233
    %3235 = vst [vmem:[%s3220 + $0x10] sm:$0xf] %v3234
    %v3236 = vld [vmem:[%s3220 + $0x14] sm:$0x1]
    %v3237 = vsel %vm259, %v3083, %v3236
    %3238 = vst [vmem:[%s3220 + $0x14] sm:$0x1] %v3237
    %v3239 = vld [vmem:[%s3220 + $0x18] sm:$0xf]
    %v3240 = vsel %vm560, %v3090, %v3239
    %3241 = vst [vmem:[%s3220 + $0x18] sm:$0xf] %v3240
    %v3242 = vld [vmem:[%s3220 + $0x1c] sm:$0x1]
    %v3243 = vsel %vm259, %v3091, %v3242
    %3244 = vst [vmem:[%s3220 + $0x1c] sm:$0x1] %v3243
    %v3245 = vld [vmem:[%s3220 + $0x20] sm:$0xf]
    %v3246 = vsel %vm560, %v3098, %v3245
    %3247 = vst [vmem:[%s3220 + $0x20] sm:$0xf] %v3246
    %v3248 = vld [vmem:[%s3220 + $0x24] sm:$0x1]
    %v3249 = vsel %vm259, %v3099, %v3248
    %3250 = vst [vmem:[%s3220 + $0x24] sm:$0x1] %v3249
    %v3251 = vld [vmem:[%s3220 + $0x28] sm:$0xf]
    %v3252 = vsel %vm560, %v3106, %v3251
    %3253 = vst [vmem:[%s3220 + $0x28] sm:$0xf] %v3252
    %v3254 = vld [vmem:[%s3220 + $0x2c] sm:$0x1]
    %v3255 = vsel %vm259, %v3107, %v3254
    %3256 = vst [vmem:[%s3220 + $0x2c] sm:$0x1] %v3255
    %v3257 = vld [vmem:[%s3220 + $0x30] sm:$0xf]
    %v3258 = vsel %vm560, %v3114, %v3257
    %3259 = vst [vmem:[%s3220 + $0x30] sm:$0xf] %v3258
    %v3260 = vld [vmem:[%s3220 + $0x34] sm:$0x1]
    %v3261 = vsel %vm259, %v3115, %v3260
    %3262 = vst [vmem:[%s3220 + $0x34] sm:$0x1] %v3261
    %v3263 = vld [vmem:[%s3220 + $0x38] sm:$0xf]
    %v3264 = vsel %vm560, %v3122, %v3263
    %3265 = vst [vmem:[%s3220 + $0x38] sm:$0xf] %v3264
    %v3266 = vld [vmem:[%s3220 + $0x3c] sm:$0x1]
    %v3267 = vsel %vm259, %v3123, %v3266
    %3268 = vst [vmem:[%s3220 + $0x3c] sm:$0x1] %v3267
    %v3269 = vld [vmem:[%s3220 + $0x50] sm:$0xf]
    %v3270 = vsel %vm560, %v3130, %v3269
    %3271 = vst [vmem:[%s3220 + $0x50] sm:$0xf] %v3270
    %v3272 = vld [vmem:[%s3220 + $0x54] sm:$0x1]
    %v3273 = vsel %vm259, %v3131, %v3272
    %3274 = vst [vmem:[%s3220 + $0x54] sm:$0x1] %v3273
    %v3275 = vld [vmem:[%s3220 + $0x58] sm:$0xf]
    %v3276 = vsel %vm560, %v3138, %v3275
    %3277 = vst [vmem:[%s3220 + $0x58] sm:$0xf] %v3276
    %v3278 = vld [vmem:[%s3220 + $0x5c] sm:$0x1]
    %v3279 = vsel %vm259, %v3139, %v3278
    %3280 = vst [vmem:[%s3220 + $0x5c] sm:$0x1] %v3279
    %v3281 = vld [vmem:[%s3220 + $0x60] sm:$0xf]
    %v3282 = vsel %vm560, %v3146, %v3281
    %3283 = vst [vmem:[%s3220 + $0x60] sm:$0xf] %v3282
    %v3284 = vld [vmem:[%s3220 + $0x64] sm:$0x1]
    %v3285 = vsel %vm259, %v3147, %v3284
    %3286 = vst [vmem:[%s3220 + $0x64] sm:$0x1] %v3285
    %v3287 = vld [vmem:[%s3220 + $0x68] sm:$0xf]
    %v3288 = vsel %vm560, %v3154, %v3287
    %3289 = vst [vmem:[%s3220 + $0x68] sm:$0xf] %v3288
    %v3290 = vld [vmem:[%s3220 + $0x6c] sm:$0x1]
    %v3291 = vsel %vm259, %v3155, %v3290
    %3292 = vst [vmem:[%s3220 + $0x6c] sm:$0x1] %v3291
    %v3293 = vld [vmem:[%s3220 + $0x70] sm:$0xf]
    %v3294 = vsel %vm560, %v3162, %v3293
    %3295 = vst [vmem:[%s3220 + $0x70] sm:$0xf] %v3294
    %v3296 = vld [vmem:[%s3220 + $0x74] sm:$0x1]
    %v3297 = vsel %vm259, %v3163, %v3296
    %3298 = vst [vmem:[%s3220 + $0x74] sm:$0x1] %v3297
    %v3299 = vld [vmem:[%s3220 + $0x78] sm:$0xf]
    %v3300 = vsel %vm560, %v3170, %v3299
    %3301 = vst [vmem:[%s3220 + $0x78] sm:$0xf] %v3300
    %v3302 = vld [vmem:[%s3220 + $0x7c] sm:$0x1]
    %v3303 = vsel %vm259, %v3171, %v3302
    %3304 = vst [vmem:[%s3220 + $0x7c] sm:$0x1] %v3303
    %v3305 = vld [vmem:[%s3220 + $0x80] sm:$0xf]
    %v3306 = vsel %vm560, %v3178, %v3305
    %3307 = vst [vmem:[%s3220 + $0x80] sm:$0xf] %v3306
    %v3308 = vld [vmem:[%s3220 + $0x84] sm:$0x1]
    %v3309 = vsel %vm259, %v3179, %v3308
    %3310 = vst [vmem:[%s3220 + $0x84] sm:$0x1] %v3309
    %v3311 = vld [vmem:[%s3220 + $0x88] sm:$0xf]
    %v3312 = vsel %vm560, %v3186, %v3311
    %3313 = vst [vmem:[%s3220 + $0x88] sm:$0xf] %v3312
    %v3314 = vld [vmem:[%s3220 + $0x8c] sm:$0x1]
    %v3315 = vsel %vm259, %v3187, %v3314
    %3316 = vst [vmem:[%s3220 + $0x8c] sm:$0x1] %v3315
    %v3317 = vld [vmem:[#allocation3] sm:$0xf]
    %v3318 = vld [vmem:[#allocation3 + $0x8] sm:$0xf]
    %v3319 = vld [vmem:[#allocation3 + $0x10] sm:$0xf]
    %v3320 = vld [vmem:[#allocation3 + $0x18] sm:$0xf]
    %v3321 = vld [vmem:[#allocation3 + $0x20] sm:$0xf]
    %v3322 = vld [vmem:[#allocation3 + $0x28] sm:$0xf]
    %v3323 = vld [vmem:[#allocation3 + $0x30] sm:$0xf]
    %v3324 = vld [vmem:[#allocation3 + $0x38] sm:$0xf]
    %v3325 = vld [vmem:[#allocation3 + $0x50] sm:$0xf]
    %v3326 = vld [vmem:[#allocation3 + $0x58] sm:$0xf]
    %v3327 = vld [vmem:[#allocation3 + $0x60] sm:$0xf]
    %v3328 = vld [vmem:[#allocation3 + $0x68] sm:$0xf]
    %v3329 = vld [vmem:[#allocation3 + $0x70] sm:$0xf]
    %v3330 = vld [vmem:[#allocation3 + $0x78] sm:$0xf]
    %v3331 = vld [vmem:[#allocation3 + $0x80] sm:$0xf]
    %v3332 = vld [vmem:[#allocation3 + $0x88] sm:$0xf]
    %v3333 = vld [vmem:[%s3] sm:$0xf]
    %v3334 = vld [vmem:[#allocation3 + $0x4] sm:$0x1]
    %v3335 = vld [vmem:[#allocation3 + $0xc] sm:$0x1]
    %v3336 = vld [vmem:[#allocation3 + $0x14] sm:$0x1]
    %v3337 = vld [vmem:[#allocation3 + $0x1c] sm:$0x1]
    %v3338 = vld [vmem:[#allocation3 + $0x24] sm:$0x1]
    %v3339 = vld [vmem:[#allocation3 + $0x2c] sm:$0x1]
    %v3340 = vld [vmem:[#allocation3 + $0x34] sm:$0x1]
    %v3341 = vld [vmem:[#allocation3 + $0x3c] sm:$0x1]
    %v3342 = vld [vmem:[#allocation3 + $0x54] sm:$0x1]
    %v3343 = vld [vmem:[#allocation3 + $0x5c] sm:$0x1]
    %v3344 = vld [vmem:[#allocation3 + $0x64] sm:$0x1]
    %v3345 = vld [vmem:[#allocation3 + $0x6c] sm:$0x1]
    %v3346 = vld [vmem:[#allocation3 + $0x74] sm:$0x1]
    %v3347 = vld [vmem:[#allocation3 + $0x7c] sm:$0x1]
    %v3348 = vld [vmem:[#allocation3 + $0x84] sm:$0x1]
    %v3349 = vld [vmem:[#allocation3 + $0x8c] sm:$0x1]
    %v3351 = vshrl.u32 %v3317, 16
    %v3353 = vrot.slane %v3351, 4
    %v3354 = vshll.u32 %v3317, 16
    %v3356 = vrot.slane %v3354, 5
    %v3357 = vor.u32 %v3353, %v3356
    %v3358 = vrot.slane %v3357, 4
    %v3360 = vshll.u32 %v3334, 16
    %v3362 = vrot.slane %v3360, 5
    %v3363 = vsel %vm692, %v3358, %v3362
    %v3365 = vshrl.u32 %v3318, 16
    %v3367 = vrot.slane %v3365, 4
    %v3368 = vshll.u32 %v3318, 16
    %v3370 = vrot.slane %v3368, 5
    %v3371 = vor.u32 %v3367, %v3370
    %v3372 = vrot.slane %v3371, 4
    %v3374 = vshll.u32 %v3335, 16
    %v3376 = vrot.slane %v3374, 5
    %v3377 = vsel %vm692, %v3372, %v3376
    %v3379 = vshrl.u32 %v3319, 16
    %v3381 = vrot.slane %v3379, 4
    %v3382 = vshll.u32 %v3319, 16
    %v3384 = vrot.slane %v3382, 5
    %v3385 = vor.u32 %v3381, %v3384
    %v3386 = vrot.slane %v3385, 4
    %v3388 = vshll.u32 %v3336, 16
    %v3390 = vrot.slane %v3388, 5
    %v3391 = vsel %vm692, %v3386, %v3390
    %v3393 = vshrl.u32 %v3320, 16
    %v3395 = vrot.slane %v3393, 4
    %v3396 = vshll.u32 %v3320, 16
    %v3398 = vrot.slane %v3396, 5
    %v3399 = vor.u32 %v3395, %v3398
    %v3400 = vrot.slane %v3399, 4
    %v3402 = vshll.u32 %v3337, 16
    %v3404 = vrot.slane %v3402, 5
    %v3405 = vsel %vm692, %v3400, %v3404
    %v3407 = vshrl.u32 %v3321, 16
    %v3409 = vrot.slane %v3407, 4
    %v3410 = vshll.u32 %v3321, 16
    %v3412 = vrot.slane %v3410, 5
    %v3413 = vor.u32 %v3409, %v3412
    %v3414 = vrot.slane %v3413, 4
    %v3416 = vshll.u32 %v3338, 16
    %v3418 = vrot.slane %v3416, 5
    %v3419 = vsel %vm692, %v3414, %v3418
    %v3421 = vshrl.u32 %v3322, 16
    %v3423 = vrot.slane %v3421, 4
    %v3424 = vshll.u32 %v3322, 16
    %v3426 = vrot.slane %v3424, 5
    %v3427 = vor.u32 %v3423, %v3426
    %v3428 = vrot.slane %v3427, 4
    %v3430 = vshll.u32 %v3339, 16
    %v3432 = vrot.slane %v3430, 5
    %v3433 = vsel %vm692, %v3428, %v3432
    %v3435 = vshrl.u32 %v3323, 16
    %v3437 = vrot.slane %v3435, 4
    %v3438 = vshll.u32 %v3323, 16
    %v3440 = vrot.slane %v3438, 5
    %v3441 = vor.u32 %v3437, %v3440
    %v3442 = vrot.slane %v3441, 4
    %v3444 = vshll.u32 %v3340, 16
    %v3446 = vrot.slane %v3444, 5
    %v3447 = vsel %vm692, %v3442, %v3446
    %v3449 = vshrl.u32 %v3324, 16
    %v3451 = vrot.slane %v3449, 4
    %v3452 = vshll.u32 %v3324, 16
    %v3454 = vrot.slane %v3452, 5
    %v3455 = vor.u32 %v3451, %v3454
    %v3456 = vrot.slane %v3455, 4
    %v3458 = vshll.u32 %v3341, 16
    %v3460 = vrot.slane %v3458, 5
    %v3461 = vsel %vm692, %v3456, %v3460
    %v3463 = vshrl.u32 %v3325, 16
    %v3465 = vrot.slane %v3463, 4
    %v3466 = vshll.u32 %v3325, 16
    %v3468 = vrot.slane %v3466, 5
    %v3469 = vor.u32 %v3465, %v3468
    %v3470 = vrot.slane %v3469, 4
    %v3472 = vshll.u32 %v3342, 16
    %v3474 = vrot.slane %v3472, 5
    %v3475 = vsel %vm692, %v3470, %v3474
    %v3477 = vshrl.u32 %v3326, 16
    %v3479 = vrot.slane %v3477, 4
    %v3480 = vshll.u32 %v3326, 16
    %v3482 = vrot.slane %v3480, 5
    %v3483 = vor.u32 %v3479, %v3482
    %v3484 = vrot.slane %v3483, 4
    %v3486 = vshll.u32 %v3343, 16
    %v3488 = vrot.slane %v3486, 5
    %v3489 = vsel %vm692, %v3484, %v3488
    %v3491 = vshrl.u32 %v3327, 16
    %v3493 = vrot.slane %v3491, 4
    %v3494 = vshll.u32 %v3327, 16
    %v3496 = vrot.slane %v3494, 5
    %v3497 = vor.u32 %v3493, %v3496
    %v3498 = vrot.slane %v3497, 4
    %v3500 = vshll.u32 %v3344, 16
    %v3502 = vrot.slane %v3500, 5
    %v3503 = vsel %vm692, %v3498, %v3502
    %v3505 = vshrl.u32 %v3328, 16
    %v3507 = vrot.slane %v3505, 4
    %v3508 = vshll.u32 %v3328, 16
    %v3510 = vrot.slane %v3508, 5
    %v3511 = vor.u32 %v3507, %v3510
    %v3512 = vrot.slane %v3511, 4
    %v3514 = vshll.u32 %v3345, 16
    %v3516 = vrot.slane %v3514, 5
    %v3517 = vsel %vm692, %v3512, %v3516
    %v3519 = vshrl.u32 %v3329, 16
    %v3521 = vrot.slane %v3519, 4
    %v3522 = vshll.u32 %v3329, 16
    %v3524 = vrot.slane %v3522, 5
    %v3525 = vor.u32 %v3521, %v3524
    %v3526 = vrot.slane %v3525, 4
    %v3528 = vshll.u32 %v3346, 16
    %v3530 = vrot.slane %v3528, 5
    %v3531 = vsel %vm692, %v3526, %v3530
    %v3533 = vshrl.u32 %v3330, 16
    %v3535 = vrot.slane %v3533, 4
    %v3536 = vshll.u32 %v3330, 16
    %v3538 = vrot.slane %v3536, 5
    %v3539 = vor.u32 %v3535, %v3538
    %v3540 = vrot.slane %v3539, 4
    %v3542 = vshll.u32 %v3347, 16
    %v3544 = vrot.slane %v3542, 5
    %v3545 = vsel %vm692, %v3540, %v3544
    %v3547 = vshrl.u32 %v3331, 16
    %v3549 = vrot.slane %v3547, 4
    %v3550 = vshll.u32 %v3331, 16
    %v3552 = vrot.slane %v3550, 5
    %v3553 = vor.u32 %v3549, %v3552
    %v3554 = vrot.slane %v3553, 4
    %v3556 = vshll.u32 %v3348, 16
    %v3558 = vrot.slane %v3556, 5
    %v3559 = vsel %vm692, %v3554, %v3558
    %v3561 = vshrl.u32 %v3332, 16
    %v3563 = vrot.slane %v3561, 4
    %v3564 = vshll.u32 %v3332, 16
    %v3566 = vrot.slane %v3564, 5
    %v3567 = vor.u32 %v3563, %v3566
    %v3568 = vrot.slane %v3567, 4
    %v3570 = vshll.u32 %v3349, 16
    %v3572 = vrot.slane %v3570, 5
    %v3573 = vsel %vm692, %v3568, %v3572
    %s3574 = scalar_lea.vmem %s3, 4
    %v3575 = vld [vmem:[%s3574] sm:$0xf]
    %v3576 = vunpack.c.l.b16 %v3363
    %v3577 = vunpack.c.l.b16 %v3377
    %v3578 = vunpack.c.l.b16 %v3391
    %v3579 = vunpack.c.l.b16 %v3405
    %v3580 = vunpack.c.l.b16 %v3419
    %v3581 = vunpack.c.l.b16 %v3433
    %v3582 = vunpack.c.l.b16 %v3447
    %v3583 = vunpack.c.l.b16 %v3461
    %v3584 = vunpack.c.l.b16 %v3475
    %v3585 = vunpack.c.l.b16 %v3489
    %v3586 = vunpack.c.l.b16 %v3503
    %v3587 = vunpack.c.l.b16 %v3517
    %v3588 = vunpack.c.l.b16 %v3531
    %v3589 = vunpack.c.l.b16 %v3545
    %v3590 = vunpack.c.l.b16 %v3559
    %v3591 = vunpack.c.l.b16 %v3573
    %v3592 = vpack.c.b16 %v3577, %v3576
    %v3593 = vpack.c.b16 %v3579, %v3578
    %v3594 = vpack.c.b16 %v3581, %v3580
    %v3595 = vpack.c.b16 %v3583, %v3582
    %v3596 = vpack.c.b16 %v3585, %v3584
    %v3597 = vpack.c.b16 %v3587, %v3586
    %v3598 = vpack.c.b16 %v3589, %v3588
    %v3599 = vpack.c.b16 %v3591, %v3590
    %v3601 = vsel %vm943, %v3592, 0
    %v3604 = vsel %vm943, %v3593, 0
    %v3607 = vsel %vm943, %v3594, 0
    %v3610 = vsel %vm943, %v3595, 0
    %v3613 = vsel %vm943, %v3596, 0
    %v3616 = vsel %vm943, %v3597, 0
    %v3619 = vsel %vm943, %v3598, 0
    %v3622 = vsel %vm943, %v3599, 0
    %v3625 = vsel %vm968, %v3575, 0
    %3627 = vmatpush.bf16.msra.mxu0 0
    %3628 = vmatpush.bf16.msra.mxu0 0
    %3629 = vmatpush.bf16.msra.mxu0 0
    %3630 = vmatpush.bf16.msra.mxu0 0
    %3631 = vmatpush.bf16.msra.mxu0 0
    %3632 = vmatpush.bf16.msra.mxu0 0
    %3633 = vmatpush.bf16.msra.mxu0 0
    %3634 = vmatpush.bf16.msra.mxu0 %v3625
    %3635 = vmatmul.bf16.gmra.mxu0 %v3601
    %v3636 = vpop.f32.mrf.mxu0
    %v3637 = vadd.f32 0.0, %v3636
    %v3638 = vpop.f32.mrf.mxu0
    %v3639 = vadd.f32 0.0, %v3638
    %3640 = vmatmul.bf16.gmra.mxu0 %v3604
    %v3641 = vpop.f32.mrf.mxu0
    %v3642 = vadd.f32 0.0, %v3641
    %v3643 = vpop.f32.mrf.mxu0
    %v3644 = vadd.f32 0.0, %v3643
    %3645 = vmatmul.bf16.gmra.mxu0 %v3607
    %v3646 = vpop.f32.mrf.mxu0
    %v3647 = vadd.f32 0.0, %v3646
    %v3648 = vpop.f32.mrf.mxu0
    %v3649 = vadd.f32 0.0, %v3648
    %3650 = vmatmul.bf16.gmra.mxu0 %v3610
    %v3651 = vpop.f32.mrf.mxu0
    %v3652 = vadd.f32 0.0, %v3651
    %v3653 = vpop.f32.mrf.mxu0
    %v3654 = vadd.f32 0.0, %v3653
    %3655 = vmatmul.bf16.gmra.mxu0 %v3613
    %v3656 = vpop.f32.mrf.mxu0
    %v3657 = vadd.f32 0.0, %v3656
    %v3658 = vpop.f32.mrf.mxu0
    %v3659 = vadd.f32 0.0, %v3658
    %3660 = vmatmul.bf16.gmra.mxu0 %v3616
    %v3661 = vpop.f32.mrf.mxu0
    %v3662 = vadd.f32 0.0, %v3661
    %v3663 = vpop.f32.mrf.mxu0
    %v3664 = vadd.f32 0.0, %v3663
    %3665 = vmatmul.bf16.gmra.mxu0 %v3619
    %v3666 = vpop.f32.mrf.mxu0
    %v3667 = vadd.f32 0.0, %v3666
    %v3668 = vpop.f32.mrf.mxu0
    %v3669 = vadd.f32 0.0, %v3668
    %3670 = vmatmul.bf16.gmra.mxu0 %v3622
    %v3671 = vpop.f32.mrf.mxu0
    %v3672 = vadd.f32 0.0, %v3671
    %v3673 = vpop.f32.mrf.mxu0
    %v3674 = vadd.f32 0.0, %v3673
    %3675 = vdwg.mxu0
    %v3692 = vunpack.c.l.b16 %v3317
    %v3693 = vunpack.c.l.b16 %v3318
    %v3694 = vunpack.c.l.b16 %v3319
    %v3695 = vunpack.c.l.b16 %v3320
    %v3696 = vunpack.c.l.b16 %v3321
    %v3697 = vunpack.c.l.b16 %v3322
    %v3698 = vunpack.c.l.b16 %v3323
    %v3699 = vunpack.c.l.b16 %v3324
    %v3700 = vunpack.c.l.b16 %v3325
    %v3701 = vunpack.c.l.b16 %v3326
    %v3702 = vunpack.c.l.b16 %v3327
    %v3703 = vunpack.c.l.b16 %v3328
    %v3704 = vunpack.c.l.b16 %v3329
    %v3705 = vunpack.c.l.b16 %v3330
    %v3706 = vunpack.c.l.b16 %v3331
    %v3707 = vunpack.c.l.b16 %v3332
    %v3708 = vpack.c.b16 %v3693, %v3692
    %v3709 = vpack.c.b16 %v3695, %v3694
    %v3710 = vpack.c.b16 %v3697, %v3696
    %v3711 = vpack.c.b16 %v3699, %v3698
    %v3712 = vpack.c.b16 %v3701, %v3700
    %v3713 = vpack.c.b16 %v3703, %v3702
    %v3714 = vpack.c.b16 %v3705, %v3704
    %v3715 = vpack.c.b16 %v3707, %v3706
    %v3717 = vsel %vm943, %v3708, 0
    %v3720 = vsel %vm943, %v3709, 0
    %v3723 = vsel %vm943, %v3710, 0
    %v3726 = vsel %vm943, %v3711, 0
    %v3729 = vsel %vm943, %v3712, 0
    %v3732 = vsel %vm943, %v3713, 0
    %v3735 = vsel %vm943, %v3714, 0
    %v3738 = vsel %vm943, %v3715, 0
    %v3741 = vsel %vm968, %v3333, 0
    %3743 = vmatpush.bf16.msra.mxu0 0
    %3744 = vmatpush.bf16.msra.mxu0 0
    %3745 = vmatpush.bf16.msra.mxu0 0
    %3746 = vmatpush.bf16.msra.mxu0 0
    %3747 = vmatpush.bf16.msra.mxu0 0
    %3748 = vmatpush.bf16.msra.mxu0 0
    %3749 = vmatpush.bf16.msra.mxu0 0
    %3750 = vmatpush.bf16.msra.mxu0 %v3741
    %3751 = vmatmul.bf16.gmra.mxu0 %v3717
    %v3752 = vpop.f32.mrf.mxu0
    %v3753 = vadd.f32 %v3637, %v3752
    %v3754 = vpop.f32.mrf.mxu0
    %v3755 = vadd.f32 %v3639, %v3754
    %3756 = vmatmul.bf16.gmra.mxu0 %v3720
    %v3757 = vpop.f32.mrf.mxu0
    %v3758 = vadd.f32 %v3642, %v3757
    %v3759 = vpop.f32.mrf.mxu0
    %v3760 = vadd.f32 %v3644, %v3759
    %3761 = vmatmul.bf16.gmra.mxu0 %v3723
    %v3762 = vpop.f32.mrf.mxu0
    %v3763 = vadd.f32 %v3647, %v3762
    %v3764 = vpop.f32.mrf.mxu0
    %v3765 = vadd.f32 %v3649, %v3764
    %3766 = vmatmul.bf16.gmra.mxu0 %v3726
    %v3767 = vpop.f32.mrf.mxu0
    %v3768 = vadd.f32 %v3652, %v3767
    %v3769 = vpop.f32.mrf.mxu0
    %v3770 = vadd.f32 %v3654, %v3769
    %3771 = vmatmul.bf16.gmra.mxu0 %v3729
    %v3772 = vpop.f32.mrf.mxu0
    %v3773 = vadd.f32 %v3657, %v3772
    %v3774 = vpop.f32.mrf.mxu0
    %v3775 = vadd.f32 %v3659, %v3774
    %3776 = vmatmul.bf16.gmra.mxu0 %v3732
    %v3777 = vpop.f32.mrf.mxu0
    %v3778 = vadd.f32 %v3662, %v3777
    %v3779 = vpop.f32.mrf.mxu0
    %v3780 = vadd.f32 %v3664, %v3779
    %3781 = vmatmul.bf16.gmra.mxu0 %v3735
    %v3782 = vpop.f32.mrf.mxu0
    %v3783 = vadd.f32 %v3667, %v3782
    %v3784 = vpop.f32.mrf.mxu0
    %v3785 = vadd.f32 %v3669, %v3784
    %3786 = vmatmul.bf16.gmra.mxu0 %v3738
    %v3787 = vpop.f32.mrf.mxu0
    %v3788 = vadd.f32 %v3672, %v3787
    %v3789 = vpop.f32.mrf.mxu0
    %v3790 = vadd.f32 %v3674, %v3789
    %3791 = vdwg.mxu0
    %v3792 = vld [vmem:[#allocation3] sm:$0xe]
    %v3793 = vld [vmem:[#allocation3 + $0x8] sm:$0xe]
    %v3794 = vld [vmem:[#allocation3 + $0x10] sm:$0xe]
    %v3795 = vld [vmem:[#allocation3 + $0x18] sm:$0xe]
    %v3796 = vld [vmem:[#allocation3 + $0x20] sm:$0xe]
    %v3797 = vld [vmem:[#allocation3 + $0x28] sm:$0xe]
    %v3798 = vld [vmem:[#allocation3 + $0x30] sm:$0xe]
    %v3799 = vld [vmem:[#allocation3 + $0x38] sm:$0xe]
    %v3800 = vld [vmem:[#allocation3 + $0x50] sm:$0xe]
    %v3801 = vld [vmem:[#allocation3 + $0x58] sm:$0xe]
    %v3802 = vld [vmem:[#allocation3 + $0x60] sm:$0xe]
    %v3803 = vld [vmem:[#allocation3 + $0x68] sm:$0xe]
    %v3804 = vld [vmem:[#allocation3 + $0x70] sm:$0xe]
    %v3805 = vld [vmem:[#allocation3 + $0x78] sm:$0xe]
    %v3806 = vld [vmem:[#allocation3 + $0x80] sm:$0xe]
    %v3807 = vld [vmem:[#allocation3 + $0x88] sm:$0xe]
    %v3840 = vrot.slane %v3792, 5
    %v3841 = vrot.slane %v3840, 4
    %v3842 = vrot.slane %v3334, 5
    %v3843 = vsel %vm1187, %v3841, %v3842
    %v3844 = vrot.slane %v3793, 5
    %v3845 = vrot.slane %v3844, 4
    %v3846 = vrot.slane %v3335, 5
    %v3847 = vsel %vm1187, %v3845, %v3846
    %v3848 = vrot.slane %v3794, 5
    %v3849 = vrot.slane %v3848, 4
    %v3850 = vrot.slane %v3336, 5
    %v3851 = vsel %vm1187, %v3849, %v3850
    %v3852 = vrot.slane %v3795, 5
    %v3853 = vrot.slane %v3852, 4
    %v3854 = vrot.slane %v3337, 5
    %v3855 = vsel %vm1187, %v3853, %v3854
    %v3856 = vrot.slane %v3796, 5
    %v3857 = vrot.slane %v3856, 4
    %v3858 = vrot.slane %v3338, 5
    %v3859 = vsel %vm1187, %v3857, %v3858
    %v3860 = vrot.slane %v3797, 5
    %v3861 = vrot.slane %v3860, 4
    %v3862 = vrot.slane %v3339, 5
    %v3863 = vsel %vm1187, %v3861, %v3862
    %v3864 = vrot.slane %v3798, 5
    %v3865 = vrot.slane %v3864, 4
    %v3866 = vrot.slane %v3340, 5
    %v3867 = vsel %vm1187, %v3865, %v3866
    %v3868 = vrot.slane %v3799, 5
    %v3869 = vrot.slane %v3868, 4
    %v3870 = vrot.slane %v3341, 5
    %v3871 = vsel %vm1187, %v3869, %v3870
    %v3872 = vrot.slane %v3800, 5
    %v3873 = vrot.slane %v3872, 4
    %v3874 = vrot.slane %v3342, 5
    %v3875 = vsel %vm1187, %v3873, %v3874
    %v3876 = vrot.slane %v3801, 5
    %v3877 = vrot.slane %v3876, 4
    %v3878 = vrot.slane %v3343, 5
    %v3879 = vsel %vm1187, %v3877, %v3878
    %v3880 = vrot.slane %v3802, 5
    %v3881 = vrot.slane %v3880, 4
    %v3882 = vrot.slane %v3344, 5
    %v3883 = vsel %vm1187, %v3881, %v3882
    %v3884 = vrot.slane %v3803, 5
    %v3885 = vrot.slane %v3884, 4
    %v3886 = vrot.slane %v3345, 5
    %v3887 = vsel %vm1187, %v3885, %v3886
    %v3888 = vrot.slane %v3804, 5
    %v3889 = vrot.slane %v3888, 4
    %v3890 = vrot.slane %v3346, 5
    %v3891 = vsel %vm1187, %v3889, %v3890
    %v3892 = vrot.slane %v3805, 5
    %v3893 = vrot.slane %v3892, 4
    %v3894 = vrot.slane %v3347, 5
    %v3895 = vsel %vm1187, %v3893, %v3894
    %v3896 = vrot.slane %v3806, 5
    %v3897 = vrot.slane %v3896, 4
    %v3898 = vrot.slane %v3348, 5
    %v3899 = vsel %vm1187, %v3897, %v3898
    %v3900 = vrot.slane %v3807, 5
    %v3901 = vrot.slane %v3900, 4
    %v3902 = vrot.slane %v3349, 5
    %v3903 = vsel %vm1187, %v3901, %v3902
    %s3904 = scalar_lea.vmem %s3, 8
    %v3905 = vld [vmem:[%s3904] sm:$0xf]
    %v3906 = vunpack.c.l.b16 %v3843
    %v3907 = vunpack.c.l.b16 %v3847
    %v3908 = vunpack.c.l.b16 %v3851
    %v3909 = vunpack.c.l.b16 %v3855
    %v3910 = vunpack.c.l.b16 %v3859
    %v3911 = vunpack.c.l.b16 %v3863
    %v3912 = vunpack.c.l.b16 %v3867
    %v3913 = vunpack.c.l.b16 %v3871
    %v3914 = vunpack.c.l.b16 %v3875
    %v3915 = vunpack.c.l.b16 %v3879
    %v3916 = vunpack.c.l.b16 %v3883
    %v3917 = vunpack.c.l.b16 %v3887
    %v3918 = vunpack.c.l.b16 %v3891
    %v3919 = vunpack.c.l.b16 %v3895
    %v3920 = vunpack.c.l.b16 %v3899
    %v3921 = vunpack.c.l.b16 %v3903
    %v3922 = vpack.c.b16 %v3907, %v3906
    %v3923 = vpack.c.b16 %v3909, %v3908
    %v3924 = vpack.c.b16 %v3911, %v3910
    %v3925 = vpack.c.b16 %v3913, %v3912
    %v3926 = vpack.c.b16 %v3915, %v3914
    %v3927 = vpack.c.b16 %v3917, %v3916
    %v3928 = vpack.c.b16 %v3919, %v3918
    %v3929 = vpack.c.b16 %v3921, %v3920
    %v3931 = vsel %vm943, %v3922, 0
    %v3934 = vsel %vm943, %v3923, 0
    %v3937 = vsel %vm943, %v3924, 0
    %v3940 = vsel %vm943, %v3925, 0
    %v3943 = vsel %vm943, %v3926, 0
    %v3946 = vsel %vm943, %v3927, 0
    %v3949 = vsel %vm943, %v3928, 0
    %v3952 = vsel %vm943, %v3929, 0
    %v3955 = vsel %vm968, %v3905, 0
    %3957 = vmatpush.bf16.msra.mxu0 0
    %3958 = vmatpush.bf16.msra.mxu0 0
    %3959 = vmatpush.bf16.msra.mxu0 0
    %3960 = vmatpush.bf16.msra.mxu0 0
    %3961 = vmatpush.bf16.msra.mxu0 0
    %3962 = vmatpush.bf16.msra.mxu0 0
    %3963 = vmatpush.bf16.msra.mxu0 0
    %3964 = vmatpush.bf16.msra.mxu0 %v3955
    %3965 = vmatmul.bf16.gmra.mxu0 %v3931
    %v3966 = vpop.f32.mrf.mxu0
    %v3967 = vadd.f32 0.0, %v3966
    %v3968 = vpop.f32.mrf.mxu0
    %v3969 = vadd.f32 0.0, %v3968
    %3970 = vmatmul.bf16.gmra.mxu0 %v3934
    %v3971 = vpop.f32.mrf.mxu0
    %v3972 = vadd.f32 0.0, %v3971
    %v3973 = vpop.f32.mrf.mxu0
    %v3974 = vadd.f32 0.0, %v3973
    %3975 = vmatmul.bf16.gmra.mxu0 %v3937
    %v3976 = vpop.f32.mrf.mxu0
    %v3977 = vadd.f32 0.0, %v3976
    %v3978 = vpop.f32.mrf.mxu0
    %v3979 = vadd.f32 0.0, %v3978
    %3980 = vmatmul.bf16.gmra.mxu0 %v3940
    %v3981 = vpop.f32.mrf.mxu0
    %v3982 = vadd.f32 0.0, %v3981
    %v3983 = vpop.f32.mrf.mxu0
    %v3984 = vadd.f32 0.0, %v3983
    %3985 = vmatmul.bf16.gmra.mxu0 %v3943
    %v3986 = vpop.f32.mrf.mxu0
    %v3987 = vadd.f32 0.0, %v3986
    %v3988 = vpop.f32.mrf.mxu0
    %v3989 = vadd.f32 0.0, %v3988
    %3990 = vmatmul.bf16.gmra.mxu0 %v3946
    %v3991 = vpop.f32.mrf.mxu0
    %v3992 = vadd.f32 0.0, %v3991
    %v3993 = vpop.f32.mrf.mxu0
    %v3994 = vadd.f32 0.0, %v3993
    %3995 = vmatmul.bf16.gmra.mxu0 %v3949
    %v3996 = vpop.f32.mrf.mxu0
    %v3997 = vadd.f32 0.0, %v3996
    %v3998 = vpop.f32.mrf.mxu0
    %v3999 = vadd.f32 0.0, %v3998
    %4000 = vmatmul.bf16.gmra.mxu0 %v3952
    %v4001 = vpop.f32.mrf.mxu0
    %v4002 = vadd.f32 0.0, %v4001
    %v4003 = vpop.f32.mrf.mxu0
    %v4004 = vadd.f32 0.0, %v4003
    %4005 = vdwg.mxu0
    %v4006 = vadd.f32 %v3753, %v3967
    %v4007 = vadd.f32 %v3755, %v3969
    %v4008 = vadd.f32 %v3758, %v3972
    %v4009 = vadd.f32 %v3760, %v3974
    %v4010 = vadd.f32 %v3763, %v3977
    %v4011 = vadd.f32 %v3765, %v3979
    %v4012 = vadd.f32 %v3768, %v3982
    %v4013 = vadd.f32 %v3770, %v3984
    %v4014 = vadd.f32 %v3773, %v3987
    %v4015 = vadd.f32 %v3775, %v3989
    %v4016 = vadd.f32 %v3778, %v3992
    %v4017 = vadd.f32 %v3780, %v3994
    %v4018 = vadd.f32 %v3783, %v3997
    %v4019 = vadd.f32 %v3785, %v3999
    %v4020 = vadd.f32 %v3788, %v4002
    %v4021 = vadd.f32 %v3790, %v4004
    %v4022 = vld [vmem:[%s3220] sm:$0xf]
    %v4023 = vld [vmem:[%s3220 + $0x8] sm:$0xf]
    %v4024 = vld [vmem:[%s3220 + $0x10] sm:$0xf]
    %v4025 = vld [vmem:[%s3220 + $0x18] sm:$0xf]
    %v4026 = vld [vmem:[%s3220 + $0x20] sm:$0xf]
    %v4027 = vld [vmem:[%s3220 + $0x28] sm:$0xf]
    %v4028 = vld [vmem:[%s3220 + $0x30] sm:$0xf]
    %v4029 = vld [vmem:[%s3220 + $0x38] sm:$0xf]
    %v4030 = vld [vmem:[%s3220 + $0x50] sm:$0xf]
    %v4031 = vld [vmem:[%s3220 + $0x58] sm:$0xf]
    %v4032 = vld [vmem:[%s3220 + $0x60] sm:$0xf]
    %v4033 = vld [vmem:[%s3220 + $0x68] sm:$0xf]
    %v4034 = vld [vmem:[%s3220 + $0x70] sm:$0xf]
    %v4035 = vld [vmem:[%s3220 + $0x78] sm:$0xf]
    %v4036 = vld [vmem:[%s3220 + $0x80] sm:$0xf]
    %v4037 = vld [vmem:[%s3220 + $0x88] sm:$0xf]
    %s4038 = scalar_lea.vmem %s3, 12
    %v4039 = vld [vmem:[%s4038] sm:$0xf]
    %v4056 = vunpack.c.l.b16 %v4022
    %v4057 = vunpack.c.l.b16 %v4023
    %v4058 = vunpack.c.l.b16 %v4024
    %v4059 = vunpack.c.l.b16 %v4025
    %v4060 = vunpack.c.l.b16 %v4026
    %v4061 = vunpack.c.l.b16 %v4027
    %v4062 = vunpack.c.l.b16 %v4028
    %v4063 = vunpack.c.l.b16 %v4029
    %v4064 = vunpack.c.l.b16 %v4030
    %v4065 = vunpack.c.l.b16 %v4031
    %v4066 = vunpack.c.l.b16 %v4032
    %v4067 = vunpack.c.l.b16 %v4033
    %v4068 = vunpack.c.l.b16 %v4034
    %v4069 = vunpack.c.l.b16 %v4035
    %v4070 = vunpack.c.l.b16 %v4036
    %v4071 = vunpack.c.l.b16 %v4037
    %v4072 = vpack.c.b16 %v4057, %v4056
    %v4073 = vpack.c.b16 %v4059, %v4058
    %v4074 = vpack.c.b16 %v4061, %v4060
    %v4075 = vpack.c.b16 %v4063, %v4062
    %v4076 = vpack.c.b16 %v4065, %v4064
    %v4077 = vpack.c.b16 %v4067, %v4066
    %v4078 = vpack.c.b16 %v4069, %v4068
    %v4079 = vpack.c.b16 %v4071, %v4070
    %v4081 = vsel %vm943, %v4072, 0
    %v4084 = vsel %vm943, %v4073, 0
    %v4087 = vsel %vm943, %v4074, 0
    %v4090 = vsel %vm943, %v4075, 0
    %v4093 = vsel %vm943, %v4076, 0
    %v4096 = vsel %vm943, %v4077, 0
    %v4099 = vsel %vm943, %v4078, 0
    %v4102 = vsel %vm943, %v4079, 0
    %v4105 = vsel %vm968, %v4039, 0
    %4107 = vmatpush.bf16.msra.mxu0 0
    %4108 = vmatpush.bf16.msra.mxu0 0
    %4109 = vmatpush.bf16.msra.mxu0 0
    %4110 = vmatpush.bf16.msra.mxu0 0
    %4111 = vmatpush.bf16.msra.mxu0 0
    %4112 = vmatpush.bf16.msra.mxu0 0
    %4113 = vmatpush.bf16.msra.mxu0 0
    %4114 = vmatpush.bf16.msra.mxu0 %v4105
    %4115 = vmatmul.bf16.gmra.mxu0 %v4081
    %v4116 = vpop.f32.mrf.mxu0
    %v4117 = vadd.f32 0.0, %v4116
    %v4118 = vpop.f32.mrf.mxu0
    %v4119 = vadd.f32 0.0, %v4118
    %4120 = vmatmul.bf16.gmra.mxu0 %v4084
    %v4121 = vpop.f32.mrf.mxu0
    %v4122 = vadd.f32 0.0, %v4121
    %v4123 = vpop.f32.mrf.mxu0
    %v4124 = vadd.f32 0.0, %v4123
    %4125 = vmatmul.bf16.gmra.mxu0 %v4087
    %v4126 = vpop.f32.mrf.mxu0
    %v4127 = vadd.f32 0.0, %v4126
    %v4128 = vpop.f32.mrf.mxu0
    %v4129 = vadd.f32 0.0, %v4128
    %4130 = vmatmul.bf16.gmra.mxu0 %v4090
    %v4131 = vpop.f32.mrf.mxu0
    %v4132 = vadd.f32 0.0, %v4131
    %v4133 = vpop.f32.mrf.mxu0
    %v4134 = vadd.f32 0.0, %v4133
    %4135 = vmatmul.bf16.gmra.mxu0 %v4093
    %v4136 = vpop.f32.mrf.mxu0
    %v4137 = vadd.f32 0.0, %v4136
    %v4138 = vpop.f32.mrf.mxu0
    %v4139 = vadd.f32 0.0, %v4138
    %4140 = vmatmul.bf16.gmra.mxu0 %v4096
    %v4141 = vpop.f32.mrf.mxu0
    %v4142 = vadd.f32 0.0, %v4141
    %v4143 = vpop.f32.mrf.mxu0
    %v4144 = vadd.f32 0.0, %v4143
    %4145 = vmatmul.bf16.gmra.mxu0 %v4099
    %v4146 = vpop.f32.mrf.mxu0
    %v4147 = vadd.f32 0.0, %v4146
    %v4148 = vpop.f32.mrf.mxu0
    %v4149 = vadd.f32 0.0, %v4148
    %4150 = vmatmul.bf16.gmra.mxu0 %v4102
    %v4151 = vpop.f32.mrf.mxu0
    %v4152 = vadd.f32 0.0, %v4151
    %v4153 = vpop.f32.mrf.mxu0
    %v4154 = vadd.f32 0.0, %v4153
    %4155 = vdwg.mxu0
    %v4156 = vadd.f32 %v4006, %v4117
    %v4157 = vadd.f32 %v4007, %v4119
    %v4158 = vadd.f32 %v4008, %v4122
    %v4159 = vadd.f32 %v4009, %v4124
    %v4160 = vadd.f32 %v4010, %v4127
    %v4161 = vadd.f32 %v4011, %v4129
    %v4162 = vadd.f32 %v4012, %v4132
    %v4163 = vadd.f32 %v4013, %v4134
    %v4164 = vadd.f32 %v4014, %v4137
    %v4165 = vadd.f32 %v4015, %v4139
    %v4166 = vadd.f32 %v4016, %v4142
    %v4167 = vadd.f32 %v4017, %v4144
    %v4168 = vadd.f32 %v4018, %v4147
    %v4169 = vadd.f32 %v4019, %v4149
    %v4170 = vadd.f32 %v4020, %v4152
    %v4171 = vadd.f32 %v4021, %v4154
    %v4172 = vld [vmem:[%s3220] sm:$0xf]
    %v4173 = vld [vmem:[%s3220 + $0x4] sm:$0x1]
    %v4174 = vld [vmem:[%s3220 + $0x8] sm:$0xf]
    %v4175 = vld [vmem:[%s3220 + $0xc] sm:$0x1]
    %v4176 = vld [vmem:[%s3220 + $0x10] sm:$0xf]
    %v4177 = vld [vmem:[%s3220 + $0x14] sm:$0x1]
    %v4178 = vld [vmem:[%s3220 + $0x18] sm:$0xf]
    %v4179 = vld [vmem:[%s3220 + $0x1c] sm:$0x1]
    %v4180 = vld [vmem:[%s3220 + $0x20] sm:$0xf]
    %v4181 = vld [vmem:[%s3220 + $0x24] sm:$0x1]
    %v4182 = vld [vmem:[%s3220 + $0x28] sm:$0xf]
    %v4183 = vld [vmem:[%s3220 + $0x2c] sm:$0x1]
    %v4184 = vld [vmem:[%s3220 + $0x30] sm:$0xf]
    %v4185 = vld [vmem:[%s3220 + $0x34] sm:$0x1]
    %v4186 = vld [vmem:[%s3220 + $0x38] sm:$0xf]
    %v4187 = vld [vmem:[%s3220 + $0x3c] sm:$0x1]
    %v4188 = vld [vmem:[%s3220 + $0x50] sm:$0xf]
    %v4189 = vld [vmem:[%s3220 + $0x54] sm:$0x1]
    %v4190 = vld [vmem:[%s3220 + $0x58] sm:$0xf]
    %v4191 = vld [vmem:[%s3220 + $0x5c] sm:$0x1]
    %v4192 = vld [vmem:[%s3220 + $0x60] sm:$0xf]
    %v4193 = vld [vmem:[%s3220 + $0x64] sm:$0x1]
    %v4194 = vld [vmem:[%s3220 + $0x68] sm:$0xf]
    %v4195 = vld [vmem:[%s3220 + $0x6c] sm:$0x1]
    %v4196 = vld [vmem:[%s3220 + $0x70] sm:$0xf]
    %v4197 = vld [vmem:[%s3220 + $0x74] sm:$0x1]
    %v4198 = vld [vmem:[%s3220 + $0x78] sm:$0xf]
    %v4199 = vld [vmem:[%s3220 + $0x7c] sm:$0x1]
    %v4200 = vld [vmem:[%s3220 + $0x80] sm:$0xf]
    %v4201 = vld [vmem:[%s3220 + $0x84] sm:$0x1]
    %v4202 = vld [vmem:[%s3220 + $0x88] sm:$0xf]
    %v4203 = vld [vmem:[%s3220 + $0x8c] sm:$0x1]
    %v4205 = vshrl.u32 %v4172, 16
    %v4207 = vrot.slane %v4205, 4
    %v4208 = vshll.u32 %v4172, 16
    %v4210 = vrot.slane %v4208, 5
    %v4211 = vor.u32 %v4207, %v4210
    %v4212 = vrot.slane %v4211, 4
    %v4214 = vshll.u32 %v4173, 16
    %v4216 = vrot.slane %v4214, 5
    %v4217 = vsel %vm692, %v4212, %v4216
    %v4219 = vshrl.u32 %v4174, 16
    %v4221 = vrot.slane %v4219, 4
    %v4222 = vshll.u32 %v4174, 16
    %v4224 = vrot.slane %v4222, 5
    %v4225 = vor.u32 %v4221, %v4224
    %v4226 = vrot.slane %v4225, 4
    %v4228 = vshll.u32 %v4175, 16
    %v4230 = vrot.slane %v4228, 5
    %v4231 = vsel %vm692, %v4226, %v4230
    %v4233 = vshrl.u32 %v4176, 16
    %v4235 = vrot.slane %v4233, 4
    %v4236 = vshll.u32 %v4176, 16
    %v4238 = vrot.slane %v4236, 5
    %v4239 = vor.u32 %v4235, %v4238
    %v4240 = vrot.slane %v4239, 4
    %v4242 = vshll.u32 %v4177, 16
    %v4244 = vrot.slane %v4242, 5
    %v4245 = vsel %vm692, %v4240, %v4244
    %v4247 = vshrl.u32 %v4178, 16
    %v4249 = vrot.slane %v4247, 4
    %v4250 = vshll.u32 %v4178, 16
    %v4252 = vrot.slane %v4250, 5
    %v4253 = vor.u32 %v4249, %v4252
    %v4254 = vrot.slane %v4253, 4
    %v4256 = vshll.u32 %v4179, 16
    %v4258 = vrot.slane %v4256, 5
    %v4259 = vsel %vm692, %v4254, %v4258
    %v4261 = vshrl.u32 %v4180, 16
    %v4263 = vrot.slane %v4261, 4
    %v4264 = vshll.u32 %v4180, 16
    %v4266 = vrot.slane %v4264, 5
    %v4267 = vor.u32 %v4263, %v4266
    %v4268 = vrot.slane %v4267, 4
    %v4270 = vshll.u32 %v4181, 16
    %v4272 = vrot.slane %v4270, 5
    %v4273 = vsel %vm692, %v4268, %v4272
    %v4275 = vshrl.u32 %v4182, 16
    %v4277 = vrot.slane %v4275, 4
    %v4278 = vshll.u32 %v4182, 16
    %v4280 = vrot.slane %v4278, 5
    %v4281 = vor.u32 %v4277, %v4280
    %v4282 = vrot.slane %v4281, 4
    %v4284 = vshll.u32 %v4183, 16
    %v4286 = vrot.slane %v4284, 5
    %v4287 = vsel %vm692, %v4282, %v4286
    %v4289 = vshrl.u32 %v4184, 16
    %v4291 = vrot.slane %v4289, 4
    %v4292 = vshll.u32 %v4184, 16
    %v4294 = vrot.slane %v4292, 5
    %v4295 = vor.u32 %v4291, %v4294
    %v4296 = vrot.slane %v4295, 4
    %v4298 = vshll.u32 %v4185, 16
    %v4300 = vrot.slane %v4298, 5
    %v4301 = vsel %vm692, %v4296, %v4300
    %v4303 = vshrl.u32 %v4186, 16
    %v4305 = vrot.slane %v4303, 4
    %v4306 = vshll.u32 %v4186, 16
    %v4308 = vrot.slane %v4306, 5
    %v4309 = vor.u32 %v4305, %v4308
    %v4310 = vrot.slane %v4309, 4
    %v4312 = vshll.u32 %v4187, 16
    %v4314 = vrot.slane %v4312, 5
    %v4315 = vsel %vm692, %v4310, %v4314
    %v4317 = vshrl.u32 %v4188, 16
    %v4319 = vrot.slane %v4317, 4
    %v4320 = vshll.u32 %v4188, 16
    %v4322 = vrot.slane %v4320, 5
    %v4323 = vor.u32 %v4319, %v4322
    %v4324 = vrot.slane %v4323, 4
    %v4326 = vshll.u32 %v4189, 16
    %v4328 = vrot.slane %v4326, 5
    %v4329 = vsel %vm692, %v4324, %v4328
    %v4331 = vshrl.u32 %v4190, 16
    %v4333 = vrot.slane %v4331, 4
    %v4334 = vshll.u32 %v4190, 16
    %v4336 = vrot.slane %v4334, 5
    %v4337 = vor.u32 %v4333, %v4336
    %v4338 = vrot.slane %v4337, 4
    %v4340 = vshll.u32 %v4191, 16
    %v4342 = vrot.slane %v4340, 5
    %v4343 = vsel %vm692, %v4338, %v4342
    %v4345 = vshrl.u32 %v4192, 16
    %v4347 = vrot.slane %v4345, 4
    %v4348 = vshll.u32 %v4192, 16
    %v4350 = vrot.slane %v4348, 5
    %v4351 = vor.u32 %v4347, %v4350
    %v4352 = vrot.slane %v4351, 4
    %v4354 = vshll.u32 %v4193, 16
    %v4356 = vrot.slane %v4354, 5
    %v4357 = vsel %vm692, %v4352, %v4356
    %v4359 = vshrl.u32 %v4194, 16
    %v4361 = vrot.slane %v4359, 4
    %v4362 = vshll.u32 %v4194, 16
    %v4364 = vrot.slane %v4362, 5
    %v4365 = vor.u32 %v4361, %v4364
    %v4366 = vrot.slane %v4365, 4
    %v4368 = vshll.u32 %v4195, 16
    %v4370 = vrot.slane %v4368, 5
    %v4371 = vsel %vm692, %v4366, %v4370
    %v4373 = vshrl.u32 %v4196, 16
    %v4375 = vrot.slane %v4373, 4
    %v4376 = vshll.u32 %v4196, 16
    %v4378 = vrot.slane %v4376, 5
    %v4379 = vor.u32 %v4375, %v4378
    %v4380 = vrot.slane %v4379, 4
    %v4382 = vshll.u32 %v4197, 16
    %v4384 = vrot.slane %v4382, 5
    %v4385 = vsel %vm692, %v4380, %v4384
    %v4387 = vshrl.u32 %v4198, 16
    %v4389 = vrot.slane %v4387, 4
    %v4390 = vshll.u32 %v4198, 16
    %v4392 = vrot.slane %v4390, 5
    %v4393 = vor.u32 %v4389, %v4392
    %v4394 = vrot.slane %v4393, 4
    %v4396 = vshll.u32 %v4199, 16
    %v4398 = vrot.slane %v4396, 5
    %v4399 = vsel %vm692, %v4394, %v4398
    %v4401 = vshrl.u32 %v4200, 16
    %v4403 = vrot.slane %v4401, 4
    %v4404 = vshll.u32 %v4200, 16
    %v4406 = vrot.slane %v4404, 5
    %v4407 = vor.u32 %v4403, %v4406
    %v4408 = vrot.slane %v4407, 4
    %v4410 = vshll.u32 %v4201, 16
    %v4412 = vrot.slane %v4410, 5
    %v4413 = vsel %vm692, %v4408, %v4412
    %v4415 = vshrl.u32 %v4202, 16
    %v4417 = vrot.slane %v4415, 4
    %v4418 = vshll.u32 %v4202, 16
    %v4420 = vrot.slane %v4418, 5
    %v4421 = vor.u32 %v4417, %v4420
    %v4422 = vrot.slane %v4421, 4
    %v4424 = vshll.u32 %v4203, 16
    %v4426 = vrot.slane %v4424, 5
    %v4427 = vsel %vm692, %v4422, %v4426
    %s4428 = scalar_lea.vmem %s3, 16
    %v4429 = vld [vmem:[%s4428] sm:$0xf]
    %v4430 = vunpack.c.l.b16 %v4217
    %v4431 = vunpack.c.l.b16 %v4231
    %v4432 = vunpack.c.l.b16 %v4245
    %v4433 = vunpack.c.l.b16 %v4259
    %v4434 = vunpack.c.l.b16 %v4273
    %v4435 = vunpack.c.l.b16 %v4287
    %v4436 = vunpack.c.l.b16 %v4301
    %v4437 = vunpack.c.l.b16 %v4315
    %v4438 = vunpack.c.l.b16 %v4329
    %v4439 = vunpack.c.l.b16 %v4343
    %v4440 = vunpack.c.l.b16 %v4357
    %v4441 = vunpack.c.l.b16 %v4371
    %v4442 = vunpack.c.l.b16 %v4385
    %v4443 = vunpack.c.l.b16 %v4399
    %v4444 = vunpack.c.l.b16 %v4413
    %v4445 = vunpack.c.l.b16 %v4427
    %v4446 = vpack.c.b16 %v4431, %v4430
    %v4447 = vpack.c.b16 %v4433, %v4432
    %v4448 = vpack.c.b16 %v4435, %v4434
    %v4449 = vpack.c.b16 %v4437, %v4436
    %v4450 = vpack.c.b16 %v4439, %v4438
    %v4451 = vpack.c.b16 %v4441, %v4440
    %v4452 = vpack.c.b16 %v4443, %v4442
    %v4453 = vpack.c.b16 %v4445, %v4444
    %v4455 = vsel %vm943, %v4446, 0
    %v4458 = vsel %vm943, %v4447, 0
    %v4461 = vsel %vm943, %v4448, 0
    %v4464 = vsel %vm943, %v4449, 0
    %v4467 = vsel %vm943, %v4450, 0
    %v4470 = vsel %vm943, %v4451, 0
    %v4473 = vsel %vm943, %v4452, 0
    %v4476 = vsel %vm943, %v4453, 0
    %v4479 = vsel %vm968, %v4429, 0
    %4481 = vmatpush.bf16.msra.mxu0 0
    %4482 = vmatpush.bf16.msra.mxu0 0
    %4483 = vmatpush.bf16.msra.mxu0 0
    %4484 = vmatpush.bf16.msra.mxu0 0
    %4485 = vmatpush.bf16.msra.mxu0 0
    %4486 = vmatpush.bf16.msra.mxu0 0
    %4487 = vmatpush.bf16.msra.mxu0 0
    %4488 = vmatpush.bf16.msra.mxu0 %v4479
    %4489 = vmatmul.bf16.gmra.mxu0 %v4455
    %v4490 = vpop.f32.mrf.mxu0
    %v4491 = vadd.f32 0.0, %v4490
    %v4492 = vpop.f32.mrf.mxu0
    %v4493 = vadd.f32 0.0, %v4492
    %4494 = vmatmul.bf16.gmra.mxu0 %v4458
    %v4495 = vpop.f32.mrf.mxu0
    %v4496 = vadd.f32 0.0, %v4495
    %v4497 = vpop.f32.mrf.mxu0
    %v4498 = vadd.f32 0.0, %v4497
    %4499 = vmatmul.bf16.gmra.mxu0 %v4461
    %v4500 = vpop.f32.mrf.mxu0
    %v4501 = vadd.f32 0.0, %v4500
    %v4502 = vpop.f32.mrf.mxu0
    %v4503 = vadd.f32 0.0, %v4502
    %4504 = vmatmul.bf16.gmra.mxu0 %v4464
    %v4505 = vpop.f32.mrf.mxu0
    %v4506 = vadd.f32 0.0, %v4505
    %v4507 = vpop.f32.mrf.mxu0
    %v4508 = vadd.f32 0.0, %v4507
    %4509 = vmatmul.bf16.gmra.mxu0 %v4467
    %v4510 = vpop.f32.mrf.mxu0
    %v4511 = vadd.f32 0.0, %v4510
    %v4512 = vpop.f32.mrf.mxu0
    %v4513 = vadd.f32 0.0, %v4512
    %4514 = vmatmul.bf16.gmra.mxu0 %v4470
    %v4515 = vpop.f32.mrf.mxu0
    %v4516 = vadd.f32 0.0, %v4515
    %v4517 = vpop.f32.mrf.mxu0
    %v4518 = vadd.f32 0.0, %v4517
    %4519 = vmatmul.bf16.gmra.mxu0 %v4473
    %v4520 = vpop.f32.mrf.mxu0
    %v4521 = vadd.f32 0.0, %v4520
    %v4522 = vpop.f32.mrf.mxu0
    %v4523 = vadd.f32 0.0, %v4522
    %4524 = vmatmul.bf16.gmra.mxu0 %v4476
    %v4525 = vpop.f32.mrf.mxu0
    %v4526 = vadd.f32 0.0, %v4525
    %v4527 = vpop.f32.mrf.mxu0
    %v4528 = vadd.f32 0.0, %v4527
    %4529 = vdwg.mxu0
    %v4530 = vadd.f32 %v4156, %v4491
    %v4531 = vadd.f32 %v4157, %v4493
    %v4532 = vadd.f32 %v4158, %v4496
    %v4533 = vadd.f32 %v4159, %v4498
    %v4534 = vadd.f32 %v4160, %v4501
    %v4535 = vadd.f32 %v4161, %v4503
    %v4536 = vadd.f32 %v4162, %v4506
    %v4537 = vadd.f32 %v4163, %v4508
    %v4538 = vadd.f32 %v4164, %v4511
    %v4539 = vadd.f32 %v4165, %v4513
    %v4540 = vadd.f32 %v4166, %v4516
    %v4541 = vadd.f32 %v4167, %v4518
    %v4542 = vadd.f32 %v4168, %v4521
    %v4543 = vadd.f32 %v4169, %v4523
    %v4544 = vadd.f32 %v4170, %v4526
    %v4545 = vadd.f32 %v4171, %v4528
    %v4546 = vld [vmem:[%s3220] sm:$0xe]
    %v4547 = vld [vmem:[%s3220 + $0x8] sm:$0xe]
    %v4548 = vld [vmem:[%s3220 + $0x10] sm:$0xe]
    %v4549 = vld [vmem:[%s3220 + $0x18] sm:$0xe]
    %v4550 = vld [vmem:[%s3220 + $0x20] sm:$0xe]
    %v4551 = vld [vmem:[%s3220 + $0x28] sm:$0xe]
    %v4552 = vld [vmem:[%s3220 + $0x30] sm:$0xe]
    %v4553 = vld [vmem:[%s3220 + $0x38] sm:$0xe]
    %v4554 = vld [vmem:[%s3220 + $0x50] sm:$0xe]
    %v4555 = vld [vmem:[%s3220 + $0x58] sm:$0xe]
    %v4556 = vld [vmem:[%s3220 + $0x60] sm:$0xe]
    %v4557 = vld [vmem:[%s3220 + $0x68] sm:$0xe]
    %v4558 = vld [vmem:[%s3220 + $0x70] sm:$0xe]
    %v4559 = vld [vmem:[%s3220 + $0x78] sm:$0xe]
    %v4560 = vld [vmem:[%s3220 + $0x80] sm:$0xe]
    %v4561 = vld [vmem:[%s3220 + $0x88] sm:$0xe]
    %v4594 = vrot.slane %v4546, 5
    %v4595 = vrot.slane %v4594, 4
    %v4596 = vrot.slane %v4173, 5
    %v4597 = vsel %vm1187, %v4595, %v4596
    %v4598 = vrot.slane %v4547, 5
    %v4599 = vrot.slane %v4598, 4
    %v4600 = vrot.slane %v4175, 5
    %v4601 = vsel %vm1187, %v4599, %v4600
    %v4602 = vrot.slane %v4548, 5
    %v4603 = vrot.slane %v4602, 4
    %v4604 = vrot.slane %v4177, 5
    %v4605 = vsel %vm1187, %v4603, %v4604
    %v4606 = vrot.slane %v4549, 5
    %v4607 = vrot.slane %v4606, 4
    %v4608 = vrot.slane %v4179, 5
    %v4609 = vsel %vm1187, %v4607, %v4608
    %v4610 = vrot.slane %v4550, 5
    %v4611 = vrot.slane %v4610, 4
    %v4612 = vrot.slane %v4181, 5
    %v4613 = vsel %vm1187, %v4611, %v4612
    %v4614 = vrot.slane %v4551, 5
    %v4615 = vrot.slane %v4614, 4
    %v4616 = vrot.slane %v4183, 5
    %v4617 = vsel %vm1187, %v4615, %v4616
    %v4618 = vrot.slane %v4552, 5
    %v4619 = vrot.slane %v4618, 4
    %v4620 = vrot.slane %v4185, 5
    %v4621 = vsel %vm1187, %v4619, %v4620
    %v4622 = vrot.slane %v4553, 5
    %v4623 = vrot.slane %v4622, 4
    %v4624 = vrot.slane %v4187, 5
    %v4625 = vsel %vm1187, %v4623, %v4624
    %v4626 = vrot.slane %v4554, 5
    %v4627 = vrot.slane %v4626, 4
    %v4628 = vrot.slane %v4189, 5
    %v4629 = vsel %vm1187, %v4627, %v4628
    %v4630 = vrot.slane %v4555, 5
    %v4631 = vrot.slane %v4630, 4
    %v4632 = vrot.slane %v4191, 5
    %v4633 = vsel %vm1187, %v4631, %v4632
    %v4634 = vrot.slane %v4556, 5
    %v4635 = vrot.slane %v4634, 4
    %v4636 = vrot.slane %v4193, 5
    %v4637 = vsel %vm1187, %v4635, %v4636
    %v4638 = vrot.slane %v4557, 5
    %v4639 = vrot.slane %v4638, 4
    %v4640 = vrot.slane %v4195, 5
    %v4641 = vsel %vm1187, %v4639, %v4640
    %v4642 = vrot.slane %v4558, 5
    %v4643 = vrot.slane %v4642, 4
    %v4644 = vrot.slane %v4197, 5
    %v4645 = vsel %vm1187, %v4643, %v4644
    %v4646 = vrot.slane %v4559, 5
    %v4647 = vrot.slane %v4646, 4
    %v4648 = vrot.slane %v4199, 5
    %v4649 = vsel %vm1187, %v4647, %v4648
    %v4650 = vrot.slane %v4560, 5
    %v4651 = vrot.slane %v4650, 4
    %v4652 = vrot.slane %v4201, 5
    %v4653 = vsel %vm1187, %v4651, %v4652
    %v4654 = vrot.slane %v4561, 5
    %v4655 = vrot.slane %v4654, 4
    %v4656 = vrot.slane %v4203, 5
    %v4657 = vsel %vm1187, %v4655, %v4656
    %s4658 = scalar_lea.vmem %s3, 20
    %v4659 = vld [vmem:[%s4658] sm:$0xf]
    %v4660 = vunpack.c.l.b16 %v4597
    %v4661 = vunpack.c.l.b16 %v4601
    %v4662 = vunpack.c.l.b16 %v4605
    %v4663 = vunpack.c.l.b16 %v4609
    %v4664 = vunpack.c.l.b16 %v4613
    %v4665 = vunpack.c.l.b16 %v4617
    %v4666 = vunpack.c.l.b16 %v4621
    %v4667 = vunpack.c.l.b16 %v4625
    %v4668 = vunpack.c.l.b16 %v4629
    %v4669 = vunpack.c.l.b16 %v4633
    %v4670 = vunpack.c.l.b16 %v4637
    %v4671 = vunpack.c.l.b16 %v4641
    %v4672 = vunpack.c.l.b16 %v4645
    %v4673 = vunpack.c.l.b16 %v4649
    %v4674 = vunpack.c.l.b16 %v4653
    %v4675 = vunpack.c.l.b16 %v4657
    %v4676 = vpack.c.b16 %v4661, %v4660
    %v4677 = vpack.c.b16 %v4663, %v4662
    %v4678 = vpack.c.b16 %v4665, %v4664
    %v4679 = vpack.c.b16 %v4667, %v4666
    %v4680 = vpack.c.b16 %v4669, %v4668
    %v4681 = vpack.c.b16 %v4671, %v4670
    %v4682 = vpack.c.b16 %v4673, %v4672
    %v4683 = vpack.c.b16 %v4675, %v4674
    %v4685 = vsel %vm943, %v4676, 0
    %v4688 = vsel %vm943, %v4677, 0
    %v4691 = vsel %vm943, %v4678, 0
    %v4694 = vsel %vm943, %v4679, 0
    %v4697 = vsel %vm943, %v4680, 0
    %v4700 = vsel %vm943, %v4681, 0
    %v4703 = vsel %vm943, %v4682, 0
    %v4706 = vsel %vm943, %v4683, 0
    %v4709 = vsel %vm968, %v4659, 0
    %4711 = vmatpush.bf16.msra.mxu0 0
    %4712 = vmatpush.bf16.msra.mxu0 0
    %4713 = vmatpush.bf16.msra.mxu0 0
    %4714 = vmatpush.bf16.msra.mxu0 0
    %4715 = vmatpush.bf16.msra.mxu0 0
    %4716 = vmatpush.bf16.msra.mxu0 0
    %4717 = vmatpush.bf16.msra.mxu0 0
    %4718 = vmatpush.bf16.msra.mxu0 %v4709
    %4719 = vmatmul.bf16.gmra.mxu0 %v4685
    %v4720 = vpop.f32.mrf.mxu0
    %v4721 = vadd.f32 0.0, %v4720
    %v4722 = vpop.f32.mrf.mxu0
    %v4723 = vadd.f32 0.0, %v4722
    %4724 = vmatmul.bf16.gmra.mxu0 %v4688
    %v4725 = vpop.f32.mrf.mxu0
    %v4726 = vadd.f32 0.0, %v4725
    %v4727 = vpop.f32.mrf.mxu0
    %v4728 = vadd.f32 0.0, %v4727
    %4729 = vmatmul.bf16.gmra.mxu0 %v4691
    %v4730 = vpop.f32.mrf.mxu0
    %v4731 = vadd.f32 0.0, %v4730
    %v4732 = vpop.f32.mrf.mxu0
    %v4733 = vadd.f32 0.0, %v4732
    %4734 = vmatmul.bf16.gmra.mxu0 %v4694
    %v4735 = vpop.f32.mrf.mxu0
    %v4736 = vadd.f32 0.0, %v4735
    %v4737 = vpop.f32.mrf.mxu0
    %v4738 = vadd.f32 0.0, %v4737
    %4739 = vmatmul.bf16.gmra.mxu0 %v4697
    %v4740 = vpop.f32.mrf.mxu0
    %v4741 = vadd.f32 0.0, %v4740
    %v4742 = vpop.f32.mrf.mxu0
    %v4743 = vadd.f32 0.0, %v4742
    %4744 = vmatmul.bf16.gmra.mxu0 %v4700
    %v4745 = vpop.f32.mrf.mxu0
    %v4746 = vadd.f32 0.0, %v4745
    %v4747 = vpop.f32.mrf.mxu0
    %v4748 = vadd.f32 0.0, %v4747
    %4749 = vmatmul.bf16.gmra.mxu0 %v4703
    %v4750 = vpop.f32.mrf.mxu0
    %v4751 = vadd.f32 0.0, %v4750
    %v4752 = vpop.f32.mrf.mxu0
    %v4753 = vadd.f32 0.0, %v4752
    %4754 = vmatmul.bf16.gmra.mxu0 %v4706
    %v4755 = vpop.f32.mrf.mxu0
    %v4756 = vadd.f32 0.0, %v4755
    %v4757 = vpop.f32.mrf.mxu0
    %v4758 = vadd.f32 0.0, %v4757
    %4759 = vdwg.mxu0
    %v4760 = vadd.f32 %v4530, %v4721
    %v4761 = vadd.f32 %v4531, %v4723
    %v4762 = vadd.f32 %v4532, %v4726
    %v4763 = vadd.f32 %v4533, %v4728
    %v4764 = vadd.f32 %v4534, %v4731
    %v4765 = vadd.f32 %v4535, %v4733
    %v4766 = vadd.f32 %v4536, %v4736
    %v4767 = vadd.f32 %v4537, %v4738
    %v4768 = vadd.f32 %v4538, %v4741
    %v4769 = vadd.f32 %v4539, %v4743
    %v4770 = vadd.f32 %v4540, %v4746
    %v4771 = vadd.f32 %v4541, %v4748
    %v4772 = vadd.f32 %v4542, %v4751
    %v4773 = vadd.f32 %v4543, %v4753
    %v4774 = vadd.f32 %v4544, %v4756
    %v4775 = vadd.f32 %v4545, %v4758
    %s4776 = scalar_lea.vmem [#allocation3], 16
    %v4777 = vld [vmem:[%s4776] sm:$0xf]
    %v4778 = vld [vmem:[%s4776 + $0x8] sm:$0xf]
    %v4779 = vld [vmem:[%s4776 + $0x10] sm:$0xf]
    %v4780 = vld [vmem:[%s4776 + $0x18] sm:$0xf]
    %v4781 = vld [vmem:[%s4776 + $0x20] sm:$0xf]
    %v4782 = vld [vmem:[%s4776 + $0x28] sm:$0xf]
    %v4783 = vld [vmem:[%s4776 + $0x30] sm:$0xf]
    %v4784 = vld [vmem:[%s4776 + $0x38] sm:$0xf]
    %v4785 = vld [vmem:[%s4776 + $0x50] sm:$0xf]
    %v4786 = vld [vmem:[%s4776 + $0x58] sm:$0xf]
    %v4787 = vld [vmem:[%s4776 + $0x60] sm:$0xf]
    %v4788 = vld [vmem:[%s4776 + $0x68] sm:$0xf]
    %v4789 = vld [vmem:[%s4776 + $0x70] sm:$0xf]
    %v4790 = vld [vmem:[%s4776 + $0x78] sm:$0xf]
    %v4791 = vld [vmem:[%s4776 + $0x80] sm:$0xf]
    %v4792 = vld [vmem:[%s4776 + $0x88] sm:$0xf]
    %s4793 = scalar_lea.vmem %s3, 24
    %v4794 = vld [vmem:[%s4793] sm:$0xf]
    %v4811 = vunpack.c.l.b16 %v4777
    %v4812 = vunpack.c.l.b16 %v4778
    %v4813 = vunpack.c.l.b16 %v4779
    %v4814 = vunpack.c.l.b16 %v4780
    %v4815 = vunpack.c.l.b16 %v4781
    %v4816 = vunpack.c.l.b16 %v4782
    %v4817 = vunpack.c.l.b16 %v4783
    %v4818 = vunpack.c.l.b16 %v4784
    %v4819 = vunpack.c.l.b16 %v4785
    %v4820 = vunpack.c.l.b16 %v4786
    %v4821 = vunpack.c.l.b16 %v4787
    %v4822 = vunpack.c.l.b16 %v4788
    %v4823 = vunpack.c.l.b16 %v4789
    %v4824 = vunpack.c.l.b16 %v4790
    %v4825 = vunpack.c.l.b16 %v4791
    %v4826 = vunpack.c.l.b16 %v4792
    %v4827 = vpack.c.b16 %v4812, %v4811
    %v4828 = vpack.c.b16 %v4814, %v4813
    %v4829 = vpack.c.b16 %v4816, %v4815
    %v4830 = vpack.c.b16 %v4818, %v4817
    %v4831 = vpack.c.b16 %v4820, %v4819
    %v4832 = vpack.c.b16 %v4822, %v4821
    %v4833 = vpack.c.b16 %v4824, %v4823
    %v4834 = vpack.c.b16 %v4826, %v4825
    %v4836 = vsel %vm943, %v4827, 0
    %v4839 = vsel %vm943, %v4828, 0
    %v4842 = vsel %vm943, %v4829, 0
    %v4845 = vsel %vm943, %v4830, 0
    %v4848 = vsel %vm943, %v4831, 0
    %v4851 = vsel %vm943, %v4832, 0
    %v4854 = vsel %vm943, %v4833, 0
    %v4857 = vsel %vm943, %v4834, 0
    %v4860 = vsel %vm968, %v4794, 0
    %4862 = vmatpush.bf16.msra.mxu0 0
    %4863 = vmatpush.bf16.msra.mxu0 0
    %4864 = vmatpush.bf16.msra.mxu0 0
    %4865 = vmatpush.bf16.msra.mxu0 0
    %4866 = vmatpush.bf16.msra.mxu0 0
    %4867 = vmatpush.bf16.msra.mxu0 0
    %4868 = vmatpush.bf16.msra.mxu0 0
    %4869 = vmatpush.bf16.msra.mxu0 %v4860
    %4870 = vmatmul.bf16.gmra.mxu0 %v4836
    %v4871 = vpop.f32.mrf.mxu0
    %v4872 = vadd.f32 0.0, %v4871
    %v4873 = vpop.f32.mrf.mxu0
    %v4874 = vadd.f32 0.0, %v4873
    %4875 = vmatmul.bf16.gmra.mxu0 %v4839
    %v4876 = vpop.f32.mrf.mxu0
    %v4877 = vadd.f32 0.0, %v4876
    %v4878 = vpop.f32.mrf.mxu0
    %v4879 = vadd.f32 0.0, %v4878
    %4880 = vmatmul.bf16.gmra.mxu0 %v4842
    %v4881 = vpop.f32.mrf.mxu0
    %v4882 = vadd.f32 0.0, %v4881
    %v4883 = vpop.f32.mrf.mxu0
    %v4884 = vadd.f32 0.0, %v4883
    %4885 = vmatmul.bf16.gmra.mxu0 %v4845
    %v4886 = vpop.f32.mrf.mxu0
    %v4887 = vadd.f32 0.0, %v4886
    %v4888 = vpop.f32.mrf.mxu0
    %v4889 = vadd.f32 0.0, %v4888
    %4890 = vmatmul.bf16.gmra.mxu0 %v4848
    %v4891 = vpop.f32.mrf.mxu0
    %v4892 = vadd.f32 0.0, %v4891
    %v4893 = vpop.f32.mrf.mxu0
    %v4894 = vadd.f32 0.0, %v4893
    %4895 = vmatmul.bf16.gmra.mxu0 %v4851
    %v4896 = vpop.f32.mrf.mxu0
    %v4897 = vadd.f32 0.0, %v4896
    %v4898 = vpop.f32.mrf.mxu0
    %v4899 = vadd.f32 0.0, %v4898
    %4900 = vmatmul.bf16.gmra.mxu0 %v4854
    %v4901 = vpop.f32.mrf.mxu0
    %v4902 = vadd.f32 0.0, %v4901
    %v4903 = vpop.f32.mrf.mxu0
    %v4904 = vadd.f32 0.0, %v4903
    %4905 = vmatmul.bf16.gmra.mxu0 %v4857
    %v4906 = vpop.f32.mrf.mxu0
    %v4907 = vadd.f32 0.0, %v4906
    %v4908 = vpop.f32.mrf.mxu0
    %v4909 = vadd.f32 0.0, %v4908
    %4910 = vdwg.mxu0
    %v4911 = vadd.f32 %v4760, %v4872
    %v4912 = vadd.f32 %v4761, %v4874
    %v4913 = vadd.f32 %v4762, %v4877
    %v4914 = vadd.f32 %v4763, %v4879
    %v4915 = vadd.f32 %v4764, %v4882
    %v4916 = vadd.f32 %v4765, %v4884
    %v4917 = vadd.f32 %v4766, %v4887
    %v4918 = vadd.f32 %v4767, %v4889
    %v4919 = vadd.f32 %v4768, %v4892
    %v4920 = vadd.f32 %v4769, %v4894
    %v4921 = vadd.f32 %v4770, %v4897
    %v4922 = vadd.f32 %v4771, %v4899
    %v4923 = vadd.f32 %v4772, %v4902
    %v4924 = vadd.f32 %v4773, %v4904
    %v4925 = vadd.f32 %v4774, %v4907
    %v4926 = vadd.f32 %v4775, %v4909
    %v4927 = vld [vmem:[%s4776] sm:$0xf]
    %v4928 = vld [vmem:[%s4776 + $0x4] sm:$0x1]
    %v4929 = vld [vmem:[%s4776 + $0x8] sm:$0xf]
    %v4930 = vld [vmem:[%s4776 + $0xc] sm:$0x1]
    %v4931 = vld [vmem:[%s4776 + $0x10] sm:$0xf]
    %v4932 = vld [vmem:[%s4776 + $0x14] sm:$0x1]
    %v4933 = vld [vmem:[%s4776 + $0x18] sm:$0xf]
    %v4934 = vld [vmem:[%s4776 + $0x1c] sm:$0x1]
    %v4935 = vld [vmem:[%s4776 + $0x20] sm:$0xf]
    %v4936 = vld [vmem:[%s4776 + $0x24] sm:$0x1]
    %v4937 = vld [vmem:[%s4776 + $0x28] sm:$0xf]
    %v4938 = vld [vmem:[%s4776 + $0x2c] sm:$0x1]
    %v4939 = vld [vmem:[%s4776 + $0x30] sm:$0xf]
    %v4940 = vld [vmem:[%s4776 + $0x34] sm:$0x1]
    %v4941 = vld [vmem:[%s4776 + $0x38] sm:$0xf]
    %v4942 = vld [vmem:[%s4776 + $0x3c] sm:$0x1]
    %v4943 = vld [vmem:[%s4776 + $0x50] sm:$0xf]
    %v4944 = vld [vmem:[%s4776 + $0x54] sm:$0x1]
    %v4945 = vld [vmem:[%s4776 + $0x58] sm:$0xf]
    %v4946 = vld [vmem:[%s4776 + $0x5c] sm:$0x1]
    %v4947 = vld [vmem:[%s4776 + $0x60] sm:$0xf]
    %v4948 = vld [vmem:[%s4776 + $0x64] sm:$0x1]
    %v4949 = vld [vmem:[%s4776 + $0x68] sm:$0xf]
    %v4950 = vld [vmem:[%s4776 + $0x6c] sm:$0x1]
    %v4951 = vld [vmem:[%s4776 + $0x70] sm:$0xf]
    %v4952 = vld [vmem:[%s4776 + $0x74] sm:$0x1]
    %v4953 = vld [vmem:[%s4776 + $0x78] sm:$0xf]
    %v4954 = vld [vmem:[%s4776 + $0x7c] sm:$0x1]
    %v4955 = vld [vmem:[%s4776 + $0x80] sm:$0xf]
    %v4956 = vld [vmem:[%s4776 + $0x84] sm:$0x1]
    %v4957 = vld [vmem:[%s4776 + $0x88] sm:$0xf]
    %v4958 = vld [vmem:[%s4776 + $0x8c] sm:$0x1]
    %v4960 = vshrl.u32 %v4927, 16
    %v4962 = vrot.slane %v4960, 4
    %v4963 = vshll.u32 %v4927, 16
    %v4965 = vrot.slane %v4963, 5
    %v4966 = vor.u32 %v4962, %v4965
    %v4967 = vrot.slane %v4966, 4
    %v4969 = vshll.u32 %v4928, 16
    %v4971 = vrot.slane %v4969, 5
    %v4972 = vsel %vm692, %v4967, %v4971
    %v4974 = vshrl.u32 %v4929, 16
    %v4976 = vrot.slane %v4974, 4
    %v4977 = vshll.u32 %v4929, 16
    %v4979 = vrot.slane %v4977, 5
    %v4980 = vor.u32 %v4976, %v4979
    %v4981 = vrot.slane %v4980, 4
    %v4983 = vshll.u32 %v4930, 16
    %v4985 = vrot.slane %v4983, 5
    %v4986 = vsel %vm692, %v4981, %v4985
    %v4988 = vshrl.u32 %v4931, 16
    %v4990 = vrot.slane %v4988, 4
    %v4991 = vshll.u32 %v4931, 16
    %v4993 = vrot.slane %v4991, 5
    %v4994 = vor.u32 %v4990, %v4993
    %v4995 = vrot.slane %v4994, 4
    %v4997 = vshll.u32 %v4932, 16
    %v4999 = vrot.slane %v4997, 5
    %v5000 = vsel %vm692, %v4995, %v4999
    %v5002 = vshrl.u32 %v4933, 16
    %v5004 = vrot.slane %v5002, 4
    %v5005 = vshll.u32 %v4933, 16
    %v5007 = vrot.slane %v5005, 5
    %v5008 = vor.u32 %v5004, %v5007
    %v5009 = vrot.slane %v5008, 4
    %v5011 = vshll.u32 %v4934, 16
    %v5013 = vrot.slane %v5011, 5
    %v5014 = vsel %vm692, %v5009, %v5013
    %v5016 = vshrl.u32 %v4935, 16
    %v5018 = vrot.slane %v5016, 4
    %v5019 = vshll.u32 %v4935, 16
    %v5021 = vrot.slane %v5019, 5
    %v5022 = vor.u32 %v5018, %v5021
    %v5023 = vrot.slane %v5022, 4
    %v5025 = vshll.u32 %v4936, 16
    %v5027 = vrot.slane %v5025, 5
    %v5028 = vsel %vm692, %v5023, %v5027
    %v5030 = vshrl.u32 %v4937, 16
    %v5032 = vrot.slane %v5030, 4
    %v5033 = vshll.u32 %v4937, 16
    %v5035 = vrot.slane %v5033, 5
    %v5036 = vor.u32 %v5032, %v5035
    %v5037 = vrot.slane %v5036, 4
    %v5039 = vshll.u32 %v4938, 16
    %v5041 = vrot.slane %v5039, 5
    %v5042 = vsel %vm692, %v5037, %v5041
    %v5044 = vshrl.u32 %v4939, 16
    %v5046 = vrot.slane %v5044, 4
    %v5047 = vshll.u32 %v4939, 16
    %v5049 = vrot.slane %v5047, 5
    %v5050 = vor.u32 %v5046, %v5049
    %v5051 = vrot.slane %v5050, 4
    %v5053 = vshll.u32 %v4940, 16
    %v5055 = vrot.slane %v5053, 5
    %v5056 = vsel %vm692, %v5051, %v5055
    %v5058 = vshrl.u32 %v4941, 16
    %v5060 = vrot.slane %v5058, 4
    %v5061 = vshll.u32 %v4941, 16
    %v5063 = vrot.slane %v5061, 5
    %v5064 = vor.u32 %v5060, %v5063
    %v5065 = vrot.slane %v5064, 4
    %v5067 = vshll.u32 %v4942, 16
    %v5069 = vrot.slane %v5067, 5
    %v5070 = vsel %vm692, %v5065, %v5069
    %v5072 = vshrl.u32 %v4943, 16
    %v5074 = vrot.slane %v5072, 4
    %v5075 = vshll.u32 %v4943, 16
    %v5077 = vrot.slane %v5075, 5
    %v5078 = vor.u32 %v5074, %v5077
    %v5079 = vrot.slane %v5078, 4
    %v5081 = vshll.u32 %v4944, 16
    %v5083 = vrot.slane %v5081, 5
    %v5084 = vsel %vm692, %v5079, %v5083
    %v5086 = vshrl.u32 %v4945, 16
    %v5088 = vrot.slane %v5086, 4
    %v5089 = vshll.u32 %v4945, 16
    %v5091 = vrot.slane %v5089, 5
    %v5092 = vor.u32 %v5088, %v5091
    %v5093 = vrot.slane %v5092, 4
    %v5095 = vshll.u32 %v4946, 16
    %v5097 = vrot.slane %v5095, 5
    %v5098 = vsel %vm692, %v5093, %v5097
    %v5100 = vshrl.u32 %v4947, 16
    %v5102 = vrot.slane %v5100, 4
    %v5103 = vshll.u32 %v4947, 16
    %v5105 = vrot.slane %v5103, 5
    %v5106 = vor.u32 %v5102, %v5105
    %v5107 = vrot.slane %v5106, 4
    %v5109 = vshll.u32 %v4948, 16
    %v5111 = vrot.slane %v5109, 5
    %v5112 = vsel %vm692, %v5107, %v5111
    %v5114 = vshrl.u32 %v4949, 16
    %v5116 = vrot.slane %v5114, 4
    %v5117 = vshll.u32 %v4949, 16
    %v5119 = vrot.slane %v5117, 5
    %v5120 = vor.u32 %v5116, %v5119
    %v5121 = vrot.slane %v5120, 4
    %v5123 = vshll.u32 %v4950, 16
    %v5125 = vrot.slane %v5123, 5
    %v5126 = vsel %vm692, %v5121, %v5125
    %v5128 = vshrl.u32 %v4951, 16
    %v5130 = vrot.slane %v5128, 4
    %v5131 = vshll.u32 %v4951, 16
    %v5133 = vrot.slane %v5131, 5
    %v5134 = vor.u32 %v5130, %v5133
    %v5135 = vrot.slane %v5134, 4
    %v5137 = vshll.u32 %v4952, 16
    %v5139 = vrot.slane %v5137, 5
    %v5140 = vsel %vm692, %v5135, %v5139
    %v5142 = vshrl.u32 %v4953, 16
    %v5144 = vrot.slane %v5142, 4
    %v5145 = vshll.u32 %v4953, 16
    %v5147 = vrot.slane %v5145, 5
    %v5148 = vor.u32 %v5144, %v5147
    %v5149 = vrot.slane %v5148, 4
    %v5151 = vshll.u32 %v4954, 16
    %v5153 = vrot.slane %v5151, 5
    %v5154 = vsel %vm692, %v5149, %v5153
    %v5156 = vshrl.u32 %v4955, 16
    %v5158 = vrot.slane %v5156, 4
    %v5159 = vshll.u32 %v4955, 16
    %v5161 = vrot.slane %v5159, 5
    %v5162 = vor.u32 %v5158, %v5161
    %v5163 = vrot.slane %v5162, 4
    %v5165 = vshll.u32 %v4956, 16
    %v5167 = vrot.slane %v5165, 5
    %v5168 = vsel %vm692, %v5163, %v5167
    %v5170 = vshrl.u32 %v4957, 16
    %v5172 = vrot.slane %v5170, 4
    %v5173 = vshll.u32 %v4957, 16
    %v5175 = vrot.slane %v5173, 5
    %v5176 = vor.u32 %v5172, %v5175
    %v5177 = vrot.slane %v5176, 4
    %v5179 = vshll.u32 %v4958, 16
    %v5181 = vrot.slane %v5179, 5
    %v5182 = vsel %vm692, %v5177, %v5181
    %s5183 = scalar_lea.vmem %s3, 28
    %v5184 = vld [vmem:[%s5183] sm:$0xf]
    %v5185 = vunpack.c.l.b16 %v4972
    %v5186 = vunpack.c.l.b16 %v4986
    %v5187 = vunpack.c.l.b16 %v5000
    %v5188 = vunpack.c.l.b16 %v5014
    %v5189 = vunpack.c.l.b16 %v5028
    %v5190 = vunpack.c.l.b16 %v5042
    %v5191 = vunpack.c.l.b16 %v5056
    %v5192 = vunpack.c.l.b16 %v5070
    %v5193 = vunpack.c.l.b16 %v5084
    %v5194 = vunpack.c.l.b16 %v5098
    %v5195 = vunpack.c.l.b16 %v5112
    %v5196 = vunpack.c.l.b16 %v5126
    %v5197 = vunpack.c.l.b16 %v5140
    %v5198 = vunpack.c.l.b16 %v5154
    %v5199 = vunpack.c.l.b16 %v5168
    %v5200 = vunpack.c.l.b16 %v5182
    %v5201 = vpack.c.b16 %v5186, %v5185
    %v5202 = vpack.c.b16 %v5188, %v5187
    %v5203 = vpack.c.b16 %v5190, %v5189
    %v5204 = vpack.c.b16 %v5192, %v5191
    %v5205 = vpack.c.b16 %v5194, %v5193
    %v5206 = vpack.c.b16 %v5196, %v5195
    %v5207 = vpack.c.b16 %v5198, %v5197
    %v5208 = vpack.c.b16 %v5200, %v5199
    %v5210 = vsel %vm943, %v5201, 0
    %v5213 = vsel %vm943, %v5202, 0
    %v5216 = vsel %vm943, %v5203, 0
    %v5219 = vsel %vm943, %v5204, 0
    %v5222 = vsel %vm943, %v5205, 0
    %v5225 = vsel %vm943, %v5206, 0
    %v5228 = vsel %vm943, %v5207, 0
    %v5231 = vsel %vm943, %v5208, 0
    %v5234 = vsel %vm968, %v5184, 0
    %5236 = vmatpush.bf16.msra.mxu0 0
    %5237 = vmatpush.bf16.msra.mxu0 0
    %5238 = vmatpush.bf16.msra.mxu0 0
    %5239 = vmatpush.bf16.msra.mxu0 0
    %5240 = vmatpush.bf16.msra.mxu0 0
    %5241 = vmatpush.bf16.msra.mxu0 0
    %5242 = vmatpush.bf16.msra.mxu0 0
    %5243 = vmatpush.bf16.msra.mxu0 %v5234
    %5244 = vmatmul.bf16.gmra.mxu0 %v5210
    %v5245 = vpop.f32.mrf.mxu0
    %v5246 = vadd.f32 0.0, %v5245
    %v5247 = vpop.f32.mrf.mxu0
    %v5248 = vadd.f32 0.0, %v5247
    %5249 = vmatmul.bf16.gmra.mxu0 %v5213
    %v5250 = vpop.f32.mrf.mxu0
    %v5251 = vadd.f32 0.0, %v5250
    %v5252 = vpop.f32.mrf.mxu0
    %v5253 = vadd.f32 0.0, %v5252
    %5254 = vmatmul.bf16.gmra.mxu0 %v5216
    %v5255 = vpop.f32.mrf.mxu0
    %v5256 = vadd.f32 0.0, %v5255
    %v5257 = vpop.f32.mrf.mxu0
    %v5258 = vadd.f32 0.0, %v5257
    %5259 = vmatmul.bf16.gmra.mxu0 %v5219
    %v5260 = vpop.f32.mrf.mxu0
    %v5261 = vadd.f32 0.0, %v5260
    %v5262 = vpop.f32.mrf.mxu0
    %v5263 = vadd.f32 0.0, %v5262
    %5264 = vmatmul.bf16.gmra.mxu0 %v5222
    %v5265 = vpop.f32.mrf.mxu0
    %v5266 = vadd.f32 0.0, %v5265
    %v5267 = vpop.f32.mrf.mxu0
    %v5268 = vadd.f32 0.0, %v5267
    %5269 = vmatmul.bf16.gmra.mxu0 %v5225
    %v5270 = vpop.f32.mrf.mxu0
    %v5271 = vadd.f32 0.0, %v5270
    %v5272 = vpop.f32.mrf.mxu0
    %v5273 = vadd.f32 0.0, %v5272
    %5274 = vmatmul.bf16.gmra.mxu0 %v5228
    %v5275 = vpop.f32.mrf.mxu0
    %v5276 = vadd.f32 0.0, %v5275
    %v5277 = vpop.f32.mrf.mxu0
    %v5278 = vadd.f32 0.0, %v5277
    %5279 = vmatmul.bf16.gmra.mxu0 %v5231
    %v5280 = vpop.f32.mrf.mxu0
    %v5281 = vadd.f32 0.0, %v5280
    %v5282 = vpop.f32.mrf.mxu0
    %v5283 = vadd.f32 0.0, %v5282
    %5284 = vdwg.mxu0
    %v5285 = vadd.f32 %v4911, %v5246
    %v5286 = vadd.f32 %v4912, %v5248
    %v5287 = vadd.f32 %v4913, %v5251
    %v5288 = vadd.f32 %v4914, %v5253
    %v5289 = vadd.f32 %v4915, %v5256
    %v5290 = vadd.f32 %v4916, %v5258
    %v5291 = vadd.f32 %v4917, %v5261
    %v5292 = vadd.f32 %v4918, %v5263
    %v5293 = vadd.f32 %v4919, %v5266
    %v5294 = vadd.f32 %v4920, %v5268
    %v5295 = vadd.f32 %v4921, %v5271
    %v5296 = vadd.f32 %v4922, %v5273
    %v5297 = vadd.f32 %v4923, %v5276
    %v5298 = vadd.f32 %v4924, %v5278
    %v5299 = vadd.f32 %v4925, %v5281
    %v5300 = vadd.f32 %v4926, %v5283
    %v5301 = vld [vmem:[%s4776] sm:$0xe]
    %v5302 = vld [vmem:[%s4776 + $0x8] sm:$0xe]
    %v5303 = vld [vmem:[%s4776 + $0x10] sm:$0xe]
    %v5304 = vld [vmem:[%s4776 + $0x18] sm:$0xe]
    %v5305 = vld [vmem:[%s4776 + $0x20] sm:$0xe]
    %v5306 = vld [vmem:[%s4776 + $0x28] sm:$0xe]
    %v5307 = vld [vmem:[%s4776 + $0x30] sm:$0xe]
    %v5308 = vld [vmem:[%s4776 + $0x38] sm:$0xe]
    %v5309 = vld [vmem:[%s4776 + $0x50] sm:$0xe]
    %v5310 = vld [vmem:[%s4776 + $0x58] sm:$0xe]
    %v5311 = vld [vmem:[%s4776 + $0x60] sm:$0xe]
    %v5312 = vld [vmem:[%s4776 + $0x68] sm:$0xe]
    %v5313 = vld [vmem:[%s4776 + $0x70] sm:$0xe]
    %v5314 = vld [vmem:[%s4776 + $0x78] sm:$0xe]
    %v5315 = vld [vmem:[%s4776 + $0x80] sm:$0xe]
    %v5316 = vld [vmem:[%s4776 + $0x88] sm:$0xe]
    %v5349 = vrot.slane %v5301, 5
    %v5350 = vrot.slane %v5349, 4
    %v5351 = vrot.slane %v4928, 5
    %v5352 = vsel %vm1187, %v5350, %v5351
    %v5353 = vrot.slane %v5302, 5
    %v5354 = vrot.slane %v5353, 4
    %v5355 = vrot.slane %v4930, 5
    %v5356 = vsel %vm1187, %v5354, %v5355
    %v5357 = vrot.slane %v5303, 5
    %v5358 = vrot.slane %v5357, 4
    %v5359 = vrot.slane %v4932, 5
    %v5360 = vsel %vm1187, %v5358, %v5359
    %v5361 = vrot.slane %v5304, 5
    %v5362 = vrot.slane %v5361, 4
    %v5363 = vrot.slane %v4934, 5
    %v5364 = vsel %vm1187, %v5362, %v5363
    %v5365 = vrot.slane %v5305, 5
    %v5366 = vrot.slane %v5365, 4
    %v5367 = vrot.slane %v4936, 5
    %v5368 = vsel %vm1187, %v5366, %v5367
    %v5369 = vrot.slane %v5306, 5
    %v5370 = vrot.slane %v5369, 4
    %v5371 = vrot.slane %v4938, 5
    %v5372 = vsel %vm1187, %v5370, %v5371
    %v5373 = vrot.slane %v5307, 5
    %v5374 = vrot.slane %v5373, 4
    %v5375 = vrot.slane %v4940, 5
    %v5376 = vsel %vm1187, %v5374, %v5375
    %v5377 = vrot.slane %v5308, 5
    %v5378 = vrot.slane %v5377, 4
    %v5379 = vrot.slane %v4942, 5
    %v5380 = vsel %vm1187, %v5378, %v5379
    %v5381 = vrot.slane %v5309, 5
    %v5382 = vrot.slane %v5381, 4
    %v5383 = vrot.slane %v4944, 5
    %v5384 = vsel %vm1187, %v5382, %v5383
    %v5385 = vrot.slane %v5310, 5
    %v5386 = vrot.slane %v5385, 4
    %v5387 = vrot.slane %v4946, 5
    %v5388 = vsel %vm1187, %v5386, %v5387
    %v5389 = vrot.slane %v5311, 5
    %v5390 = vrot.slane %v5389, 4
    %v5391 = vrot.slane %v4948, 5
    %v5392 = vsel %vm1187, %v5390, %v5391
    %v5393 = vrot.slane %v5312, 5
    %v5394 = vrot.slane %v5393, 4
    %v5395 = vrot.slane %v4950, 5
    %v5396 = vsel %vm1187, %v5394, %v5395
    %v5397 = vrot.slane %v5313, 5
    %v5398 = vrot.slane %v5397, 4
    %v5399 = vrot.slane %v4952, 5
    %v5400 = vsel %vm1187, %v5398, %v5399
    %v5401 = vrot.slane %v5314, 5
    %v5402 = vrot.slane %v5401, 4
    %v5403 = vrot.slane %v4954, 5
    %v5404 = vsel %vm1187, %v5402, %v5403
    %v5405 = vrot.slane %v5315, 5
    %v5406 = vrot.slane %v5405, 4
    %v5407 = vrot.slane %v4956, 5
    %v5408 = vsel %vm1187, %v5406, %v5407
    %v5409 = vrot.slane %v5316, 5
    %v5410 = vrot.slane %v5409, 4
    %v5411 = vrot.slane %v4958, 5
    %v5412 = vsel %vm1187, %v5410, %v5411
    %s5413 = scalar_lea.vmem %s3, 32
    %v5414 = vld [vmem:[%s5413] sm:$0xf]
    %v5415 = vunpack.c.l.b16 %v5352
    %v5416 = vunpack.c.l.b16 %v5356
    %v5417 = vunpack.c.l.b16 %v5360
    %v5418 = vunpack.c.l.b16 %v5364
    %v5419 = vunpack.c.l.b16 %v5368
    %v5420 = vunpack.c.l.b16 %v5372
    %v5421 = vunpack.c.l.b16 %v5376
    %v5422 = vunpack.c.l.b16 %v5380
    %v5423 = vunpack.c.l.b16 %v5384
    %v5424 = vunpack.c.l.b16 %v5388
    %v5425 = vunpack.c.l.b16 %v5392
    %v5426 = vunpack.c.l.b16 %v5396
    %v5427 = vunpack.c.l.b16 %v5400
    %v5428 = vunpack.c.l.b16 %v5404
    %v5429 = vunpack.c.l.b16 %v5408
    %v5430 = vunpack.c.l.b16 %v5412
    %v5431 = vpack.c.b16 %v5416, %v5415
    %v5432 = vpack.c.b16 %v5418, %v5417
    %v5433 = vpack.c.b16 %v5420, %v5419
    %v5434 = vpack.c.b16 %v5422, %v5421
    %v5435 = vpack.c.b16 %v5424, %v5423
    %v5436 = vpack.c.b16 %v5426, %v5425
    %v5437 = vpack.c.b16 %v5428, %v5427
    %v5438 = vpack.c.b16 %v5430, %v5429
    %v5440 = vsel %vm943, %v5431, 0
    %v5443 = vsel %vm943, %v5432, 0
    %v5446 = vsel %vm943, %v5433, 0
    %v5449 = vsel %vm943, %v5434, 0
    %v5452 = vsel %vm943, %v5435, 0
    %v5455 = vsel %vm943, %v5436, 0
    %v5458 = vsel %vm943, %v5437, 0
    %v5461 = vsel %vm943, %v5438, 0
    %v5464 = vsel %vm968, %v5414, 0
    %5466 = vmatpush.bf16.msra.mxu0 0
    %5467 = vmatpush.bf16.msra.mxu0 0
    %5468 = vmatpush.bf16.msra.mxu0 0
    %5469 = vmatpush.bf16.msra.mxu0 0
    %5470 = vmatpush.bf16.msra.mxu0 0
    %5471 = vmatpush.bf16.msra.mxu0 0
    %5472 = vmatpush.bf16.msra.mxu0 0
    %5473 = vmatpush.bf16.msra.mxu0 %v5464
    %5474 = vmatmul.bf16.gmra.mxu0 %v5440
    %v5475 = vpop.f32.mrf.mxu0
    %v5476 = vadd.f32 0.0, %v5475
    %v5477 = vpop.f32.mrf.mxu0
    %v5478 = vadd.f32 0.0, %v5477
    %5479 = vmatmul.bf16.gmra.mxu0 %v5443
    %v5480 = vpop.f32.mrf.mxu0
    %v5481 = vadd.f32 0.0, %v5480
    %v5482 = vpop.f32.mrf.mxu0
    %v5483 = vadd.f32 0.0, %v5482
    %5484 = vmatmul.bf16.gmra.mxu0 %v5446
    %v5485 = vpop.f32.mrf.mxu0
    %v5486 = vadd.f32 0.0, %v5485
    %v5487 = vpop.f32.mrf.mxu0
    %v5488 = vadd.f32 0.0, %v5487
    %5489 = vmatmul.bf16.gmra.mxu0 %v5449
    %v5490 = vpop.f32.mrf.mxu0
    %v5491 = vadd.f32 0.0, %v5490
    %v5492 = vpop.f32.mrf.mxu0
    %v5493 = vadd.f32 0.0, %v5492
    %5494 = vmatmul.bf16.gmra.mxu0 %v5452
    %v5495 = vpop.f32.mrf.mxu0
    %v5496 = vadd.f32 0.0, %v5495
    %v5497 = vpop.f32.mrf.mxu0
    %v5498 = vadd.f32 0.0, %v5497
    %5499 = vmatmul.bf16.gmra.mxu0 %v5455
    %v5500 = vpop.f32.mrf.mxu0
    %v5501 = vadd.f32 0.0, %v5500
    %v5502 = vpop.f32.mrf.mxu0
    %v5503 = vadd.f32 0.0, %v5502
    %5504 = vmatmul.bf16.gmra.mxu0 %v5458
    %v5505 = vpop.f32.mrf.mxu0
    %v5506 = vadd.f32 0.0, %v5505
    %v5507 = vpop.f32.mrf.mxu0
    %v5508 = vadd.f32 0.0, %v5507
    %5509 = vmatmul.bf16.gmra.mxu0 %v5461
    %v5510 = vpop.f32.mrf.mxu0
    %v5511 = vadd.f32 0.0, %v5510
    %v5512 = vpop.f32.mrf.mxu0
    %v5513 = vadd.f32 0.0, %v5512
    %5514 = vdwg.mxu0
    %v5515 = vadd.f32 %v5285, %v5476
    %v5516 = vadd.f32 %v5286, %v5478
    %v5517 = vadd.f32 %v5287, %v5481
    %v5518 = vadd.f32 %v5288, %v5483
    %v5519 = vadd.f32 %v5289, %v5486
    %v5520 = vadd.f32 %v5290, %v5488
    %v5521 = vadd.f32 %v5291, %v5491
    %v5522 = vadd.f32 %v5292, %v5493
    %v5523 = vadd.f32 %v5293, %v5496
    %v5524 = vadd.f32 %v5294, %v5498
    %v5525 = vadd.f32 %v5295, %v5501
    %v5526 = vadd.f32 %v5296, %v5503
    %v5527 = vadd.f32 %v5297, %v5506
    %v5528 = vadd.f32 %v5298, %v5508
    %v5529 = vadd.f32 %v5299, %v5511
    %v5530 = vadd.f32 %v5300, %v5513
    %v5531 = vld [vmem:[%s4] sm:$0x1]
    %v5533 = vperm.slane %v5531, 0
    %v5535 = vadd.f32 %v5515, %v5533
    %v5536 = vadd.f32 %v5516, %v5533
    %v5537 = vadd.f32 %v5517, %v5533
    %v5538 = vadd.f32 %v5518, %v5533
    %v5539 = vadd.f32 %v5519, %v5533
    %v5540 = vadd.f32 %v5520, %v5533
    %v5541 = vadd.f32 %v5521, %v5533
    %v5542 = vadd.f32 %v5522, %v5533
    %v5543 = vadd.f32 %v5523, %v5533
    %v5544 = vadd.f32 %v5524, %v5533
    %v5545 = vadd.f32 %v5525, %v5533
    %v5546 = vadd.f32 %v5526, %v5533
    %v5547 = vadd.f32 %v5527, %v5533
    %v5548 = vadd.f32 %v5528, %v5533
    %v5549 = vadd.f32 %v5529, %v5533
    %v5550 = vadd.f32 %v5530, %v5533
    %v5551 = vmax.f32 %v5535, 0.0
    %v5552 = vmax.f32 %v5536, 0.0
    %v5553 = vmax.f32 %v5537, 0.0
    %v5554 = vmax.f32 %v5538, 0.0
    %v5555 = vmax.f32 %v5539, 0.0
    %v5556 = vmax.f32 %v5540, 0.0
    %v5557 = vmax.f32 %v5541, 0.0
    %v5558 = vmax.f32 %v5542, 0.0
    %v5559 = vmax.f32 %v5543, 0.0
    %v5560 = vmax.f32 %v5544, 0.0
    %v5561 = vmax.f32 %v5545, 0.0
    %v5562 = vmax.f32 %v5546, 0.0
    %v5563 = vmax.f32 %v5547, 0.0
    %v5564 = vmax.f32 %v5548, 0.0
    %v5565 = vmax.f32 %v5549, 0.0
    %v5566 = vmax.f32 %v5550, 0.0
    %v5567 = vpack.c.bf16 %v5551, %v5551
    %v5568 = vpack.c.bf16 %v5552, %v5552
    %v5569 = vpack.c.bf16 %v5553, %v5553
    %v5570 = vpack.c.bf16 %v5554, %v5554
    %v5571 = vpack.c.bf16 %v5555, %v5555
    %v5572 = vpack.c.bf16 %v5556, %v5556
    %v5573 = vpack.c.bf16 %v5557, %v5557
    %v5574 = vpack.c.bf16 %v5558, %v5558
    %v5575 = vpack.c.bf16 %v5559, %v5559
    %v5576 = vpack.c.bf16 %v5560, %v5560
    %v5577 = vpack.c.bf16 %v5561, %v5561
    %v5578 = vpack.c.bf16 %v5562, %v5562
    %v5579 = vpack.c.bf16 %v5563, %v5563
    %v5580 = vpack.c.bf16 %v5564, %v5564
    %v5581 = vpack.c.bf16 %v5565, %v5565
    %v5582 = vpack.c.bf16 %v5566, %v5566
    %5583 = vst.msk [vmem:[#allocation7] sm:$0xf] %vm246, %v5567
    %5584 = vst.msk [vmem:[#allocation7 + $0x4] sm:$0xf] %vm246, %v5568
    %5585 = vst.msk [vmem:[#allocation7 + $0x8] sm:$0xf] %vm246, %v5569
    %5586 = vst.msk [vmem:[#allocation7 + $0xc] sm:$0xf] %vm246, %v5570
    %5587 = vst.msk [vmem:[#allocation7 + $0x10] sm:$0xf] %vm246, %v5571
    %5588 = vst.msk [vmem:[#allocation7 + $0x14] sm:$0xf] %vm246, %v5572
    %5589 = vst.msk [vmem:[#allocation7 + $0x18] sm:$0xf] %vm246, %v5573
    %5590 = vst.msk [vmem:[#allocation7 + $0x1c] sm:$0xf] %vm246, %v5574
    %5591 = vst.msk [vmem:[#allocation7 + $0x20] sm:$0xf] %vm246, %v5575
    %5592 = vst.msk [vmem:[#allocation7 + $0x24] sm:$0xf] %vm246, %v5576
    %5593 = vst.msk [vmem:[#allocation7 + $0x28] sm:$0xf] %vm246, %v5577
    %5594 = vst.msk [vmem:[#allocation7 + $0x2c] sm:$0xf] %vm246, %v5578
    %5595 = vst.msk [vmem:[#allocation7 + $0x30] sm:$0xf] %vm246, %v5579
    %5596 = vst.msk [vmem:[#allocation7 + $0x34] sm:$0xf] %vm246, %v5580
    %5597 = vst.msk [vmem:[#allocation7 + $0x38] sm:$0xf] %vm246, %v5581
    %5598 = vst.msk [vmem:[#allocation7 + $0x3c] sm:$0xf] %vm246, %v5582
    // Predicated region
    $region26: #{tpu_custom_call.1} parent=1 // pred_check
      _
    $region27: #{tpu_custom_call.1} parent=1 // pred_check_branch
      %5600 = sbr.rel (0) target = $region29
    $region28: #{tpu_custom_call.1} parent=1 // pred_region
      %5602 = vsyncadd [#allocation6], 0
      %s5603 = sshll.u32 [#allocation7], 4
      %s5604 = int_to_ptr.vmem [resolvable:$true] %s5603
      %s5605 = sshll.u32 %s5, 4
      %s5606 = int_to_ptr.hbm [resolvable:$true] %s5605
      %5611 = dma.vmem_to_hbm [thread:$0]  %s5604, 1024, %s5606, [#allocation6], 64, 64, 4
    $region29: #{tpu_custom_call.1} parent=1 // pred_fallthru
      _
    // Predicated region
    $region30: #{tpu_custom_call.1} parent=1 // pred_check
      _
    $region31: #{tpu_custom_call.1} parent=1 // pred_check_branch
      %5613 = sbr.rel (0) target = $region33
    $region32: #{tpu_custom_call.1} parent=1 // pred_region
      %5615 = dma.done [#allocation6], 1024
    $region33: #{tpu_custom_call.1} parent=1 // pred_fallthru
      _
    %5616 = vsyncpa [#allocation5], 1
    %5617 = vsyncpa [#allocation6], 1

</llo_original>
